<compile_context>
chip_gen: v6e
topology: v6e:2x2x1
jax: 0.10.0
libtpu: 0.0.40
codegen_flags: <defaults>
</compile_context>

<pallas_src>
import functools

import jax
import jax.numpy as jnp
from jax.experimental import pallas as pl
from jax.experimental.pallas import tpu as pltpu

# ----------------------------- synthetic config -----------------------------
VOCAB_SIZE = 128
HIDDEN = 128
NUM_LAYERS = 2
NUM_HEADS = 4
HEAD_DIM = HIDDEN // NUM_HEADS
INTERMEDIATE = 512
MAX_POS = 64
TYPE_VOCAB = 2
NUM_LABELS = 2
CLS_PAD = 128            # lane-dense padded classifier output width
LN_EPS = 1e-12

BATCH = 2
SEQ = 8


# ------------------------------ in-kernel helpers ----------------------------
def _layernorm_f32(x, g, b, eps):
    mean = jnp.mean(x, axis=-1, keepdims=True)
    c = x - mean
    var = jnp.mean(c * c, axis=-1, keepdims=True)
    return c * jax.lax.rsqrt(var + eps) * g + b


def _gelu_f32(x):
    # TODO(synk): HF BERT uses erf-based GELU; tanh approximation used here
    # (~1e-3 deviation) to guarantee clean Mosaic lowering.
    return 0.5 * x * (1.0 + jnp.tanh(0.7978845608028654 * (x + 0.044715 * x * x * x)))


# -------------------- fused encoder kernel (one pallas_call) ------------------
def _bert_encoder_kernel(emb_ref, mask_ref, emb_g_ref, emb_b_ref,
                         qkv_w_ref, qkv_b_ref, o_w_ref, o_b_ref,
                         ln1_g_ref, ln1_b_ref, i_w_ref, i_b_ref,
                         d_w_ref, d_b_ref, ln2_g_ref, ln2_b_ref,
                         cls_w_ref, cls_b_ref,
                         logits_ref, h_scratch, ctx_scratch,
                         *, num_heads, head_dim, eps):
    l = pl.program_id(0)

    # ---- prologue: embedding LayerNorm, only on the first layer step --------
    @pl.when(l == 0)
    def _():
        h_scratch[...] = _layernorm_f32(
            emb_ref[...].astype(jnp.float32),
            emb_g_ref[...].astype(jnp.float32),
            emb_b_ref[...].astype(jnp.float32), eps)

    h = h_scratch[...]                                   # (B*S, H) f32, VMEM-resident
    mask = mask_ref[...]                                 # (B*S, B*S) additive f32

    # ---- fused QKV projection: one MXU pass, bf16 operands, f32 accumulate --
    qkv = jnp.dot(h.astype(jnp.bfloat16), qkv_w_ref[0],
                  preferred_element_type=jnp.float32)
    qkv = qkv + qkv_b_ref[0].astype(jnp.float32)         # (B*S, 3H)

    hidden = num_heads * head_dim
    scale = 1.0 / (head_dim ** 0.5)

    # ---- attention: heads packed on the lane axis; static head loop ---------
    # per-head context written straight into a VMEM scratch via lane slices
    for hh in range(num_heads):
        lo = hh * head_dim
        qh = qkv[:, lo:lo + head_dim]
        kh = qkv[:, hidden + lo:hidden + lo + head_dim]
        vh = qkv[:, 2 * hidden + lo:2 * hidden + lo + head_dim]
        # q @ k^T via dot_general contracting last dims (no explicit transpose)
        s = jax.lax.dot_general(
            qh.astype(jnp.bfloat16), kh.astype(jnp.bfloat16),
            (((1,), (1,)), ((), ())),
            preferred_element_type=jnp.float32) * scale + mask
        s = s - jnp.max(s, axis=-1, keepdims=True)        # f32 softmax
        p = jnp.exp(s)
        p = p * pl.reciprocal(jnp.sum(p, axis=-1, keepdims=True), approx=True)
        ctx_scratch[:, lo:lo + head_dim] = jnp.dot(
            p.astype(jnp.bfloat16), vh.astype(jnp.bfloat16),
            preferred_element_type=jnp.float32)

    ctx = ctx_scratch[...]                               # (B*S, H) f32

    # ---- output projection + residual + LayerNorm ---------------------------
    attn_out = jnp.dot(ctx.astype(jnp.bfloat16), o_w_ref[0],
                       preferred_element_type=jnp.float32)
    attn_out = attn_out + o_b_ref[0].astype(jnp.float32)
    h1 = _layernorm_f32(attn_out + h,
                        ln1_g_ref[0].astype(jnp.float32),
                        ln1_b_ref[0].astype(jnp.float32), eps)

    # ---- FFN up + GELU -------------------------------------------------------
    ffn = jnp.dot(h1.astype(jnp.bfloat16), i_w_ref[0],
                  preferred_element_type=jnp.float32)
    ffn = _gelu_f32(ffn + i_b_ref[0].astype(jnp.float32))

    # ---- FFN down + residual + LayerNorm -------------------------------------
    ffn_out = jnp.dot(ffn.astype(jnp.bfloat16), d_w_ref[0],
                      preferred_element_type=jnp.float32)
    ffn_out = ffn_out + d_b_ref[0].astype(jnp.float32)
    h2 = _layernorm_f32(ffn_out + h1,
                        ln2_g_ref[0].astype(jnp.float32),
                        ln2_b_ref[0].astype(jnp.float32), eps)
    h_scratch[...] = h2                                  # carry to next layer step

    # ---- epilogue: classifier on the last layer step -------------------------
    @pl.when(l == pl.num_programs(0) - 1)
    def _():
        logits = jnp.dot(h2.astype(jnp.bfloat16), cls_w_ref[...],
                         preferred_element_type=jnp.float32)
        logits_ref[...] = (logits + cls_b_ref[...].astype(jnp.float32)
                           ).astype(logits_ref.dtype)


def bert_encoder_logits(emb_flat, mask_add, p):
    """emb_flat: [B*S, H] f32; mask_add: [B*S, B*S] additive -> [B*S, CLS_PAD] f32."""
    BS = emb_flat.shape[0]
    kernel = functools.partial(_bert_encoder_kernel, num_heads=NUM_HEADS,
                               head_dim=HEAD_DIM, eps=LN_EPS)

    def const2(shape):                       # broadcast across all layer steps
        return pl.BlockSpec(shape, lambda l: (0, 0))

    def per_layer(shape):                    # layer-stacked weight, leading L axis
        return pl.BlockSpec((1,) + shape, lambda l: (l, 0, 0))

    return pl.pallas_call(
        kernel,
        out_shape=jax.ShapeDtypeStruct((BS, CLS_PAD), jnp.float32),
        grid=(NUM_LAYERS,),
        in_specs=[
            const2((BS, HIDDEN)),                               # emb (pre-LN)
            const2((BS, BS)),                                   # additive mask
            const2((1, HIDDEN)), const2((1, HIDDEN)),           # emb LN g, b
            per_layer((HIDDEN, 3 * HIDDEN)),                    # qkv_w (bf16)
            per_layer((1, 3 * HIDDEN)),                         # qkv_b
            per_layer((HIDDEN, HIDDEN)),                        # o_w (bf16)
            per_layer((1, HIDDEN)),                             # o_b
            per_layer((1, HIDDEN)), per_layer((1, HIDDEN)),     # ln1 g, b
            per_layer((HIDDEN, INTERMEDIATE)),                  # i_w (bf16)
            per_layer((1, INTERMEDIATE)),                       # i_b
            per_layer((INTERMEDIATE, HIDDEN)),                  # d_w (bf16)
            per_layer((1, HIDDEN)),                             # d_b
            per_layer((1, HIDDEN)), per_layer((1, HIDDEN)),     # ln2 g, b
            const2((HIDDEN, CLS_PAD)),                          # cls_w (bf16, padded)
            const2((1, CLS_PAD)),                               # cls_b (padded)
        ],
        out_specs=pl.BlockSpec((BS, CLS_PAD), lambda l: (0, 0)),
        scratch_shapes=[pltpu.VMEM((BS, HIDDEN), jnp.float32),  # resident hidden state
                        pltpu.VMEM((BS, HIDDEN), jnp.float32)], # per-head ctx scratch
        compiler_params=pltpu.CompilerParams(
            dimension_semantics=("arbitrary",),     # sequential: state carried across layers
            vmem_limit_bytes=32 * 1024 * 1024),
    )(emb_flat, mask_add, p["emb_ln_g"], p["emb_ln_b"],
      p["qkv_w"], p["qkv_b"], p["o_w"], p["o_b"],
      p["ln1_g"], p["ln1_b"], p["i_w"], p["i_b"],
      p["d_w"], p["d_b"], p["ln2_g"], p["ln2_b"],
      p["cls_w"], p["cls_b"])


# ------------------------------ parameter setup -------------------------------
def init_params(key):
    keys = iter(jax.random.split(key, 64))
    std = 0.02

    def w(shape):
        return jax.random.normal(next(keys), shape, jnp.float32) * std

    cls_w = w((HIDDEN, NUM_LABELS))
    cls_w_pad = jnp.zeros((HIDDEN, CLS_PAD), jnp.float32).at[:, :NUM_LABELS].set(cls_w)

    # layer-stacked weights (leading L axis) so the fused kernel can index by layer
    qkv_w, o_w, i_w, d_w = [], [], [], []
    for _ in range(NUM_LAYERS):
        q, k_, v = w((HIDDEN, HIDDEN)), w((HIDDEN, HIDDEN)), w((HIDDEN, HIDDEN))
        qkv_w.append(jnp.concatenate([q, k_, v], axis=1))
        o_w.append(w((HIDDEN, HIDDEN)))
        i_w.append(w((HIDDEN, INTERMEDIATE)))
        d_w.append(w((INTERMEDIATE, HIDDEN)))

    L = NUM_LAYERS
    params = {
        "word_emb": w((VOCAB_SIZE, HIDDEN)),
        "pos_emb": w((MAX_POS, HIDDEN)),
        "type_emb": w((TYPE_VOCAB, HIDDEN)),
        "emb_ln_g": jnp.ones((1, HIDDEN), jnp.float32),
        "emb_ln_b": jnp.zeros((1, HIDDEN), jnp.float32),
        "qkv_w": jnp.stack(qkv_w).astype(jnp.bfloat16),          # [L, H, 3H]
        "qkv_b": jnp.zeros((L, 1, 3 * HIDDEN), jnp.float32),
        "o_w": jnp.stack(o_w).astype(jnp.bfloat16),              # [L, H, H]
        "o_b": jnp.zeros((L, 1, HIDDEN), jnp.float32),
        "ln1_g": jnp.ones((L, 1, HIDDEN), jnp.float32),
        "ln1_b": jnp.zeros((L, 1, HIDDEN), jnp.float32),
        "i_w": jnp.stack(i_w).astype(jnp.bfloat16),              # [L, H, I]
        "i_b": jnp.zeros((L, 1, INTERMEDIATE), jnp.float32),
        "d_w": jnp.stack(d_w).astype(jnp.bfloat16),              # [L, I, H]
        "d_b": jnp.zeros((L, 1, HIDDEN), jnp.float32),
        "ln2_g": jnp.ones((L, 1, HIDDEN), jnp.float32),
        "ln2_b": jnp.zeros((L, 1, HIDDEN), jnp.float32),
        "cls_w": cls_w_pad.astype(jnp.bfloat16),                 # padded, bf16 MXU operand
        "cls_b": jnp.zeros((1, CLS_PAD), jnp.float32),
    }
    return params


# ------------------------------- forward pass ---------------------------------
def bert_for_token_classification(params, input_ids, attention_mask=None,
                                  token_type_ids=None, labels=None):
    B, S = input_ids.shape
    if attention_mask is None:
        attention_mask = jnp.ones((B, S), jnp.float32)
    if token_type_ids is None:
        token_type_ids = jnp.zeros((B, S), jnp.int32)

    # Embedding gather (plain-JAX glue); LN happens inside the fused kernel.
    positions = jnp.arange(S, dtype=jnp.int32)
    emb = (jnp.take(params["word_emb"], input_ids, axis=0)
           + jnp.take(params["pos_emb"], positions, axis=0)[None, :, :]
           + jnp.take(params["type_emb"], token_type_ids, axis=0))
    emb_flat = emb.reshape(B * S, HIDDEN).astype(jnp.float32)

    # Additive [B*S, B*S] mask: padding mask + block-diagonal batch mask so the
    # batch-folded attention cannot attend across examples.
    att = attention_mask.astype(jnp.float32).reshape(B * S)
    batch_ids = jnp.repeat(jnp.arange(B, dtype=jnp.int32), S)
    same_batch = (batch_ids[:, None] == batch_ids[None, :]).astype(jnp.float32)
    valid = same_batch * att[None, :]
    mask_add = (1.0 - valid) * -1e9

    # one fused Pallas kernel: embedding LN -> L layers -> classifier
    logits_pad = bert_encoder_logits(emb_flat, mask_add, params)
    logits_flat = logits_pad[:, :NUM_LABELS]
    logits = logits_flat.reshape(B, S, NUM_LABELS)

    output = {"logits": logits}
    if labels is not None:
        # Cross-entropy matching nn.CrossEntropyLoss (ignore_index=-100, mean).
        lbl = labels.reshape(-1)
        valid_lbl = (lbl != -100)
        safe = jnp.where(valid_lbl, lbl, 0)
        logp = jax.nn.log_softmax(logits_flat, axis=-1)
        nll = -jnp.take_along_axis(logp, safe[:, None], axis=-1)[:, 0]
        denom = jnp.maximum(jnp.sum(valid_lbl.astype(jnp.float32)), 1.0)
        output["loss"] = jnp.sum(jnp.where(valid_lbl, nll, 0.0)) / denom
    return output
    # TODO(synk): dropout omitted (inference/eval semantics only).


# ----------------------------------- main -------------------------------------
if __name__ == "__main__":
    key = jax.random.PRNGKey(0)
    k_param, k_ids, k_lbl = jax.random.split(key, 3)

    params = init_params(k_param)
    input_ids = jax.random.randint(k_ids, (BATCH, SEQ), 0, VOCAB_SIZE, dtype=jnp.int32)
    attention_mask = jnp.ones((BATCH, SEQ), jnp.float32).at[1, SEQ - 2:].set(0.0)
    token_type_ids = jnp.zeros((BATCH, SEQ), jnp.int32)
    labels = jax.random.randint(k_lbl, (BATCH, SEQ), 0, NUM_LABELS, dtype=jnp.int32)

    fwd = jax.jit(bert_for_token_classification)
    out = fwd(params, input_ids, attention_mask, token_type_ids, labels)
    jax.block_until_ready(out["logits"])
    jax.block_until_ready(out["loss"])
    assert out["logits"].shape == (BATCH, SEQ, NUM_LABELS)
    print("KERNEL_OK")
</pallas_src>

<mosaic_0001>
module attributes {stable_mosaic.version = 11 : i64} {
  func.func @_bert_encoder_kernel(%arg0: i32, %arg1: memref<16x128xf32, #tpu.memory_space<vmem>>, %arg2: memref<16x16xf32, #tpu.memory_space<vmem>>, %arg3: memref<1x128xf32, #tpu.memory_space<vmem>>, %arg4: memref<1x128xf32, #tpu.memory_space<vmem>>, %arg5: memref<1x128x384xbf16, #tpu.memory_space<vmem>>, %arg6: memref<1x1x384xf32, #tpu.memory_space<vmem>>, %arg7: memref<1x128x128xbf16, #tpu.memory_space<vmem>>, %arg8: memref<1x1x128xf32, #tpu.memory_space<vmem>>, %arg9: memref<1x1x128xf32, #tpu.memory_space<vmem>>, %arg10: memref<1x1x128xf32, #tpu.memory_space<vmem>>, %arg11: memref<1x128x512xbf16, #tpu.memory_space<vmem>>, %arg12: memref<1x1x512xf32, #tpu.memory_space<vmem>>, %arg13: memref<1x512x128xbf16, #tpu.memory_space<vmem>>, %arg14: memref<1x1x128xf32, #tpu.memory_space<vmem>>, %arg15: memref<1x1x128xf32, #tpu.memory_space<vmem>>, %arg16: memref<1x1x128xf32, #tpu.memory_space<vmem>>, %arg17: memref<128x128xbf16, #tpu.memory_space<vmem>>, %arg18: memref<1x128xf32, #tpu.memory_space<vmem>>, %arg19: memref<16x128xf32, #tpu.memory_space<vmem>>, %arg20: memref<16x128xf32, #tpu.memory_space<vmem>>, %arg21: memref<16x128xf32, #tpu.memory_space<vmem>>) attributes {dimension_semantics = [#tpu.dimension_semantics<arbitrary>], iteration_bounds = array<i64: 2>, scalar_prefetch = 0 : i64, scratch_operands = 2 : i64, tpu.core_type = #tpu.core_type<tc>, window_params = [{pipeline_mode = #tpu.pipeline_mode<synchronous>, transform_indices = @transform_0, window_bounds = array<i64: 16, 128>}, {pipeline_mode = #tpu.pipeline_mode<synchronous>, transform_indices = @transform_1, window_bounds = array<i64: 16, 16>}, {pipeline_mode = #tpu.pipeline_mode<synchronous>, transform_indices = @transform_2, window_bounds = array<i64: 1, 128>}, {pipeline_mode = #tpu.pipeline_mode<synchronous>, transform_indices = @transform_3, window_bounds = array<i64: 1, 128>}, {transform_indices = @transform_4, window_bounds = array<i64: 1, 128, 384>}, {transform_indices = @transform_5, window_bounds = array<i64: 1, 1, 384>}, {transform_indices = @transform_6, window_bounds = array<i64: 1, 128, 128>}, {transform_indices = @transform_7, window_bounds = array<i64: 1, 1, 128>}, {transform_indices = @transform_8, window_bounds = array<i64: 1, 1, 128>}, {transform_indices = @transform_9, window_bounds = array<i64: 1, 1, 128>}, {transform_indices = @transform_10, window_bounds = array<i64: 1, 128, 512>}, {transform_indices = @transform_11, window_bounds = array<i64: 1, 1, 512>}, {transform_indices = @transform_12, window_bounds = array<i64: 1, 512, 128>}, {transform_indices = @transform_13, window_bounds = array<i64: 1, 1, 128>}, {transform_indices = @transform_14, window_bounds = array<i64: 1, 1, 128>}, {transform_indices = @transform_15, window_bounds = array<i64: 1, 1, 128>}, {pipeline_mode = #tpu.pipeline_mode<synchronous>, transform_indices = @transform_16, window_bounds = array<i64: 128, 128>}, {pipeline_mode = #tpu.pipeline_mode<synchronous>, transform_indices = @transform_17, window_bounds = array<i64: 1, 128>}, {pipeline_mode = #tpu.pipeline_mode<synchronous>, transform_indices = @transform_18, window_bounds = array<i64: 16, 128>}]} {
    %c0_i32 = arith.constant 0 : i32
    %0 = arith.cmpi eq, %arg0, %c0_i32 : i32
    %1 = arith.extui %0 : i1 to i32
    %c0_i32_0 = arith.constant 0 : i32
    %2 = arith.cmpi ne, %1, %c0_i32_0 : i32
    scf.if %2 {
      %c0_87 = arith.constant 0 : index
      %c0_88 = arith.constant 0 : index
      %197 = vector.load %arg1[%c0_87, %c0_88] : memref<16x128xf32, #tpu.memory_space<vmem>>, vector<16x128xf32>
      %c0_89 = arith.constant 0 : index
      %c0_90 = arith.constant 0 : index
      %198 = vector.load %arg3[%c0_89, %c0_90] : memref<1x128xf32, #tpu.memory_space<vmem>>, vector<1x128xf32>
      %c0_91 = arith.constant 0 : index
      %c0_92 = arith.constant 0 : index
      %199 = vector.load %arg4[%c0_91, %c0_92] : memref<1x128xf32, #tpu.memory_space<vmem>>, vector<1x128xf32>
      %cst_93 = arith.constant dense<0.000000e+00> : vector<16xf32>
      %200 = vector.multi_reduction <add>, %197, %cst_93 [1] : vector<16x128xf32> to vector<16xf32>
      %201 = vector.shape_cast %200 : vector<16xf32> to vector<16x1xf32>
      %cst_94 = arith.constant 1.280000e+02 : f32
      %202 = vector.broadcast %cst_94 : f32 to vector<16x1xf32>
      %203 = arith.divf %201, %202 : vector<16x1xf32>
      %204 = vector.broadcast %203 : vector<16x1xf32> to vector<16x128xf32>
      %205 = arith.subf %197, %204 : vector<16x128xf32>
      %206 = arith.mulf %205, %205 : vector<16x128xf32>
      %cst_95 = arith.constant dense<0.000000e+00> : vector<16xf32>
      %207 = vector.multi_reduction <add>, %206, %cst_95 [1] : vector<16x128xf32> to vector<16xf32>
      %208 = vector.shape_cast %207 : vector<16xf32> to vector<16x1xf32>
      %cst_96 = arith.constant 1.280000e+02 : f32
      %209 = vector.broadcast %cst_96 : f32 to vector<16x1xf32>
      %210 = arith.divf %208, %209 : vector<16x1xf32>
      %cst_97 = arith.constant 9.99999996E-13 : f32
      %211 = vector.broadcast %cst_97 : f32 to vector<16x1xf32>
      %212 = arith.addf %210, %211 : vector<16x1xf32>
      %213 = math.rsqrt %212 : vector<16x1xf32>
      %214 = vector.broadcast %213 : vector<16x1xf32> to vector<16x128xf32>
      %215 = arith.mulf %205, %214 : vector<16x128xf32>
      %216 = vector.broadcast %198 : vector<1x128xf32> to vector<16x128xf32>
      %217 = arith.mulf %215, %216 : vector<16x128xf32>
      %218 = vector.broadcast %199 : vector<1x128xf32> to vector<16x128xf32>
      %219 = arith.addf %217, %218 : vector<16x128xf32>
      %c0_98 = arith.constant 0 : index
      %c0_99 = arith.constant 0 : index
      %220 = vector.load %arg20[%c0_98, %c0_99] : memref<16x128xf32, #tpu.memory_space<vmem>>, vector<16x128xf32>
      tpu.vector_store %arg20[%c0_98, %c0_99], %219 {strides = array<i32>} : memref<16x128xf32, #tpu.memory_space<vmem>>, vector<16x128xf32>,
    } else {
    }
    %c0 = arith.constant 0 : index
    %c0_1 = arith.constant 0 : index
    %3 = vector.load %arg20[%c0, %c0_1] : memref<16x128xf32, #tpu.memory_space<vmem>>, vector<16x128xf32>
    %c0_2 = arith.constant 0 : index
    %c0_3 = arith.constant 0 : index
    %4 = vector.load %arg2[%c0_2, %c0_3] : memref<16x16xf32, #tpu.memory_space<vmem>>, vector<16x16xf32>
    %5 = arith.truncf %3 : vector<16x128xf32> to vector<16x128xbf16>
    %c0_4 = arith.constant 0 : index
    %c0_5 = arith.constant 0 : index
    %c0_6 = arith.constant 0 : index
    %6 = vector.load %arg5[%c0_4, %c0_5, %c0_6] : memref<1x128x384xbf16, #tpu.memory_space<vmem>>, vector<1x128x384xbf16>
    %7 = vector.shape_cast %6 : vector<1x128x384xbf16> to vector<128x384xbf16>
    %cst = arith.constant dense<0.000000e+00> : vector<16x384xf32>
    %8 = tpu.matmul %5, %7, %cst {dimension_numbers = #tpu.dot_dimension_numbers<[1], [0], [0], [1], [0, 0, 1, 1], [], []>} : vector<16x128xbf16>, vector<128x384xbf16>, vector<16x384xf32> -> vector<16x384xf32>
    %c0_7 = arith.constant 0 : index
    %c0_8 = arith.constant 0 : index
    %c0_9 = arith.constant 0 : index
    %9 = vector.load %arg6[%c0_7, %c0_8, %c0_9] : memref<1x1x384xf32, #tpu.memory_space<vmem>>, vector<1x1x384xf32>
    %10 = vector.shape_cast %9 : vector<1x1x384xf32> to vector<1x384xf32>
    %11 = vector.broadcast %10 : vector<1x384xf32> to vector<16x384xf32>
    %12 = arith.addf %8, %11 : vector<16x384xf32>
    %13 = vector.extract_strided_slice %12 {offsets = [0, 0], sizes = [16, 32], strides = [1, 1]} : vector<16x384xf32> to vector<16x32xf32>
    %14 = vector.extract_strided_slice %12 {offsets = [0, 128], sizes = [16, 32], strides = [1, 1]} : vector<16x384xf32> to vector<16x32xf32>
    %15 = vector.extract_strided_slice %12 {offsets = [0, 256], sizes = [16, 32], strides = [1, 1]} : vector<16x384xf32> to vector<16x32xf32>
    %16 = arith.truncf %13 : vector<16x32xf32> to vector<16x32xbf16>
    %17 = arith.truncf %14 : vector<16x32xf32> to vector<16x32xbf16>
    %cst_10 = arith.constant dense<0.000000e+00> : vector<16x16xf32>
    %18 = tpu.matmul %16, %17, %cst_10 {dimension_numbers = #tpu.dot_dimension_numbers<[1], [1], [0], [0], [0, 0, 1, 0], [], []>} : vector<16x32xbf16>, vector<16x32xbf16>, vector<16x16xf32> -> vector<16x16xf32>
    %cst_11 = arith.constant 0.176776692 : f32
    %19 = vector.broadcast %cst_11 : f32 to vector<16x16xf32>
    %20 = arith.mulf %18, %19 : vector<16x16xf32>
    %21 = arith.addf %20, %4 : vector<16x16xf32>
    %cst_12 = arith.constant dense<0xFF800000> : vector<16xf32>
    %22 = vector.multi_reduction <maximumf>, %21, %cst_12 [1] : vector<16x16xf32> to vector<16xf32>
    %23 = vector.shape_cast %22 : vector<16xf32> to vector<16x1xf32>
    %24 = vector.broadcast %23 : vector<16x1xf32> to vector<16x16xf32>
    %25 = arith.subf %21, %24 : vector<16x16xf32>
    %26 = math.exp %25 : vector<16x16xf32>
    %cst_13 = arith.constant dense<0.000000e+00> : vector<16xf32>
    %27 = vector.multi_reduction <add>, %26, %cst_13 [1] : vector<16x16xf32> to vector<16xf32>
    %28 = vector.shape_cast %27 : vector<16xf32> to vector<16x1xf32>
    %29 = tpu.reciprocal %28 {approx = true} : vector<16x1xf32> -> vector<16x1xf32>
    %30 = vector.broadcast %29 : vector<16x1xf32> to vector<16x16xf32>
    %31 = arith.mulf %26, %30 : vector<16x16xf32>
    %32 = arith.truncf %31 : vector<16x16xf32> to vector<16x16xbf16>
    %33 = arith.truncf %15 : vector<16x32xf32> to vector<16x32xbf16>
    %cst_14 = arith.constant dense<0.000000e+00> : vector<16x32xf32>
    %34 = tpu.matmul %32, %33, %cst_14 {dimension_numbers = #tpu.dot_dimension_numbers<[1], [0], [0], [1], [0, 0, 1, 1], [], []>} : vector<16x16xbf16>, vector<16x32xbf16>, vector<16x32xf32> -> vector<16x32xf32>
    %c0_15 = arith.constant 0 : index
    %c0_16 = arith.constant 0 : index
    %35 = vector.load %arg21[%c0_15, %c0_16] : memref<16x128xf32, #tpu.memory_space<vmem>>, vector<16x32xf32>
    tpu.vector_store %arg21[%c0_15, %c0_16], %34 {strides = array<i32>} : memref<16x128xf32, #tpu.memory_space<vmem>>, vector<16x32xf32>,
    %36 = vector.extract_strided_slice %12 {offsets = [0, 32], sizes = [16, 32], strides = [1, 1]} : vector<16x384xf32> to vector<16x32xf32>
    %37 = vector.extract_strided_slice %12 {offsets = [0, 160], sizes = [16, 32], strides = [1, 1]} : vector<16x384xf32> to vector<16x32xf32>
    %38 = vector.extract_strided_slice %12 {offsets = [0, 288], sizes = [16, 32], strides = [1, 1]} : vector<16x384xf32> to vector<16x32xf32>
    %39 = arith.truncf %36 : vector<16x32xf32> to vector<16x32xbf16>
    %40 = arith.truncf %37 : vector<16x32xf32> to vector<16x32xbf16>
    %cst_17 = arith.constant dense<0.000000e+00> : vector<16x16xf32>
    %41 = tpu.matmul %39, %40, %cst_17 {dimension_numbers = #tpu.dot_dimension_numbers<[1], [1], [0], [0], [0, 0, 1, 0], [], []>} : vector<16x32xbf16>, vector<16x32xbf16>, vector<16x16xf32> -> vector<16x16xf32>
    %cst_18 = arith.constant 0.176776692 : f32
    %42 = vector.broadcast %cst_18 : f32 to vector<16x16xf32>
    %43 = arith.mulf %41, %42 : vector<16x16xf32>
    %44 = arith.addf %43, %4 : vector<16x16xf32>
    %cst_19 = arith.constant dense<0xFF800000> : vector<16xf32>
    %45 = vector.multi_reduction <maximumf>, %44, %cst_19 [1] : vector<16x16xf32> to vector<16xf32>
    %46 = vector.shape_cast %45 : vector<16xf32> to vector<16x1xf32>
    %47 = vector.broadcast %46 : vector<16x1xf32> to vector<16x16xf32>
    %48 = arith.subf %44, %47 : vector<16x16xf32>
    %49 = math.exp %48 : vector<16x16xf32>
    %cst_20 = arith.constant dense<0.000000e+00> : vector<16xf32>
    %50 = vector.multi_reduction <add>, %49, %cst_20 [1] : vector<16x16xf32> to vector<16xf32>
    %51 = vector.shape_cast %50 : vector<16xf32> to vector<16x1xf32>
    %52 = tpu.reciprocal %51 {approx = true} : vector<16x1xf32> -> vector<16x1xf32>
    %53 = vector.broadcast %52 : vector<16x1xf32> to vector<16x16xf32>
    %54 = arith.mulf %49, %53 : vector<16x16xf32>
    %55 = arith.truncf %54 : vector<16x16xf32> to vector<16x16xbf16>
    %56 = arith.truncf %38 : vector<16x32xf32> to vector<16x32xbf16>
    %cst_21 = arith.constant dense<0.000000e+00> : vector<16x32xf32>
    %57 = tpu.matmul %55, %56, %cst_21 {dimension_numbers = #tpu.dot_dimension_numbers<[1], [0], [0], [1], [0, 0, 1, 1], [], []>} : vector<16x16xbf16>, vector<16x32xbf16>, vector<16x32xf32> -> vector<16x32xf32>
    %c0_22 = arith.constant 0 : index
    %c32 = arith.constant 32 : index
    %58 = vector.load %arg21[%c0_22, %c32] : memref<16x128xf32, #tpu.memory_space<vmem>>, vector<16x32xf32>
    tpu.vector_store %arg21[%c0_22, %c32], %57 {strides = array<i32>} : memref<16x128xf32, #tpu.memory_space<vmem>>, vector<16x32xf32>,
    %59 = vector.extract_strided_slice %12 {offsets = [0, 64], sizes = [16, 32], strides = [1, 1]} : vector<16x384xf32> to vector<16x32xf32>
    %60 = vector.extract_strided_slice %12 {offsets = [0, 192], sizes = [16, 32], strides = [1, 1]} : vector<16x384xf32> to vector<16x32xf32>
    %61 = vector.extract_strided_slice %12 {offsets = [0, 320], sizes = [16, 32], strides = [1, 1]} : vector<16x384xf32> to vector<16x32xf32>
    %62 = arith.truncf %59 : vector<16x32xf32> to vector<16x32xbf16>
    %63 = arith.truncf %60 : vector<16x32xf32> to vector<16x32xbf16>
    %cst_23 = arith.constant dense<0.000000e+00> : vector<16x16xf32>
    %64 = tpu.matmul %62, %63, %cst_23 {dimension_numbers = #tpu.dot_dimension_numbers<[1], [1], [0], [0], [0, 0, 1, 0], [], []>} : vector<16x32xbf16>, vector<16x32xbf16>, vector<16x16xf32> -> vector<16x16xf32>
    %cst_24 = arith.constant 0.176776692 : f32
    %65 = vector.broadcast %cst_24 : f32 to vector<16x16xf32>
    %66 = arith.mulf %64, %65 : vector<16x16xf32>
    %67 = arith.addf %66, %4 : vector<16x16xf32>
    %cst_25 = arith.constant dense<0xFF800000> : vector<16xf32>
    %68 = vector.multi_reduction <maximumf>, %67, %cst_25 [1] : vector<16x16xf32> to vector<16xf32>
    %69 = vector.shape_cast %68 : vector<16xf32> to vector<16x1xf32>
    %70 = vector.broadcast %69 : vector<16x1xf32> to vector<16x16xf32>
    %71 = arith.subf %67, %70 : vector<16x16xf32>
    %72 = math.exp %71 : vector<16x16xf32>
    %cst_26 = arith.constant dense<0.000000e+00> : vector<16xf32>
    %73 = vector.multi_reduction <add>, %72, %cst_26 [1] : vector<16x16xf32> to vector<16xf32>
    %74 = vector.shape_cast %73 : vector<16xf32> to vector<16x1xf32>
    %75 = tpu.reciprocal %74 {approx = true} : vector<16x1xf32> -> vector<16x1xf32>
    %76 = vector.broadcast %75 : vector<16x1xf32> to vector<16x16xf32>
    %77 = arith.mulf %72, %76 : vector<16x16xf32>
    %78 = arith.truncf %77 : vector<16x16xf32> to vector<16x16xbf16>
    %79 = arith.truncf %61 : vector<16x32xf32> to vector<16x32xbf16>
    %cst_27 = arith.constant dense<0.000000e+00> : vector<16x32xf32>
    %80 = tpu.matmul %78, %79, %cst_27 {dimension_numbers = #tpu.dot_dimension_numbers<[1], [0], [0], [1], [0, 0, 1, 1], [], []>} : vector<16x16xbf16>, vector<16x32xbf16>, vector<16x32xf32> -> vector<16x32xf32>
    %c0_28 = arith.constant 0 : index
    %c64 = arith.constant 64 : index
    %81 = vector.load %arg21[%c0_28, %c64] : memref<16x128xf32, #tpu.memory_space<vmem>>, vector<16x32xf32>
    tpu.vector_store %arg21[%c0_28, %c64], %80 {strides = array<i32>} : memref<16x128xf32, #tpu.memory_space<vmem>>, vector<16x32xf32>,
    %82 = vector.extract_strided_slice %12 {offsets = [0, 96], sizes = [16, 32], strides = [1, 1]} : vector<16x384xf32> to vector<16x32xf32>
    %83 = vector.extract_strided_slice %12 {offsets = [0, 224], sizes = [16, 32], strides = [1, 1]} : vector<16x384xf32> to vector<16x32xf32>
    %84 = vector.extract_strided_slice %12 {offsets = [0, 352], sizes = [16, 32], strides = [1, 1]} : vector<16x384xf32> to vector<16x32xf32>
    %85 = arith.truncf %82 : vector<16x32xf32> to vector<16x32xbf16>
    %86 = arith.truncf %83 : vector<16x32xf32> to vector<16x32xbf16>
    %cst_29 = arith.constant dense<0.000000e+00> : vector<16x16xf32>
    %87 = tpu.matmul %85, %86, %cst_29 {dimension_numbers = #tpu.dot_dimension_numbers<[1], [1], [0], [0], [0, 0, 1, 0], [], []>} : vector<16x32xbf16>, vector<16x32xbf16>, vector<16x16xf32> -> vector<16x16xf32>
    %cst_30 = arith.constant 0.176776692 : f32
    %88 = vector.broadcast %cst_30 : f32 to vector<16x16xf32>
    %89 = arith.mulf %87, %88 : vector<16x16xf32>
    %90 = arith.addf %89, %4 : vector<16x16xf32>
    %cst_31 = arith.constant dense<0xFF800000> : vector<16xf32>
    %91 = vector.multi_reduction <maximumf>, %90, %cst_31 [1] : vector<16x16xf32> to vector<16xf32>
    %92 = vector.shape_cast %91 : vector<16xf32> to vector<16x1xf32>
    %93 = vector.broadcast %92 : vector<16x1xf32> to vector<16x16xf32>
    %94 = arith.subf %90, %93 : vector<16x16xf32>
    %95 = math.exp %94 : vector<16x16xf32>
    %cst_32 = arith.constant dense<0.000000e+00> : vector<16xf32>
    %96 = vector.multi_reduction <add>, %95, %cst_32 [1] : vector<16x16xf32> to vector<16xf32>
    %97 = vector.shape_cast %96 : vector<16xf32> to vector<16x1xf32>
    %98 = tpu.reciprocal %97 {approx = true} : vector<16x1xf32> -> vector<16x1xf32>
    %99 = vector.broadcast %98 : vector<16x1xf32> to vector<16x16xf32>
    %100 = arith.mulf %95, %99 : vector<16x16xf32>
    %101 = arith.truncf %100 : vector<16x16xf32> to vector<16x16xbf16>
    %102 = arith.truncf %84 : vector<16x32xf32> to vector<16x32xbf16>
    %cst_33 = arith.constant dense<0.000000e+00> : vector<16x32xf32>
    %103 = tpu.matmul %101, %102, %cst_33 {dimension_numbers = #tpu.dot_dimension_numbers<[1], [0], [0], [1], [0, 0, 1, 1], [], []>} : vector<16x16xbf16>, vector<16x32xbf16>, vector<16x32xf32> -> vector<16x32xf32>
    %c0_34 = arith.constant 0 : index
    %c96 = arith.constant 96 : index
    %104 = vector.load %arg21[%c0_34, %c96] : memref<16x128xf32, #tpu.memory_space<vmem>>, vector<16x32xf32>
    tpu.vector_store %arg21[%c0_34, %c96], %103 {strides = array<i32>} : memref<16x128xf32, #tpu.memory_space<vmem>>, vector<16x32xf32>,
    %c0_35 = arith.constant 0 : index
    %c0_36 = arith.constant 0 : index
    %105 = vector.load %arg21[%c0_35, %c0_36] : memref<16x128xf32, #tpu.memory_space<vmem>>, vector<16x128xf32>
    %106 = arith.truncf %105 : vector<16x128xf32> to vector<16x128xbf16>
    %c0_37 = arith.constant 0 : index
    %c0_38 = arith.constant 0 : index
    %c0_39 = arith.constant 0 : index
    %107 = vector.load %arg7[%c0_37, %c0_38, %c0_39] : memref<1x128x128xbf16, #tpu.memory_space<vmem>>, vector<1x128x128xbf16>
    %108 = vector.shape_cast %107 : vector<1x128x128xbf16> to vector<128x128xbf16>
    %cst_40 = arith.constant dense<0.000000e+00> : vector<16x128xf32>
    %109 = tpu.matmul %106, %108, %cst_40 {dimension_numbers = #tpu.dot_dimension_numbers<[1], [0], [0], [1], [0, 0, 1, 1], [], []>} : vector<16x128xbf16>, vector<128x128xbf16>, vector<16x128xf32> -> vector<16x128xf32>
    %c0_41 = arith.constant 0 : index
    %c0_42 = arith.constant 0 : index
    %c0_43 = arith.constant 0 : index
    %110 = vector.load %arg8[%c0_41, %c0_42, %c0_43] : memref<1x1x128xf32, #tpu.memory_space<vmem>>, vector<1x1x128xf32>
    %111 = vector.shape_cast %110 : vector<1x1x128xf32> to vector<1x128xf32>
    %112 = vector.broadcast %111 : vector<1x128xf32> to vector<16x128xf32>
    %113 = arith.addf %109, %112 : vector<16x128xf32>
    %114 = arith.addf %113, %3 : vector<16x128xf32>
    %c0_44 = arith.constant 0 : index
    %c0_45 = arith.constant 0 : index
    %c0_46 = arith.constant 0 : index
    %115 = vector.load %arg9[%c0_44, %c0_45, %c0_46] : memref<1x1x128xf32, #tpu.memory_space<vmem>>, vector<1x1x128xf32>
    %116 = vector.shape_cast %115 : vector<1x1x128xf32> to vector<1x128xf32>
    %c0_47 = arith.constant 0 : index
    %c0_48 = arith.constant 0 : index
    %c0_49 = arith.constant 0 : index
    %117 = vector.load %arg10[%c0_47, %c0_48, %c0_49] : memref<1x1x128xf32, #tpu.memory_space<vmem>>, vector<1x1x128xf32>
    %118 = vector.shape_cast %117 : vector<1x1x128xf32> to vector<1x128xf32>
    %cst_50 = arith.constant dense<0.000000e+00> : vector<16xf32>
    %119 = vector.multi_reduction <add>, %114, %cst_50 [1] : vector<16x128xf32> to vector<16xf32>
    %120 = vector.shape_cast %119 : vector<16xf32> to vector<16x1xf32>
    %cst_51 = arith.constant 1.280000e+02 : f32
    %121 = vector.broadcast %cst_51 : f32 to vector<16x1xf32>
    %122 = arith.divf %120, %121 : vector<16x1xf32>
    %123 = vector.broadcast %122 : vector<16x1xf32> to vector<16x128xf32>
    %124 = arith.subf %114, %123 : vector<16x128xf32>
    %125 = arith.mulf %124, %124 : vector<16x128xf32>
    %cst_52 = arith.constant dense<0.000000e+00> : vector<16xf32>
    %126 = vector.multi_reduction <add>, %125, %cst_52 [1] : vector<16x128xf32> to vector<16xf32>
    %127 = vector.shape_cast %126 : vector<16xf32> to vector<16x1xf32>
    %cst_53 = arith.constant 1.280000e+02 : f32
    %128 = vector.broadcast %cst_53 : f32 to vector<16x1xf32>
    %129 = arith.divf %127, %128 : vector<16x1xf32>
    %cst_54 = arith.constant 9.99999996E-13 : f32
    %130 = vector.broadcast %cst_54 : f32 to vector<16x1xf32>
    %131 = arith.addf %129, %130 : vector<16x1xf32>
    %132 = math.rsqrt %131 : vector<16x1xf32>
    %133 = vector.broadcast %132 : vector<16x1xf32> to vector<16x128xf32>
    %134 = arith.mulf %124, %133 : vector<16x128xf32>
    %135 = vector.broadcast %116 : vector<1x128xf32> to vector<16x128xf32>
    %136 = arith.mulf %134, %135 : vector<16x128xf32>
    %137 = vector.broadcast %118 : vector<1x128xf32> to vector<16x128xf32>
    %138 = arith.addf %136, %137 : vector<16x128xf32>
    %139 = arith.truncf %138 : vector<16x128xf32> to vector<16x128xbf16>
    %c0_55 = arith.constant 0 : index
    %c0_56 = arith.constant 0 : index
    %c0_57 = arith.constant 0 : index
    %140 = vector.load %arg11[%c0_55, %c0_56, %c0_57] : memref<1x128x512xbf16, #tpu.memory_space<vmem>>, vector<1x128x512xbf16>
    %141 = vector.shape_cast %140 : vector<1x128x512xbf16> to vector<128x512xbf16>
    %cst_58 = arith.constant dense<0.000000e+00> : vector<16x512xf32>
    %142 = tpu.matmul %139, %141, %cst_58 {dimension_numbers = #tpu.dot_dimension_numbers<[1], [0], [0], [1], [0, 0, 1, 1], [], []>} : vector<16x128xbf16>, vector<128x512xbf16>, vector<16x512xf32> -> vector<16x512xf32>
    %c0_59 = arith.constant 0 : index
    %c0_60 = arith.constant 0 : index
    %c0_61 = arith.constant 0 : index
    %143 = vector.load %arg12[%c0_59, %c0_60, %c0_61] : memref<1x1x512xf32, #tpu.memory_space<vmem>>, vector<1x1x512xf32>
    %144 = vector.shape_cast %143 : vector<1x1x512xf32> to vector<1x512xf32>
    %145 = vector.broadcast %144 : vector<1x512xf32> to vector<16x512xf32>
    %146 = arith.addf %142, %145 : vector<16x512xf32>
    %cst_62 = arith.constant 5.000000e-01 : f32
    %147 = vector.broadcast %cst_62 : f32 to vector<16x512xf32>
    %148 = arith.mulf %147, %146 : vector<16x512xf32>
    %cst_63 = arith.constant 4.471500e-02 : f32
    %149 = vector.broadcast %cst_63 : f32 to vector<16x512xf32>
    %150 = arith.mulf %149, %146 : vector<16x512xf32>
    %151 = arith.mulf %150, %146 : vector<16x512xf32>
    %152 = arith.mulf %151, %146 : vector<16x512xf32>
    %153 = arith.addf %146, %152 : vector<16x512xf32>
    %cst_64 = arith.constant 0.797884583 : f32
    %154 = vector.broadcast %cst_64 : f32 to vector<16x512xf32>
    %155 = arith.mulf %154, %153 : vector<16x512xf32>
    %156 = math.tanh %155 : vector<16x512xf32>
    %cst_65 = arith.constant 1.000000e+00 : f32
    %157 = vector.broadcast %cst_65 : f32 to vector<16x512xf32>
    %158 = arith.addf %157, %156 : vector<16x512xf32>
    %159 = arith.mulf %148, %158 : vector<16x512xf32>
    %160 = arith.truncf %159 : vector<16x512xf32> to vector<16x512xbf16>
    %c0_66 = arith.constant 0 : index
    %c0_67 = arith.constant 0 : index
    %c0_68 = arith.constant 0 : index
    %161 = vector.load %arg13[%c0_66, %c0_67, %c0_68] : memref<1x512x128xbf16, #tpu.memory_space<vmem>>, vector<1x512x128xbf16>
    %162 = vector.shape_cast %161 : vector<1x512x128xbf16> to vector<512x128xbf16>
    %cst_69 = arith.constant dense<0.000000e+00> : vector<16x128xf32>
    %163 = tpu.matmul %160, %162, %cst_69 {dimension_numbers = #tpu.dot_dimension_numbers<[1], [0], [0], [1], [0, 0, 1, 1], [], []>} : vector<16x512xbf16>, vector<512x128xbf16>, vector<16x128xf32> -> vector<16x128xf32>
    %c0_70 = arith.constant 0 : index
    %c0_71 = arith.constant 0 : index
    %c0_72 = arith.constant 0 : index
    %164 = vector.load %arg14[%c0_70, %c0_71, %c0_72] : memref<1x1x128xf32, #tpu.memory_space<vmem>>, vector<1x1x128xf32>
    %165 = vector.shape_cast %164 : vector<1x1x128xf32> to vector<1x128xf32>
    %166 = vector.broadcast %165 : vector<1x128xf32> to vector<16x128xf32>
    %167 = arith.addf %163, %166 : vector<16x128xf32>
    %168 = arith.addf %167, %138 : vector<16x128xf32>
    %c0_73 = arith.constant 0 : index
    %c0_74 = arith.constant 0 : index
    %c0_75 = arith.constant 0 : index
    %169 = vector.load %arg15[%c0_73, %c0_74, %c0_75] : memref<1x1x128xf32, #tpu.memory_space<vmem>>, vector<1x1x128xf32>
    %170 = vector.shape_cast %169 : vector<1x1x128xf32> to vector<1x128xf32>
    %c0_76 = arith.constant 0 : index
    %c0_77 = arith.constant 0 : index
    %c0_78 = arith.constant 0 : index
    %171 = vector.load %arg16[%c0_76, %c0_77, %c0_78] : memref<1x1x128xf32, #tpu.memory_space<vmem>>, vector<1x1x128xf32>
    %172 = vector.shape_cast %171 : vector<1x1x128xf32> to vector<1x128xf32>
    %cst_79 = arith.constant dense<0.000000e+00> : vector<16xf32>
    %173 = vector.multi_reduction <add>, %168, %cst_79 [1] : vector<16x128xf32> to vector<16xf32>
    %174 = vector.shape_cast %173 : vector<16xf32> to vector<16x1xf32>
    %cst_80 = arith.constant 1.280000e+02 : f32
    %175 = vector.broadcast %cst_80 : f32 to vector<16x1xf32>
    %176 = arith.divf %174, %175 : vector<16x1xf32>
    %177 = vector.broadcast %176 : vector<16x1xf32> to vector<16x128xf32>
    %178 = arith.subf %168, %177 : vector<16x128xf32>
    %179 = arith.mulf %178, %178 : vector<16x128xf32>
    %cst_81 = arith.constant dense<0.000000e+00> : vector<16xf32>
    %180 = vector.multi_reduction <add>, %179, %cst_81 [1] : vector<16x128xf32> to vector<16xf32>
    %181 = vector.shape_cast %180 : vector<16xf32> to vector<16x1xf32>
    %cst_82 = arith.constant 1.280000e+02 : f32
    %182 = vector.broadcast %cst_82 : f32 to vector<16x1xf32>
    %183 = arith.divf %181, %182 : vector<16x1xf32>
    %cst_83 = arith.constant 9.99999996E-13 : f32
    %184 = vector.broadcast %cst_83 : f32 to vector<16x1xf32>
    %185 = arith.addf %183, %184 : vector<16x1xf32>
    %186 = math.rsqrt %185 : vector<16x1xf32>
    %187 = vector.broadcast %186 : vector<16x1xf32> to vector<16x128xf32>
    %188 = arith.mulf %178, %187 : vector<16x128xf32>
    %189 = vector.broadcast %170 : vector<1x128xf32> to vector<16x128xf32>
    %190 = arith.mulf %188, %189 : vector<16x128xf32>
    %191 = vector.broadcast %172 : vector<1x128xf32> to vector<16x128xf32>
    %192 = arith.addf %190, %191 : vector<16x128xf32>
    %c0_84 = arith.constant 0 : index
    %c0_85 = arith.constant 0 : index
    %193 = vector.load %arg20[%c0_84, %c0_85] : memref<16x128xf32, #tpu.memory_space<vmem>>, vector<16x128xf32>
    tpu.vector_store %arg20[%c0_84, %c0_85], %192 {strides = array<i32>} : memref<16x128xf32, #tpu.memory_space<vmem>>, vector<16x128xf32>,
    %c1_i32 = arith.constant 1 : i32
    %194 = arith.cmpi eq, %arg0, %c1_i32 : i32
    %195 = arith.extui %194 : i1 to i32
    %c0_i32_86 = arith.constant 0 : i32
    %196 = arith.cmpi ne, %195, %c0_i32_86 : i32
    scf.if %196 {
      %197 = arith.truncf %192 : vector<16x128xf32> to vector<16x128xbf16>
      %c0_87 = arith.constant 0 : index
      %c0_88 = arith.constant 0 : index
      %198 = vector.load %arg17[%c0_87, %c0_88] : memref<128x128xbf16, #tpu.memory_space<vmem>>, vector<128x128xbf16>
      %cst_89 = arith.constant dense<0.000000e+00> : vector<16x128xf32>
      %199 = tpu.matmul %197, %198, %cst_89 {dimension_numbers = #tpu.dot_dimension_numbers<[1], [0], [0], [1], [0, 0, 1, 1], [], []>} : vector<16x128xbf16>, vector<128x128xbf16>, vector<16x128xf32> -> vector<16x128xf32>
      %c0_90 = arith.constant 0 : index
      %c0_91 = arith.constant 0 : index
      %200 = vector.load %arg18[%c0_90, %c0_91] : memref<1x128xf32, #tpu.memory_space<vmem>>, vector<1x128xf32>
      %201 = vector.broadcast %200 : vector<1x128xf32> to vector<16x128xf32>
      %202 = arith.addf %199, %201 : vector<16x128xf32>
      %c0_92 = arith.constant 0 : index
      %c0_93 = arith.constant 0 : index
      %203 = vector.load %arg19[%c0_92, %c0_93] : memref<16x128xf32, #tpu.memory_space<vmem>>, vector<16x128xf32>
      tpu.vector_store %arg19[%c0_92, %c0_93], %202 {strides = array<i32>} : memref<16x128xf32, #tpu.memory_space<vmem>>, vector<16x128xf32>,
    } else {
    }
    return
  }
  func.func @transform_0(%arg0: i32) -> (i32, i32) {
    %c0_i32 = arith.constant 0 : i32
    %c0_i32_0 = arith.constant 0 : i32
    %c0_i32_1 = arith.constant 0 : i32
    return %c0_i32, %c0_i32_0 : i32, i32
  }
  func.func @transform_1(%arg0: i32) -> (i32, i32) {
    %c0_i32 = arith.constant 0 : i32
    %c0_i32_0 = arith.constant 0 : i32
    %c0_i32_1 = arith.constant 0 : i32
    return %c0_i32, %c0_i32_0 : i32, i32
  }
  func.func @transform_2(%arg0: i32) -> (i32, i32) {
    %c0_i32 = arith.constant 0 : i32
    %c0_i32_0 = arith.constant 0 : i32
    %c0_i32_1 = arith.constant 0 : i32
    return %c0_i32, %c0_i32_0 : i32, i32
  }
  func.func @transform_3(%arg0: i32) -> (i32, i32) {
    %c0_i32 = arith.constant 0 : i32
    %c0_i32_0 = arith.constant 0 : i32
    %c0_i32_1 = arith.constant 0 : i32
    return %c0_i32, %c0_i32_0 : i32, i32
  }
  func.func @transform_4(%arg0: i32) -> (i32, i32, i32) {
    %c0_i32 = arith.constant 0 : i32
    %c0_i32_0 = arith.constant 0 : i32
    %c0_i32_1 = arith.constant 0 : i32
    return %arg0, %c0_i32, %c0_i32_0 : i32, i32, i32
  }
  func.func @transform_5(%arg0: i32) -> (i32, i32, i32) {
    %c0_i32 = arith.constant 0 : i32
    %c0_i32_0 = arith.constant 0 : i32
    %c0_i32_1 = arith.constant 0 : i32
    return %arg0, %c0_i32, %c0_i32_0 : i32, i32, i32
  }
  func.func @transform_6(%arg0: i32) -> (i32, i32, i32) {
    %c0_i32 = arith.constant 0 : i32
    %c0_i32_0 = arith.constant 0 : i32
    %c0_i32_1 = arith.constant 0 : i32
    return %arg0, %c0_i32, %c0_i32_0 : i32, i32, i32
  }
  func.func @transform_7(%arg0: i32) -> (i32, i32, i32) {
    %c0_i32 = arith.constant 0 : i32
    %c0_i32_0 = arith.constant 0 : i32
    %c0_i32_1 = arith.constant 0 : i32
    return %arg0, %c0_i32, %c0_i32_0 : i32, i32, i32
  }
  func.func @transform_8(%arg0: i32) -> (i32, i32, i32) {
    %c0_i32 = arith.constant 0 : i32
    %c0_i32_0 = arith.constant 0 : i32
    %c0_i32_1 = arith.constant 0 : i32
    return %arg0, %c0_i32, %c0_i32_0 : i32, i32, i32
  }
  func.func @transform_9(%arg0: i32) -> (i32, i32, i32) {
    %c0_i32 = arith.constant 0 : i32
    %c0_i32_0 = arith.constant 0 : i32
    %c0_i32_1 = arith.constant 0 : i32
    return %arg0, %c0_i32, %c0_i32_0 : i32, i32, i32
  }
  func.func @transform_10(%arg0: i32) -> (i32, i32, i32) {
    %c0_i32 = arith.constant 0 : i32
    %c0_i32_0 = arith.constant 0 : i32
    %c0_i32_1 = arith.constant 0 : i32
    return %arg0, %c0_i32, %c0_i32_0 : i32, i32, i32
  }
  func.func @transform_11(%arg0: i32) -> (i32, i32, i32) {
    %c0_i32 = arith.constant 0 : i32
    %c0_i32_0 = arith.constant 0 : i32
    %c0_i32_1 = arith.constant 0 : i32
    return %arg0, %c0_i32, %c0_i32_0 : i32, i32, i32
  }
  func.func @transform_12(%arg0: i32) -> (i32, i32, i32) {
    %c0_i32 = arith.constant 0 : i32
    %c0_i32_0 = arith.constant 0 : i32
    %c0_i32_1 = arith.constant 0 : i32
    return %arg0, %c0_i32, %c0_i32_0 : i32, i32, i32
  }
  func.func @transform_13(%arg0: i32) -> (i32, i32, i32) {
    %c0_i32 = arith.constant 0 : i32
    %c0_i32_0 = arith.constant 0 : i32
    %c0_i32_1 = arith.constant 0 : i32
    return %arg0, %c0_i32, %c0_i32_0 : i32, i32, i32
  }
  func.func @transform_14(%arg0: i32) -> (i32, i32, i32) {
    %c0_i32 = arith.constant 0 : i32
    %c0_i32_0 = arith.constant 0 : i32
    %c0_i32_1 = arith.constant 0 : i32
    return %arg0, %c0_i32, %c0_i32_0 : i32, i32, i32
  }
  func.func @transform_15(%arg0: i32) -> (i32, i32, i32) {
    %c0_i32 = arith.constant 0 : i32
    %c0_i32_0 = arith.constant 0 : i32
    %c0_i32_1 = arith.constant 0 : i32
    return %arg0, %c0_i32, %c0_i32_0 : i32, i32, i32
  }
  func.func @transform_16(%arg0: i32) -> (i32, i32) {
    %c0_i32 = arith.constant 0 : i32
    %c0_i32_0 = arith.constant 0 : i32
    %c0_i32_1 = arith.constant 0 : i32
    return %c0_i32, %c0_i32_0 : i32, i32
  }
  func.func @transform_17(%arg0: i32) -> (i32, i32) {
    %c0_i32 = arith.constant 0 : i32
    %c0_i32_0 = arith.constant 0 : i32
    %c0_i32_1 = arith.constant 0 : i32
    return %c0_i32, %c0_i32_0 : i32, i32
  }
  func.func @transform_18(%arg0: i32) -> (i32, i32) {
    %c0_i32 = arith.constant 0 : i32
    %c0_i32_0 = arith.constant 0 : i32
    %c0_i32_1 = arith.constant 0 : i32
    return %c0_i32, %c0_i32_0 : i32, i32
  }
}

</mosaic_0001>

<llo_original>
// kernel: mul.8
$region0: #{mul.8}
  %s0 = inlined_call_operand.vmem [shape: f32[2,8], index: 0, kind: input, shape index: {}]
  %s1 = inlined_call_operand.vmem [shape: f32[16], index: 1, kind: output, shape index: {}]
  $region1: #{mul.8} parent=0
    #allocation0 [shape = 'u8[4096]{0}', space=vmem, size = 0x1000, scoped, tag = 'scoped mem for output reshape']
    #allocation1 [shape = 'u8[4096]{0}', space=vmem, size = 0x1000, scoped, tag = 'scoped mem for input reshape']
    %s3 = sshll.u32 1, 2
    %s4 = ssub.s32 %s3, 1
    %v5 = vld [vmem:[%s0] sm:%s4]
    %6 = vst [vmem:[#allocation1] sm:%s4] %v5
    %v7 = vld [vmem:[#allocation1] sm:$0x1]
    %vm8 = vcmask 64512
    %9 = vst.msk [vmem:[#allocation0] sm:$0x1] %vm8, %v7
    %s10 = scalar_lea.vmem [#allocation1], 1
    %v11 = vld [vmem:[%s10] sm:$0x1]
    %12 = vrot.lane.b32.xlu0 %v11, 8
    %v13 = vpop.permute.xlu0 %12
    %vm14 = vcmask 130112
    %15 = vst.msk [vmem:[#allocation0] sm:$0x1] %vm14, %v13
    %s17 = sshll.u32 1, 1
    %s18 = ssub.s32 %s17, 1
    %v20 = vld [vmem:[#allocation0] sm:%s18]
    %s21 = sshll.u32 1, 1
    %s22 = ssub.s32 %s21, 1
    %23 = vst [vmem:[%s1] sm:%s22] %v20

// kernel: bert_for_token_classification.1
$region0: #{bert_for_token_classification.1}
  #allocation0 [shape = 'u32[]', space=smem, size = 0x4, offset = 0x4, fixed_abs, tag = 'smem constant byte address 0x4 - core index']
  #allocation1 [shape = 'u32[144,128]{1,0:T(1,128)}', space=vmem, size = 0x12000, scoped, tag = 'internal scratch']
  #allocation2 [shape = 'f32[16,128]{1,0:T(8,128)}', space=vmem, size = 0x2000, scoped, tag = 'scratch operand']
  #allocation3 [shape = 'f32[16,128]{1,0:T(8,128)}', space=vmem, size = 0x2000, scoped, tag = 'scratch operand']
  %s0 = inlined_call_operand.vmem [shape: f32[16,128], index: 0, kind: input, shape index: {}]
  %s1 = inlined_call_operand.vmem [shape: f32[16,16], index: 1, kind: input, shape index: {}]
  %s2 = inlined_call_operand.vmem [shape: f32[1,128], index: 2, kind: input, shape index: {}]
  %s3 = inlined_call_operand.vmem [shape: f32[1,128], index: 3, kind: input, shape index: {}]
  %s4 = inlined_call_operand.hbm [shape: bf16[2,128,384], index: 4, kind: input, shape index: {}]
  %s5 = inlined_call_operand.vmem [shape: f32[2,1,384], index: 5, kind: input, shape index: {}]
  %s6 = inlined_call_operand.vmem [shape: bf16[2,128,128], index: 6, kind: input, shape index: {}]
  %s7 = inlined_call_operand.vmem [shape: f32[2,1,128], index: 7, kind: input, shape index: {}]
  %s8 = inlined_call_operand.vmem [shape: f32[2,1,128], index: 8, kind: input, shape index: {}]
  %s9 = inlined_call_operand.vmem [shape: f32[2,1,128], index: 9, kind: input, shape index: {}]
  %s10 = inlined_call_operand.hbm [shape: bf16[2,128,512], index: 10, kind: input, shape index: {}]
  %s11 = inlined_call_operand.vmem [shape: f32[2,1,512], index: 11, kind: input, shape index: {}]
  %s12 = inlined_call_operand.hbm [shape: bf16[2,512,128], index: 12, kind: input, shape index: {}]
  %s13 = inlined_call_operand.vmem [shape: f32[2,1,128], index: 13, kind: input, shape index: {}]
  %s14 = inlined_call_operand.vmem [shape: f32[2,1,128], index: 14, kind: input, shape index: {}]
  %s15 = inlined_call_operand.vmem [shape: f32[2,1,128], index: 15, kind: input, shape index: {}]
  %s16 = inlined_call_operand.vmem [shape: bf16[128,128], index: 16, kind: input, shape index: {}]
  %s17 = inlined_call_operand.vmem [shape: f32[1,128], index: 17, kind: input, shape index: {}]
  %s18 = inlined_call_operand.vmem [shape: f32[16,128], index: 18, kind: output, shape index: {}]
  %s19 = sld [smem:[#allocation0]]
  $region125: #{bert_for_token_classification.1} parent=0
    _
  %s21 = ssub.s32 1, %s19
  %s22 = scalar_select 0, %s21, %s19
  $region1: #{bert_for_token_classification.1} parent=0
    #allocation4 [shape = 'u8[196608]{0}', space=vmem, size = 0x30000, scoped, tag = 'input window, operand 4']
    #allocation5 [shape = 's32[2]{0}', space=sflag, size = 0x8, scoped, tag = 'scoped memory for bert_for_token_classification.1']
    #allocation6 [shape = 'u8[262144]{0}', space=vmem, size = 0x40000, scoped, tag = 'input window, operand 10']
    #allocation7 [shape = 's32[2]{0}', space=sflag, size = 0x8, scoped, tag = 'scoped memory for bert_for_token_classification.1']
    #allocation8 [shape = 'u8[262144]{0}', space=vmem, size = 0x40000, scoped, tag = 'input window, operand 12']
    %23 = vsyncpa [#allocation5], 0
    %s24 = scalar_lea.sflag [#allocation5], 1
    %25 = vsyncpa %s24, 0
    %26 = vsyncpa [#allocation7], 0
    %s27 = scalar_lea.sflag [#allocation7], 1
    %28 = vsyncpa %s27, 0
    loop: start=0, step=1, limit=4
    $region2: #{bert_for_token_classification.1} parent=1 // loop_pre_header
      _
    $region3: #{bert_for_token_classification.1} parent=1 // loop_header
      %s30 = sphi 0, %s34
      %p31 = scmp.ge.s32.totalorder %s30, 4
      %s38 = sphi 0, %s38
      %s40 = sphi 0, %s38
      %s41 = sphi 0, %s40
      %s55 = sphi 0, %s41
      %s59 = sphi 0, %s59
      %s61 = sphi 0, %s59
      %s62 = sphi 0, %s61
      %s76 = sphi 0, %s62
      %s80 = sphi 0, %s80
      %s82 = sphi 0, %s80
      %s83 = sphi 0, %s82
      %s97 = sphi 0, %s83
      %s101 = sphi 0, %s101
      %s103 = sphi 0, %s101
      %s104 = sphi 0, %s103
      %s118 = sphi 0, %s104
      %s124 = sphi 0, %s126
      %s127 = sphi 0, %s124
      %s128 = sphi 0, %s127
      %s144 = sphi 0, %s128
      %s150 = sphi 0, %s152
      %s153 = sphi 0, %s150
      %s154 = sphi 0, %s153
      %s170 = sphi 0, %s154
      %s176 = sphi 0, %s178
      %s179 = sphi 0, %s176
      %s180 = sphi 0, %s179
      %s196 = sphi 0, %s180
      %s202 = sphi 0, %s204
      %s205 = sphi 0, %s202
      %s206 = sphi 0, %s205
      %s222 = sphi 0, %s206
      %s228 = sphi 0, %s230
      %s231 = sphi 0, %s228
      %s232 = sphi 0, %s231
      %s248 = sphi 0, %s232
      %s254 = sphi 0, %s256
      %s257 = sphi 0, %s254
      %s258 = sphi 0, %s257
      %s274 = sphi 0, %s258
      %s280 = sphi 0, %s282
      %s283 = sphi 0, %s280
      %s284 = sphi 0, %s283
      %s300 = sphi 0, %s284
      %s306 = sphi 0, %s308
      %s309 = sphi 0, %s306
      %s310 = sphi 0, %s309
      %s326 = sphi 0, %s310
      %s332 = sphi 0, %s334
      %s335 = sphi 0, %s332
      %s336 = sphi 0, %s335
      %s352 = sphi 0, %s336
      %s358 = sphi 0, %s360
      %s361 = sphi 0, %s358
      %s362 = sphi 0, %s361
      %s378 = sphi 0, %s362
      %s384 = sphi 0, %s386
      %s387 = sphi 0, %s384
      %s388 = sphi 0, %s387
      %s404 = sphi 0, %s388
      %s410 = sphi 0, %s412
      %s413 = sphi 0, %s410
      %s414 = sphi 0, %s413
      %s430 = sphi 0, %s414
      %s434 = sphi 0, %s434
      %s436 = sphi 0, %s434
      %s437 = sphi 0, %s436
      %s451 = sphi 0, %s437
      %s455 = sphi 0, %s455
      %s457 = sphi 0, %s455
      %s458 = sphi 0, %s457
      %s472 = sphi 0, %s458
      %s476 = sphi 0, %s476
      %s478 = sphi 0, %s476
      %s479 = sphi 0, %s478
      %s493 = sphi 0, %s479
    $region4: #{bert_for_token_classification.1} parent=1 // loop_header_branch
      %33 = sbr.rel (%p31) target = $region8
    $region5: #{bert_for_token_classification.1} parent=1 // loop_body
      %s35 = ssub.s32 %s30, 1
      %s36 = ssub.s32 %s30, 2
      %s37 = sadd.s32 %s30, 1
      %s39 = sadd.s32 %s38, 1
      %p42 = scmp.eq.s32.totalorder %s30, 1
      %p43 = scmp.ne.s32.totalorder %s38, %s40
      %p44 = scmp.eq.s32.totalorder %s30, 0
      %p45 = por %p43, %p44
      %p46 = scmp.ne.s32.totalorder %s38, %s40
      %p47 = scmp.eq.s32.totalorder %s35, 1
      %p48 = por %p46, %p47
      %p49 = scmp.ne.s32.totalorder %s40, %s41
      %p50 = scmp.eq.s32.totalorder %s35, 0
      %p51 = por %p49, %p50
      %p52 = scmp.ne.s32.totalorder %s40, %s41
      %p53 = scmp.eq.s32.totalorder %s36, 1
      %p54 = por %p52, %p53
      %p56 = scmp.ne.s32.totalorder %s41, %s55
      %p57 = scmp.eq.s32.totalorder %s36, 0
      %p58 = por %p56, %p57
      %s60 = sadd.s32 %s59, 1
      %p63 = scmp.eq.s32.totalorder %s30, 1
      %p64 = scmp.ne.s32.totalorder %s59, %s61
      %p65 = scmp.eq.s32.totalorder %s30, 0
      %p66 = por %p64, %p65
      %p67 = scmp.ne.s32.totalorder %s59, %s61
      %p68 = scmp.eq.s32.totalorder %s35, 1
      %p69 = por %p67, %p68
      %p70 = scmp.ne.s32.totalorder %s61, %s62
      %p71 = scmp.eq.s32.totalorder %s35, 0
      %p72 = por %p70, %p71
      %p73 = scmp.ne.s32.totalorder %s61, %s62
      %p74 = scmp.eq.s32.totalorder %s36, 1
      %p75 = por %p73, %p74
      %p77 = scmp.ne.s32.totalorder %s62, %s76
      %p78 = scmp.eq.s32.totalorder %s36, 0
      %p79 = por %p77, %p78
      %s81 = sadd.s32 %s80, 1
      %p84 = scmp.eq.s32.totalorder %s30, 1
      %p85 = scmp.ne.s32.totalorder %s80, %s82
      %p86 = scmp.eq.s32.totalorder %s30, 0
      %p87 = por %p85, %p86
      %p88 = scmp.ne.s32.totalorder %s80, %s82
      %p89 = scmp.eq.s32.totalorder %s35, 1
      %p90 = por %p88, %p89
      %p91 = scmp.ne.s32.totalorder %s82, %s83
      %p92 = scmp.eq.s32.totalorder %s35, 0
      %p93 = por %p91, %p92
      %p94 = scmp.ne.s32.totalorder %s82, %s83
      %p95 = scmp.eq.s32.totalorder %s36, 1
      %p96 = por %p94, %p95
      %p98 = scmp.ne.s32.totalorder %s83, %s97
      %p99 = scmp.eq.s32.totalorder %s36, 0
      %p100 = por %p98, %p99
      %s102 = sadd.s32 %s101, 1
      %p105 = scmp.eq.s32.totalorder %s30, 1
      %p106 = scmp.ne.s32.totalorder %s101, %s103
      %p107 = scmp.eq.s32.totalorder %s30, 0
      %p108 = por %p106, %p107
      %p109 = scmp.ne.s32.totalorder %s101, %s103
      %p110 = scmp.eq.s32.totalorder %s35, 1
      %p111 = por %p109, %p110
      %p112 = scmp.ne.s32.totalorder %s103, %s104
      %p113 = scmp.eq.s32.totalorder %s35, 0
      %p114 = por %p112, %p113
      %p115 = scmp.ne.s32.totalorder %s103, %s104
      %p116 = scmp.eq.s32.totalorder %s36, 1
      %p117 = por %p115, %p116
      %p119 = scmp.ne.s32.totalorder %s104, %s118
      %p120 = scmp.eq.s32.totalorder %s36, 0
      %p121 = por %p119, %p120
      %s122 = ssub.s32 %s30, %s37
      %p123 = scmp.eq.s32.totalorder %s122, 0
      %s125 = sadd.s32 %s124, 1
      %s126 = scalar_select %p123, %s124, %s125
      %p129 = pneg %p123
      %p130 = scmp.eq.s32.totalorder %s30, 1
      %p131 = por %p129, %p130
      %p132 = scmp.ne.s32.totalorder %s124, %s127
      %p133 = scmp.eq.s32.totalorder %s30, 0
      %p134 = por %p132, %p133
      %p135 = scmp.ne.s32.totalorder %s124, %s127
      %p136 = scmp.eq.s32.totalorder %s35, 1
      %p137 = por %p135, %p136
      %p138 = scmp.ne.s32.totalorder %s127, %s128
      %p139 = scmp.eq.s32.totalorder %s35, 0
      %p140 = por %p138, %p139
      %p141 = scmp.ne.s32.totalorder %s127, %s128
      %p142 = scmp.eq.s32.totalorder %s36, 1
      %p143 = por %p141, %p142
      %p145 = scmp.ne.s32.totalorder %s128, %s144
      %p146 = scmp.eq.s32.totalorder %s36, 0
      %p147 = por %p145, %p146
      %s148 = ssub.s32 %s30, %s37
      %p149 = scmp.eq.s32.totalorder %s148, 0
      %s151 = sadd.s32 %s150, 1
      %s152 = scalar_select %p149, %s150, %s151
      %p155 = pneg %p149
      %p156 = scmp.eq.s32.totalorder %s30, 1
      %p157 = por %p155, %p156
      %p158 = scmp.ne.s32.totalorder %s150, %s153
      %p159 = scmp.eq.s32.totalorder %s30, 0
      %p160 = por %p158, %p159
      %p161 = scmp.ne.s32.totalorder %s150, %s153
      %p162 = scmp.eq.s32.totalorder %s35, 1
      %p163 = por %p161, %p162
      %p164 = scmp.ne.s32.totalorder %s153, %s154
      %p165 = scmp.eq.s32.totalorder %s35, 0
      %p166 = por %p164, %p165
      %p167 = scmp.ne.s32.totalorder %s153, %s154
      %p168 = scmp.eq.s32.totalorder %s36, 1
      %p169 = por %p167, %p168
      %p171 = scmp.ne.s32.totalorder %s154, %s170
      %p172 = scmp.eq.s32.totalorder %s36, 0
      %p173 = por %p171, %p172
      %s174 = ssub.s32 %s30, %s37
      %p175 = scmp.eq.s32.totalorder %s174, 0
      %s177 = sadd.s32 %s176, 1
      %s178 = scalar_select %p175, %s176, %s177
      %p181 = pneg %p175
      %p182 = scmp.eq.s32.totalorder %s30, 1
      %p183 = por %p181, %p182
      %p184 = scmp.ne.s32.totalorder %s176, %s179
      %p185 = scmp.eq.s32.totalorder %s30, 0
      %p186 = por %p184, %p185
      %p187 = scmp.ne.s32.totalorder %s176, %s179
      %p188 = scmp.eq.s32.totalorder %s35, 1
      %p189 = por %p187, %p188
      %p190 = scmp.ne.s32.totalorder %s179, %s180
      %p191 = scmp.eq.s32.totalorder %s35, 0
      %p192 = por %p190, %p191
      %p193 = scmp.ne.s32.totalorder %s179, %s180
      %p194 = scmp.eq.s32.totalorder %s36, 1
      %p195 = por %p193, %p194
      %p197 = scmp.ne.s32.totalorder %s180, %s196
      %p198 = scmp.eq.s32.totalorder %s36, 0
      %p199 = por %p197, %p198
      %s200 = ssub.s32 %s30, %s37
      %p201 = scmp.eq.s32.totalorder %s200, 0
      %s203 = sadd.s32 %s202, 1
      %s204 = scalar_select %p201, %s202, %s203
      %p207 = pneg %p201
      %p208 = scmp.eq.s32.totalorder %s30, 1
      %p209 = por %p207, %p208
      %p210 = scmp.ne.s32.totalorder %s202, %s205
      %p211 = scmp.eq.s32.totalorder %s30, 0
      %p212 = por %p210, %p211
      %p213 = scmp.ne.s32.totalorder %s202, %s205
      %p214 = scmp.eq.s32.totalorder %s35, 1
      %p215 = por %p213, %p214
      %p216 = scmp.ne.s32.totalorder %s205, %s206
      %p217 = scmp.eq.s32.totalorder %s35, 0
      %p218 = por %p216, %p217
      %p219 = scmp.ne.s32.totalorder %s205, %s206
      %p220 = scmp.eq.s32.totalorder %s36, 1
      %p221 = por %p219, %p220
      %p223 = scmp.ne.s32.totalorder %s206, %s222
      %p224 = scmp.eq.s32.totalorder %s36, 0
      %p225 = por %p223, %p224
      %s226 = ssub.s32 %s30, %s37
      %p227 = scmp.eq.s32.totalorder %s226, 0
      %s229 = sadd.s32 %s228, 1
      %s230 = scalar_select %p227, %s228, %s229
      %p233 = pneg %p227
      %p234 = scmp.eq.s32.totalorder %s30, 1
      %p235 = por %p233, %p234
      %p236 = scmp.ne.s32.totalorder %s228, %s231
      %p237 = scmp.eq.s32.totalorder %s30, 0
      %p238 = por %p236, %p237
      %p239 = scmp.ne.s32.totalorder %s228, %s231
      %p240 = scmp.eq.s32.totalorder %s35, 1
      %p241 = por %p239, %p240
      %p242 = scmp.ne.s32.totalorder %s231, %s232
      %p243 = scmp.eq.s32.totalorder %s35, 0
      %p244 = por %p242, %p243
      %p245 = scmp.ne.s32.totalorder %s231, %s232
      %p246 = scmp.eq.s32.totalorder %s36, 1
      %p247 = por %p245, %p246
      %p249 = scmp.ne.s32.totalorder %s232, %s248
      %p250 = scmp.eq.s32.totalorder %s36, 0
      %p251 = por %p249, %p250
      %s252 = ssub.s32 %s30, %s37
      %p253 = scmp.eq.s32.totalorder %s252, 0
      %s255 = sadd.s32 %s254, 1
      %s256 = scalar_select %p253, %s254, %s255
      %p259 = pneg %p253
      %p260 = scmp.eq.s32.totalorder %s30, 1
      %p261 = por %p259, %p260
      %p262 = scmp.ne.s32.totalorder %s254, %s257
      %p263 = scmp.eq.s32.totalorder %s30, 0
      %p264 = por %p262, %p263
      %p265 = scmp.ne.s32.totalorder %s254, %s257
      %p266 = scmp.eq.s32.totalorder %s35, 1
      %p267 = por %p265, %p266
      %p268 = scmp.ne.s32.totalorder %s257, %s258
      %p269 = scmp.eq.s32.totalorder %s35, 0
      %p270 = por %p268, %p269
      %p271 = scmp.ne.s32.totalorder %s257, %s258
      %p272 = scmp.eq.s32.totalorder %s36, 1
      %p273 = por %p271, %p272
      %p275 = scmp.ne.s32.totalorder %s258, %s274
      %p276 = scmp.eq.s32.totalorder %s36, 0
      %p277 = por %p275, %p276
      %s278 = ssub.s32 %s30, %s37
      %p279 = scmp.eq.s32.totalorder %s278, 0
      %s281 = sadd.s32 %s280, 1
      %s282 = scalar_select %p279, %s280, %s281
      %p285 = pneg %p279
      %p286 = scmp.eq.s32.totalorder %s30, 1
      %p287 = por %p285, %p286
      %p288 = scmp.ne.s32.totalorder %s280, %s283
      %p289 = scmp.eq.s32.totalorder %s30, 0
      %p290 = por %p288, %p289
      %p291 = scmp.ne.s32.totalorder %s280, %s283
      %p292 = scmp.eq.s32.totalorder %s35, 1
      %p293 = por %p291, %p292
      %p294 = scmp.ne.s32.totalorder %s283, %s284
      %p295 = scmp.eq.s32.totalorder %s35, 0
      %p296 = por %p294, %p295
      %p297 = scmp.ne.s32.totalorder %s283, %s284
      %p298 = scmp.eq.s32.totalorder %s36, 1
      %p299 = por %p297, %p298
      %p301 = scmp.ne.s32.totalorder %s284, %s300
      %p302 = scmp.eq.s32.totalorder %s36, 0
      %p303 = por %p301, %p302
      %s304 = ssub.s32 %s30, %s37
      %p305 = scmp.eq.s32.totalorder %s304, 0
      %s307 = sadd.s32 %s306, 1
      %s308 = scalar_select %p305, %s306, %s307
      %p311 = pneg %p305
      %p312 = scmp.eq.s32.totalorder %s30, 1
      %p313 = por %p311, %p312
      %p314 = scmp.ne.s32.totalorder %s306, %s309
      %p315 = scmp.eq.s32.totalorder %s30, 0
      %p316 = por %p314, %p315
      %p317 = scmp.ne.s32.totalorder %s306, %s309
      %p318 = scmp.eq.s32.totalorder %s35, 1
      %p319 = por %p317, %p318
      %p320 = scmp.ne.s32.totalorder %s309, %s310
      %p321 = scmp.eq.s32.totalorder %s35, 0
      %p322 = por %p320, %p321
      %p323 = scmp.ne.s32.totalorder %s309, %s310
      %p324 = scmp.eq.s32.totalorder %s36, 1
      %p325 = por %p323, %p324
      %p327 = scmp.ne.s32.totalorder %s310, %s326
      %p328 = scmp.eq.s32.totalorder %s36, 0
      %p329 = por %p327, %p328
      %s330 = ssub.s32 %s30, %s37
      %p331 = scmp.eq.s32.totalorder %s330, 0
      %s333 = sadd.s32 %s332, 1
      %s334 = scalar_select %p331, %s332, %s333
      %p337 = pneg %p331
      %p338 = scmp.eq.s32.totalorder %s30, 1
      %p339 = por %p337, %p338
      %p340 = scmp.ne.s32.totalorder %s332, %s335
      %p341 = scmp.eq.s32.totalorder %s30, 0
      %p342 = por %p340, %p341
      %p343 = scmp.ne.s32.totalorder %s332, %s335
      %p344 = scmp.eq.s32.totalorder %s35, 1
      %p345 = por %p343, %p344
      %p346 = scmp.ne.s32.totalorder %s335, %s336
      %p347 = scmp.eq.s32.totalorder %s35, 0
      %p348 = por %p346, %p347
      %p349 = scmp.ne.s32.totalorder %s335, %s336
      %p350 = scmp.eq.s32.totalorder %s36, 1
      %p351 = por %p349, %p350
      %p353 = scmp.ne.s32.totalorder %s336, %s352
      %p354 = scmp.eq.s32.totalorder %s36, 0
      %p355 = por %p353, %p354
      %s356 = ssub.s32 %s30, %s37
      %p357 = scmp.eq.s32.totalorder %s356, 0
      %s359 = sadd.s32 %s358, 1
      %s360 = scalar_select %p357, %s358, %s359
      %p363 = pneg %p357
      %p364 = scmp.eq.s32.totalorder %s30, 1
      %p365 = por %p363, %p364
      %p366 = scmp.ne.s32.totalorder %s358, %s361
      %p367 = scmp.eq.s32.totalorder %s30, 0
      %p368 = por %p366, %p367
      %p369 = scmp.ne.s32.totalorder %s358, %s361
      %p370 = scmp.eq.s32.totalorder %s35, 1
      %p371 = por %p369, %p370
      %p372 = scmp.ne.s32.totalorder %s361, %s362
      %p373 = scmp.eq.s32.totalorder %s35, 0
      %p374 = por %p372, %p373
      %p375 = scmp.ne.s32.totalorder %s361, %s362
      %p376 = scmp.eq.s32.totalorder %s36, 1
      %p377 = por %p375, %p376
      %p379 = scmp.ne.s32.totalorder %s362, %s378
      %p380 = scmp.eq.s32.totalorder %s36, 0
      %p381 = por %p379, %p380
      %s382 = ssub.s32 %s30, %s37
      %p383 = scmp.eq.s32.totalorder %s382, 0
      %s385 = sadd.s32 %s384, 1
      %s386 = scalar_select %p383, %s384, %s385
      %p389 = pneg %p383
      %p390 = scmp.eq.s32.totalorder %s30, 1
      %p391 = por %p389, %p390
      %p392 = scmp.ne.s32.totalorder %s384, %s387
      %p393 = scmp.eq.s32.totalorder %s30, 0
      %p394 = por %p392, %p393
      %p395 = scmp.ne.s32.totalorder %s384, %s387
      %p396 = scmp.eq.s32.totalorder %s35, 1
      %p397 = por %p395, %p396
      %p398 = scmp.ne.s32.totalorder %s387, %s388
      %p399 = scmp.eq.s32.totalorder %s35, 0
      %p400 = por %p398, %p399
      %p401 = scmp.ne.s32.totalorder %s387, %s388
      %p402 = scmp.eq.s32.totalorder %s36, 1
      %p403 = por %p401, %p402
      %p405 = scmp.ne.s32.totalorder %s388, %s404
      %p406 = scmp.eq.s32.totalorder %s36, 0
      %p407 = por %p405, %p406
      %s408 = ssub.s32 %s30, %s37
      %p409 = scmp.eq.s32.totalorder %s408, 0
      %s411 = sadd.s32 %s410, 1
      %s412 = scalar_select %p409, %s410, %s411
      %p415 = pneg %p409
      %p416 = scmp.eq.s32.totalorder %s30, 1
      %p417 = por %p415, %p416
      %p418 = scmp.ne.s32.totalorder %s410, %s413
      %p419 = scmp.eq.s32.totalorder %s30, 0
      %p420 = por %p418, %p419
      %p421 = scmp.ne.s32.totalorder %s410, %s413
      %p422 = scmp.eq.s32.totalorder %s35, 1
      %p423 = por %p421, %p422
      %p424 = scmp.ne.s32.totalorder %s413, %s414
      %p425 = scmp.eq.s32.totalorder %s35, 0
      %p426 = por %p424, %p425
      %p427 = scmp.ne.s32.totalorder %s413, %s414
      %p428 = scmp.eq.s32.totalorder %s36, 1
      %p429 = por %p427, %p428
      %p431 = scmp.ne.s32.totalorder %s414, %s430
      %p432 = scmp.eq.s32.totalorder %s36, 0
      %p433 = por %p431, %p432
      %s435 = sadd.s32 %s434, 1
      %p438 = scmp.eq.s32.totalorder %s30, 1
      %p439 = scmp.ne.s32.totalorder %s434, %s436
      %p440 = scmp.eq.s32.totalorder %s30, 0
      %p441 = por %p439, %p440
      %p442 = scmp.ne.s32.totalorder %s434, %s436
      %p443 = scmp.eq.s32.totalorder %s35, 1
      %p444 = por %p442, %p443
      %p445 = scmp.ne.s32.totalorder %s436, %s437
      %p446 = scmp.eq.s32.totalorder %s35, 0
      %p447 = por %p445, %p446
      %p448 = scmp.ne.s32.totalorder %s436, %s437
      %p449 = scmp.eq.s32.totalorder %s36, 1
      %p450 = por %p448, %p449
      %p452 = scmp.ne.s32.totalorder %s437, %s451
      %p453 = scmp.eq.s32.totalorder %s36, 0
      %p454 = por %p452, %p453
      %s456 = sadd.s32 %s455, 1
      %p459 = scmp.eq.s32.totalorder %s30, 1
      %p460 = scmp.ne.s32.totalorder %s455, %s457
      %p461 = scmp.eq.s32.totalorder %s30, 0
      %p462 = por %p460, %p461
      %p463 = scmp.ne.s32.totalorder %s455, %s457
      %p464 = scmp.eq.s32.totalorder %s35, 1
      %p465 = por %p463, %p464
      %p466 = scmp.ne.s32.totalorder %s457, %s458
      %p467 = scmp.eq.s32.totalorder %s35, 0
      %p468 = por %p466, %p467
      %p469 = scmp.ne.s32.totalorder %s457, %s458
      %p470 = scmp.eq.s32.totalorder %s36, 1
      %p471 = por %p469, %p470
      %p473 = scmp.ne.s32.totalorder %s458, %s472
      %p474 = scmp.eq.s32.totalorder %s36, 0
      %p475 = por %p473, %p474
      %s477 = sadd.s32 %s476, 1
      %p480 = scmp.eq.s32.totalorder %s30, 1
      %p481 = scmp.ne.s32.totalorder %s476, %s478
      %p482 = scmp.eq.s32.totalorder %s30, 0
      %p483 = por %p481, %p482
      %p484 = scmp.ne.s32.totalorder %s476, %s478
      %p485 = scmp.eq.s32.totalorder %s35, 1
      %p486 = por %p484, %p485
      %p487 = scmp.ne.s32.totalorder %s478, %s479
      %p488 = scmp.eq.s32.totalorder %s35, 0
      %p489 = por %p487, %p488
      %p490 = scmp.ne.s32.totalorder %s478, %s479
      %p491 = scmp.eq.s32.totalorder %s36, 1
      %p492 = por %p490, %p491
      %p494 = scmp.ne.s32.totalorder %s479, %s493
      %p495 = scmp.eq.s32.totalorder %s36, 0
      %p496 = por %p494, %p495
      %p497 = scmp.le.s32.totalorder 1, %s30
      %p498 = scmp.lt.s32.totalorder %s30, 3
      %p499 = pnand %p497, %p498
      %p500 = pneg %p499
      // Predicated region
      $region9: #{bert_for_token_classification.1} parent=5 // pred_check
        _
      $region10: #{bert_for_token_classification.1} parent=5 // pred_check_branch
        %502 = sbr.rel (%p499) target = $region12
      $region11: #{bert_for_token_classification.1} parent=5 // pred_region
        %s503 = ssub.s32 %s30, 1
        // Predicated region
        $region13: #{bert_for_token_classification.1} parent=11 // pred_check
          %p504 = pneg %p51
        $region14: #{bert_for_token_classification.1} parent=11 // pred_check_branch
          %506 = sbr.rel (%p504) target = $region16
        $region15: #{bert_for_token_classification.1} parent=11 // pred_region
          _
        $region16: #{bert_for_token_classification.1} parent=11 // pred_fallthru
          _
        // Predicated region
        $region17: #{bert_for_token_classification.1} parent=11 // pred_check
          %p507 = pneg %p72
        $region18: #{bert_for_token_classification.1} parent=11 // pred_check_branch
          %509 = sbr.rel (%p507) target = $region20
        $region19: #{bert_for_token_classification.1} parent=11 // pred_region
          _
        $region20: #{bert_for_token_classification.1} parent=11 // pred_fallthru
          _
        // Predicated region
        $region21: #{bert_for_token_classification.1} parent=11 // pred_check
          %p510 = pneg %p93
        $region22: #{bert_for_token_classification.1} parent=11 // pred_check_branch
          %512 = sbr.rel (%p510) target = $region24
        $region23: #{bert_for_token_classification.1} parent=11 // pred_region
          _
        $region24: #{bert_for_token_classification.1} parent=11 // pred_fallthru
          _
        // Predicated region
        $region25: #{bert_for_token_classification.1} parent=11 // pred_check
          %p513 = pneg %p114
        $region26: #{bert_for_token_classification.1} parent=11 // pred_check_branch
          %515 = sbr.rel (%p513) target = $region28
        $region27: #{bert_for_token_classification.1} parent=11 // pred_region
          _
        $region28: #{bert_for_token_classification.1} parent=11 // pred_fallthru
          _
        // Predicated region
        $region29: #{bert_for_token_classification.1} parent=11 // pred_check
          %p516 = pneg %p447
        $region30: #{bert_for_token_classification.1} parent=11 // pred_check_branch
          %518 = sbr.rel (%p516) target = $region32
        $region31: #{bert_for_token_classification.1} parent=11 // pred_region
          _
        $region32: #{bert_for_token_classification.1} parent=11 // pred_fallthru
          _
        // Predicated region
        $region33: #{bert_for_token_classification.1} parent=11 // pred_check
          %p519 = pneg %p468
        $region34: #{bert_for_token_classification.1} parent=11 // pred_check_branch
          %521 = sbr.rel (%p519) target = $region36
        $region35: #{bert_for_token_classification.1} parent=11 // pred_region
          _
        $region36: #{bert_for_token_classification.1} parent=11 // pred_fallthru
          _
      $region12: #{bert_for_token_classification.1} parent=5 // pred_fallthru
        _
      %p522 = scmp.lt.s32.totalorder %s30, 2
      // Predicated region
      $region37: #{bert_for_token_classification.1} parent=5 // pred_check
        %p523 = pneg %p522
      $region38: #{bert_for_token_classification.1} parent=5 // pred_check_branch
        %525 = sbr.rel (%p523) target = $region40
      $region39: #{bert_for_token_classification.1} parent=5 // pred_region
        // Predicated region
        $region41: #{bert_for_token_classification.1} parent=39 // pred_check
          %p526 = pneg %p134
        $region42: #{bert_for_token_classification.1} parent=39 // pred_check_branch
          %528 = sbr.rel (%p526) target = $region44
        $region43: #{bert_for_token_classification.1} parent=39 // pred_region
          %s529 = sand.u32 %s124, 1
          %s530 = scalar_lea.sflag [#allocation5], %s529
          %s531 = sand.u32 %s124, 1
          %s532 = smul.addr %s531, 192
          %s533 = scalar_lea.vmem [#allocation4], %s532
          %s535 = ssub.s32 3072, 3072
          %536 = vsyncadd %s530, %s535
          %s537 = smul.addr %s30, 48
          %s538 = smul.addr %s537, 64
          %s539 = scalar_lea.hbm %s4, %s538
          %s540 = sshll.u32 %s533, 4
          %s541 = int_to_ptr.vmem [resolvable:$true] %s540
          %546 = dma.hbm_to_vmem [thread:$0]  %s539, 3072, %s541, %s530, 192, 192, 12
        $region44: #{bert_for_token_classification.1} parent=39 // pred_fallthru
          _
        // Predicated region
        $region45: #{bert_for_token_classification.1} parent=39 // pred_check
          %p547 = pneg %p160
        $region46: #{bert_for_token_classification.1} parent=39 // pred_check_branch
          %549 = sbr.rel (%p547) target = $region48
        $region47: #{bert_for_token_classification.1} parent=39 // pred_region
          %p550 = scmp.lt.s32.totalorder %s30, 1
          %s551 = scalar_select %p550, %s30, 1
          %s552 = smul.addr %s551, 3
          %s553 = scalar_lea.vmem %s5, %s552
        $region48: #{bert_for_token_classification.1} parent=39 // pred_fallthru
          _
        // Predicated region
        $region49: #{bert_for_token_classification.1} parent=39 // pred_check
          %p554 = pneg %p186
        $region50: #{bert_for_token_classification.1} parent=39 // pred_check_branch
          %556 = sbr.rel (%p554) target = $region52
        $region51: #{bert_for_token_classification.1} parent=39 // pred_region
          %p557 = scmp.lt.s32.totalorder %s30, 1
          %s558 = scalar_select %p557, %s30, 1
          %s559 = smul.addr %s558, 16
          %s560 = smul.addr %s559, 4
          %s561 = scalar_lea.vmem %s6, %s560
        $region52: #{bert_for_token_classification.1} parent=39 // pred_fallthru
          _
        // Predicated region
        $region53: #{bert_for_token_classification.1} parent=39 // pred_check
          %p562 = pneg %p212
        $region54: #{bert_for_token_classification.1} parent=39 // pred_check_branch
          %564 = sbr.rel (%p562) target = $region56
        $region55: #{bert_for_token_classification.1} parent=39 // pred_region
          %p565 = scmp.lt.s32.totalorder %s30, 1
          %s566 = scalar_select %p565, %s30, 1
          %s567 = scalar_lea.vmem %s7, %s566
        $region56: #{bert_for_token_classification.1} parent=39 // pred_fallthru
          _
        // Predicated region
        $region57: #{bert_for_token_classification.1} parent=39 // pred_check
          %p568 = pneg %p238
        $region58: #{bert_for_token_classification.1} parent=39 // pred_check_branch
          %570 = sbr.rel (%p568) target = $region60
        $region59: #{bert_for_token_classification.1} parent=39 // pred_region
          %p571 = scmp.lt.s32.totalorder %s30, 1
          %s572 = scalar_select %p571, %s30, 1
          %s573 = scalar_lea.vmem %s8, %s572
        $region60: #{bert_for_token_classification.1} parent=39 // pred_fallthru
          _
        // Predicated region
        $region61: #{bert_for_token_classification.1} parent=39 // pred_check
          %p574 = pneg %p264
        $region62: #{bert_for_token_classification.1} parent=39 // pred_check_branch
          %576 = sbr.rel (%p574) target = $region64
        $region63: #{bert_for_token_classification.1} parent=39 // pred_region
          %p577 = scmp.lt.s32.totalorder %s30, 1
          %s578 = scalar_select %p577, %s30, 1
          %s579 = scalar_lea.vmem %s9, %s578
        $region64: #{bert_for_token_classification.1} parent=39 // pred_fallthru
          _
        // Predicated region
        $region65: #{bert_for_token_classification.1} parent=39 // pred_check
          %p580 = pneg %p290
        $region66: #{bert_for_token_classification.1} parent=39 // pred_check_branch
          %582 = sbr.rel (%p580) target = $region68
        $region67: #{bert_for_token_classification.1} parent=39 // pred_region
          %s583 = sand.u32 %s30, 1
          %s584 = scalar_lea.sflag [#allocation7], %s583
          %s585 = sand.u32 %s280, 1
          %s586 = smul.addr %s585, 256
          %s587 = scalar_lea.vmem [#allocation6], %s586
          %s589 = ssub.s32 4096, 4096
          %590 = vsyncadd %s584, %s589
          %s591 = smul.addr %s30, 64
          %s592 = smul.addr %s591, 64
          %s593 = scalar_lea.hbm %s10, %s592
          %s594 = sshll.u32 %s587, 4
          %s595 = int_to_ptr.vmem [resolvable:$true] %s594
          %600 = dma.hbm_to_vmem [thread:$0]  %s593, 4096, %s595, %s584, 256, 256, 16
        $region68: #{bert_for_token_classification.1} parent=39 // pred_fallthru
          _
        // Predicated region
        $region69: #{bert_for_token_classification.1} parent=39 // pred_check
          %p601 = pneg %p316
        $region70: #{bert_for_token_classification.1} parent=39 // pred_check_branch
          %603 = sbr.rel (%p601) target = $region72
        $region71: #{bert_for_token_classification.1} parent=39 // pred_region
          %p604 = scmp.lt.s32.totalorder %s30, 1
          %s605 = scalar_select %p604, %s30, 1
          %s606 = smul.addr %s605, 4
          %s607 = scalar_lea.vmem %s11, %s606
        $region72: #{bert_for_token_classification.1} parent=39 // pred_fallthru
          _
        // Predicated region
        $region73: #{bert_for_token_classification.1} parent=39 // pred_check
          %p608 = pneg %p342
        $region74: #{bert_for_token_classification.1} parent=39 // pred_check_branch
          %610 = sbr.rel (%p608) target = $region76
        $region75: #{bert_for_token_classification.1} parent=39 // pred_region
          %s611 = sand.u32 %s30, 1
          %s612 = scalar_lea.sflag [#allocation7], %s611
          %s613 = sand.u32 %s332, 1
          %s614 = smul.addr %s613, 256
          %s615 = scalar_lea.vmem [#allocation8], %s614
          %s617 = ssub.s32 4096, 4096
          %618 = vsyncadd %s612, %s617
          %s619 = smul.addr %s30, 64
          %s620 = smul.addr %s619, 64
          %s621 = scalar_lea.hbm %s12, %s620
          %s622 = sshll.u32 %s615, 4
          %s623 = int_to_ptr.vmem [resolvable:$true] %s622
          %628 = dma.hbm_to_vmem [thread:$0]  %s621, 4096, %s623, %s612, 64, 64, 4
        $region76: #{bert_for_token_classification.1} parent=39 // pred_fallthru
          _
        // Predicated region
        $region77: #{bert_for_token_classification.1} parent=39 // pred_check
          %p629 = pneg %p368
        $region78: #{bert_for_token_classification.1} parent=39 // pred_check_branch
          %631 = sbr.rel (%p629) target = $region80
        $region79: #{bert_for_token_classification.1} parent=39 // pred_region
          %p632 = scmp.lt.s32.totalorder %s30, 1
          %s633 = scalar_select %p632, %s30, 1
          %s634 = scalar_lea.vmem %s13, %s633
        $region80: #{bert_for_token_classification.1} parent=39 // pred_fallthru
          _
        // Predicated region
        $region81: #{bert_for_token_classification.1} parent=39 // pred_check
          %p635 = pneg %p394
        $region82: #{bert_for_token_classification.1} parent=39 // pred_check_branch
          %637 = sbr.rel (%p635) target = $region84
        $region83: #{bert_for_token_classification.1} parent=39 // pred_region
          %p638 = scmp.lt.s32.totalorder %s30, 1
          %s639 = scalar_select %p638, %s30, 1
          %s640 = scalar_lea.vmem %s14, %s639
        $region84: #{bert_for_token_classification.1} parent=39 // pred_fallthru
          _
        // Predicated region
        $region85: #{bert_for_token_classification.1} parent=39 // pred_check
          %p641 = pneg %p420
        $region86: #{bert_for_token_classification.1} parent=39 // pred_check_branch
          %643 = sbr.rel (%p641) target = $region88
        $region87: #{bert_for_token_classification.1} parent=39 // pred_region
          %p644 = scmp.lt.s32.totalorder %s30, 1
          %s645 = scalar_select %p644, %s30, 1
          %s646 = scalar_lea.vmem %s15, %s645
        $region88: #{bert_for_token_classification.1} parent=39 // pred_fallthru
          _
      $region40: #{bert_for_token_classification.1} parent=5 // pred_fallthru
        _
      %p647 = scmp.le.s32.totalorder 1, %s30
      %p648 = scmp.lt.s32.totalorder %s30, 3
      %p649 = pnand %p647, %p648
      %p650 = pneg %p649
      // Predicated region
      $region89: #{bert_for_token_classification.1} parent=5 // pred_check
        _
      $region90: #{bert_for_token_classification.1} parent=5 // pred_check_branch
        %652 = sbr.rel (%p649) target = $region92
      $region91: #{bert_for_token_classification.1} parent=5 // pred_region
        %s653 = ssub.s32 %s30, 1
        %s654 = sand.u32 %s127, 1
        %s655 = scalar_lea.sflag [#allocation5], %s654
        %s656 = sand.u32 %s127, 1
        %s657 = smul.addr %s656, 192
        %s658 = scalar_lea.vmem [#allocation4], %s657
        // Predicated region
        $region93: #{bert_for_token_classification.1} parent=91 // pred_check
          %p659 = pneg %p140
        $region94: #{bert_for_token_classification.1} parent=91 // pred_check_branch
          %661 = sbr.rel (%p659) target = $region96
        $region95: #{bert_for_token_classification.1} parent=91 // pred_region
          %662 = dma.done %s655, 3072
        $region96: #{bert_for_token_classification.1} parent=91 // pred_fallthru
          _
        %s663 = sand.u32 %s35, 1
        %s664 = scalar_lea.sflag [#allocation7], %s663
        %s665 = sand.u32 %s283, 1
        %s666 = smul.addr %s665, 256
        %s667 = scalar_lea.vmem [#allocation6], %s666
        // Predicated region
        $region97: #{bert_for_token_classification.1} parent=91 // pred_check
          %p668 = pneg %p296
        $region98: #{bert_for_token_classification.1} parent=91 // pred_check_branch
          %670 = sbr.rel (%p668) target = $region100
        $region99: #{bert_for_token_classification.1} parent=91 // pred_region
          %671 = dma.done %s664, 4096
        $region100: #{bert_for_token_classification.1} parent=91 // pred_fallthru
          _
        %s672 = sand.u32 %s35, 1
        %s673 = scalar_lea.sflag [#allocation7], %s672
        %s674 = sand.u32 %s335, 1
        %s675 = smul.addr %s674, 256
        %s676 = scalar_lea.vmem [#allocation8], %s675
        // Predicated region
        $region101: #{bert_for_token_classification.1} parent=91 // pred_check
          %p677 = pneg %p348
        $region102: #{bert_for_token_classification.1} parent=91 // pred_check_branch
          %679 = sbr.rel (%p677) target = $region104
        $region103: #{bert_for_token_classification.1} parent=91 // pred_region
          %680 = dma.done %s673, 4096
        $region104: #{bert_for_token_classification.1} parent=91 // pred_fallthru
          _
        %p681 = pneg %p51
        %p682 = pneg %p48
        %p683 = pneg %p72
        %p684 = pneg %p69
        %p685 = pneg %p93
        %p686 = pneg %p90
        %p687 = pneg %p114
        %p688 = pneg %p111
        %s689 = sand.u32 %s127, 1
        %s690 = scalar_lea.sflag [#allocation5], %s689
        %s691 = sand.u32 %s127, 1
        %s692 = smul.addr %s691, 192
        %s693 = scalar_lea.vmem [#allocation4], %s692
        %p694 = pneg %p140
        %p695 = pneg %p137
        %p696 = scmp.lt.s32.totalorder %s35, 1
        %s697 = scalar_select %p696, %s35, 1
        %s698 = smul.addr %s697, 3
        %s699 = scalar_lea.vmem %s5, %s698
        %p700 = pneg %p166
        %p701 = pneg %p163
        %p702 = scmp.lt.s32.totalorder %s35, 1
        %s703 = scalar_select %p702, %s35, 1
        %s704 = smul.addr %s703, 16
        %s705 = smul.addr %s704, 4
        %s706 = scalar_lea.vmem %s6, %s705
        %p707 = pneg %p192
        %p708 = pneg %p189
        %p709 = scmp.lt.s32.totalorder %s35, 1
        %s710 = scalar_select %p709, %s35, 1
        %s711 = scalar_lea.vmem %s7, %s710
        %p712 = pneg %p218
        %p713 = pneg %p215
        %p714 = scmp.lt.s32.totalorder %s35, 1
        %s715 = scalar_select %p714, %s35, 1
        %s716 = scalar_lea.vmem %s8, %s715
        %p717 = pneg %p244
        %p718 = pneg %p241
        %p719 = scmp.lt.s32.totalorder %s35, 1
        %s720 = scalar_select %p719, %s35, 1
        %s721 = scalar_lea.vmem %s9, %s720
        %p722 = pneg %p270
        %p723 = pneg %p267
        %s724 = sand.u32 %s35, 1
        %s725 = scalar_lea.sflag [#allocation7], %s724
        %s726 = sand.u32 %s283, 1
        %s727 = smul.addr %s726, 256
        %s728 = scalar_lea.vmem [#allocation6], %s727
        %p729 = pneg %p296
        %p730 = pneg %p293
        %p731 = scmp.lt.s32.totalorder %s35, 1
        %s732 = scalar_select %p731, %s35, 1
        %s733 = smul.addr %s732, 4
        %s734 = scalar_lea.vmem %s11, %s733
        %p735 = pneg %p322
        %p736 = pneg %p319
        %s737 = sand.u32 %s35, 1
        %s738 = scalar_lea.sflag [#allocation7], %s737
        %s739 = sand.u32 %s335, 1
        %s740 = smul.addr %s739, 256
        %s741 = scalar_lea.vmem [#allocation8], %s740
        %p742 = pneg %p348
        %p743 = pneg %p345
        %p744 = scmp.lt.s32.totalorder %s35, 1
        %s745 = scalar_select %p744, %s35, 1
        %s746 = scalar_lea.vmem %s13, %s745
        %p747 = pneg %p374
        %p748 = pneg %p371
        %p749 = scmp.lt.s32.totalorder %s35, 1
        %s750 = scalar_select %p749, %s35, 1
        %s751 = scalar_lea.vmem %s14, %s750
        %p752 = pneg %p400
        %p753 = pneg %p397
        %p754 = scmp.lt.s32.totalorder %s35, 1
        %s755 = scalar_select %p754, %s35, 1
        %s756 = scalar_lea.vmem %s15, %s755
        %p757 = pneg %p426
        %p758 = pneg %p423
        %p759 = pneg %p447
        %p760 = pneg %p444
        %p761 = pneg %p468
        %p762 = pneg %p465
        %p763 = pneg %p489
        %p764 = pneg %p486
        %p765 = scmp.lt.s32.totalorder %s35, 1
        %s766 = scalar_select %p765, %s35, 1
        %s767 = smul.addr %s766, 3
        %s768 = scalar_lea.vmem %s5, %s767
        %p769 = scmp.lt.s32.totalorder %s35, 1
        %s770 = scalar_select %p769, %s35, 1
        %s771 = smul.addr %s770, 16
        %s772 = smul.addr %s771, 4
        %s773 = scalar_lea.vmem %s6, %s772
        %p774 = scmp.lt.s32.totalorder %s35, 1
        %s775 = scalar_select %p774, %s35, 1
        %s776 = scalar_lea.vmem %s7, %s775
        %p777 = scmp.lt.s32.totalorder %s35, 1
        %s778 = scalar_select %p777, %s35, 1
        %s779 = scalar_lea.vmem %s8, %s778
        %p780 = scmp.lt.s32.totalorder %s35, 1
        %s781 = scalar_select %p780, %s35, 1
        %s782 = scalar_lea.vmem %s9, %s781
        %p783 = scmp.lt.s32.totalorder %s35, 1
        %s784 = scalar_select %p783, %s35, 1
        %s785 = smul.addr %s784, 4
        %s786 = scalar_lea.vmem %s11, %s785
        %p787 = scmp.lt.s32.totalorder %s35, 1
        %s788 = scalar_select %p787, %s35, 1
        %s789 = scalar_lea.vmem %s13, %s788
        %p790 = scmp.lt.s32.totalorder %s35, 1
        %s791 = scalar_select %p790, %s35, 1
        %s792 = scalar_lea.vmem %s14, %s791
        %p793 = scmp.lt.s32.totalorder %s35, 1
        %s794 = scalar_select %p793, %s35, 1
        %s795 = scalar_lea.vmem %s15, %s794
        %p797 = scmp.eq.s32.totalorder %s35, 0
        // Predicated region
        $region105: #{bert_for_token_classification.1} parent=91 // pred_check
          %p798 = pneg %p797
        $region106: #{bert_for_token_classification.1} parent=91 // pred_check_branch
          %800 = sbr.rel (%p798) target = $region108
        $region107: #{bert_for_token_classification.1} parent=91 // pred_region
          %v801 = vld [vmem:[%s0] sm:$0xff]
          %v802 = vld [vmem:[%s0 + $0x8] sm:$0xff]
          %v803 = vld [vmem:[%s2] sm:$0x1]
          %v804 = vld [vmem:[%s3] sm:$0x1]
          %805 = vadd.xlane.f32.xlu0 %v801
          %v806 = vpop.xlane.xlu0 %805
          %807 = vadd.xlane.f32.xlu0 %v802
          %v808 = vpop.xlane.xlu0 %807
          %v809 = vrcp.pop 128.0
          %v810 = vmul.f32 %v806, %v809
          %v811 = vmul.f32 %v808, %v809
          %v812 = vsub.f32 %v801, %v810
          %v813 = vsub.f32 %v802, %v811
          %v814 = vmul.f32 %v812, %v812
          %v815 = vmul.f32 %v813, %v813
          %816 = vadd.xlane.f32.xlu0 %v814
          %v817 = vpop.xlane.xlu0 %816
          %818 = vadd.xlane.f32.xlu0 %v815
          %v819 = vpop.xlane.xlu0 %818
          %v820 = vmul.f32 %v817, %v809
          %v821 = vmul.f32 %v819, %v809
          %v822 = vadd.f32 %v820, 1e-12
          %v823 = vadd.f32 %v821, 1e-12
          %v824 = vrsqrt.pop %v822
          %v825 = vrsqrt.pop %v823
          %v826 = vmul.f32 %v812, %v824
          %v827 = vmul.f32 %v813, %v825
          %v829 = vlaneseq
          %v830 = vshrl.u32 %v829, 7
          %v831 = vsub.s32 0, %v830
          %v832 = vrot.slane %v803, %v831
          %v834 = vmul.f32 %v826, %v832
          %v835 = vmul.f32 %v827, %v832
          %v837 = vlaneseq
          %v838 = vshrl.u32 %v837, 7
          %v839 = vsub.s32 0, %v838
          %v840 = vrot.slane %v804, %v839
          %v842 = vadd.f32 %v834, %v840
          %v843 = vadd.f32 %v835, %v840
          %844 = vst [vmem:[#allocation2] sm:$0xff] %v842
          %845 = vst [vmem:[#allocation2 + $0x8] sm:$0xff] %v843
        $region108: #{bert_for_token_classification.1} parent=91 // pred_fallthru
          _
        %v846 = vld [vmem:[#allocation2] sm:$0xff]
        %v847 = vld [vmem:[#allocation2 + $0x8] sm:$0xff]
        %v848 = vld [vmem:[%s1] sm:$0xff]
        %v849 = vld [vmem:[%s1 + $0x8] sm:$0xff]
        %v850 = vpack.c.bf16 %v847, %v846
        %v851 = vld [vmem:[%s658] sm:$0xff]
        %v852 = vld [vmem:[%s658 + $0x8] sm:$0xf]
        %v853 = vld [vmem:[%s658 + $0xc] sm:$0xff]
        %v854 = vld [vmem:[%s658 + $0x14] sm:$0xf]
        %v855 = vld [vmem:[%s658 + $0x18] sm:$0xff]
        %v856 = vld [vmem:[%s658 + $0x20] sm:$0xf]
        %v857 = vld [vmem:[%s658 + $0x24] sm:$0xff]
        %v858 = vld [vmem:[%s658 + $0x2c] sm:$0xf]
        %v859 = vld [vmem:[%s658 + $0x30] sm:$0xff]
        %v860 = vld [vmem:[%s658 + $0x38] sm:$0xf]
        %v861 = vld [vmem:[%s658 + $0x3c] sm:$0xff]
        %v862 = vld [vmem:[%s658 + $0x44] sm:$0xf]
        %v863 = vld [vmem:[%s658 + $0x48] sm:$0xff]
        %v864 = vld [vmem:[%s658 + $0x50] sm:$0xf]
        %v865 = vld [vmem:[%s658 + $0x54] sm:$0xff]
        %v866 = vld [vmem:[%s658 + $0x5c] sm:$0xf]
        %v867 = vld [vmem:[%s658 + $0x60] sm:$0xff]
        %v868 = vld [vmem:[%s658 + $0x68] sm:$0xf]
        %v869 = vld [vmem:[%s658 + $0x6c] sm:$0xff]
        %v870 = vld [vmem:[%s658 + $0x74] sm:$0xf]
        %v871 = vld [vmem:[%s658 + $0x78] sm:$0xff]
        %v872 = vld [vmem:[%s658 + $0x80] sm:$0xf]
        %v873 = vld [vmem:[%s658 + $0x84] sm:$0xff]
        %v874 = vld [vmem:[%s658 + $0x8c] sm:$0xf]
        %v875 = vld [vmem:[%s658 + $0x90] sm:$0xff]
        %v876 = vld [vmem:[%s658 + $0x98] sm:$0xf]
        %v877 = vld [vmem:[%s658 + $0x9c] sm:$0xff]
        %v878 = vld [vmem:[%s658 + $0xa4] sm:$0xf]
        %v879 = vld [vmem:[%s658 + $0xa8] sm:$0xff]
        %v880 = vld [vmem:[%s658 + $0xb0] sm:$0xf]
        %v881 = vld [vmem:[%s658 + $0xb4] sm:$0xff]
        %v882 = vld [vmem:[%s658 + $0xbc] sm:$0xf]
        %v883 = vld [vmem:[%s768] sm:$0x7]
        %v885 = vlaneseq
        %v886 = vshrl.u32 %v885, 7
        %v887 = vsub.s32 0, %v886
        %v888 = vrot.slane %v883, %v887
        %v889 = vlaneseq
        %v890 = vshrl.u32 %v889, 7
        %v891 = vsub.s32 1, %v890
        %v892 = vrot.slane %v883, %v891
        %v893 = vlaneseq
        %v894 = vshrl.u32 %v893, 7
        %v895 = vsub.s32 2, %v894
        %v896 = vrot.slane %v883, %v895
        %v932 = vunpack.c.l.b16 %v851
        %v933 = vunpack.c.h.b16 %v851
        %v934 = vunpack.c.l.b16 %v852
        %v935 = vunpack.c.l.b16 %v853
        %v936 = vunpack.c.h.b16 %v853
        %v937 = vunpack.c.l.b16 %v854
        %v938 = vunpack.c.l.b16 %v855
        %v939 = vunpack.c.h.b16 %v855
        %v940 = vunpack.c.l.b16 %v856
        %v941 = vunpack.c.l.b16 %v857
        %v942 = vunpack.c.h.b16 %v857
        %v943 = vunpack.c.l.b16 %v858
        %v944 = vunpack.c.l.b16 %v859
        %v945 = vunpack.c.h.b16 %v859
        %v946 = vunpack.c.l.b16 %v860
        %v947 = vunpack.c.l.b16 %v861
        %v948 = vunpack.c.h.b16 %v861
        %v949 = vunpack.c.l.b16 %v862
        %v950 = vunpack.c.l.b16 %v863
        %v951 = vunpack.c.h.b16 %v863
        %v952 = vunpack.c.l.b16 %v864
        %v953 = vunpack.c.l.b16 %v865
        %v954 = vunpack.c.h.b16 %v865
        %v955 = vunpack.c.l.b16 %v866
        %v956 = vunpack.c.l.b16 %v867
        %v957 = vunpack.c.h.b16 %v867
        %v958 = vunpack.c.l.b16 %v868
        %v959 = vunpack.c.l.b16 %v869
        %v960 = vunpack.c.h.b16 %v869
        %v961 = vunpack.c.l.b16 %v870
        %v962 = vunpack.c.l.b16 %v871
        %v963 = vunpack.c.h.b16 %v871
        %v964 = vunpack.c.l.b16 %v872
        %v965 = vunpack.c.l.b16 %v873
        %v966 = vunpack.c.h.b16 %v873
        %v967 = vunpack.c.l.b16 %v874
        %v968 = vunpack.c.l.b16 %v875
        %v969 = vunpack.c.h.b16 %v875
        %v970 = vunpack.c.l.b16 %v876
        %v971 = vunpack.c.l.b16 %v877
        %v972 = vunpack.c.h.b16 %v877
        %v973 = vunpack.c.l.b16 %v878
        %v974 = vunpack.c.l.b16 %v879
        %v975 = vunpack.c.h.b16 %v879
        %v976 = vunpack.c.l.b16 %v880
        %v977 = vunpack.c.l.b16 %v881
        %v978 = vunpack.c.h.b16 %v881
        %v979 = vunpack.c.l.b16 %v882
        %v980 = vpack.c.b16 %v935, %v932
        %v981 = vpack.c.b16 %v936, %v933
        %v982 = vpack.c.b16 %v937, %v934
        %v983 = vpack.c.b16 %v941, %v938
        %v984 = vpack.c.b16 %v942, %v939
        %v985 = vpack.c.b16 %v943, %v940
        %v986 = vpack.c.b16 %v947, %v944
        %v987 = vpack.c.b16 %v948, %v945
        %v988 = vpack.c.b16 %v949, %v946
        %v989 = vpack.c.b16 %v953, %v950
        %v990 = vpack.c.b16 %v954, %v951
        %v991 = vpack.c.b16 %v955, %v952
        %v992 = vpack.c.b16 %v959, %v956
        %v993 = vpack.c.b16 %v960, %v957
        %v994 = vpack.c.b16 %v961, %v958
        %v995 = vpack.c.b16 %v965, %v962
        %v996 = vpack.c.b16 %v966, %v963
        %v997 = vpack.c.b16 %v967, %v964
        %v998 = vpack.c.b16 %v971, %v968
        %v999 = vpack.c.b16 %v972, %v969
        %v1000 = vpack.c.b16 %v973, %v970
        %v1001 = vpack.c.b16 %v977, %v974
        %v1002 = vpack.c.b16 %v978, %v975
        %v1003 = vpack.c.b16 %v979, %v976
        %1028 = vmatprep.subr.bf16.mxu0 %v1002
        %1029 = vmatpush1.bf16.msra.mxu0 %v1001
        %1030 = vmatprep.subr.bf16.mxu0 %v999
        %1031 = vmatpush1.bf16.msra.mxu0 %v998
        %1032 = vmatprep.subr.bf16.mxu0 %v996
        %1033 = vmatpush1.bf16.msra.mxu0 %v995
        %1034 = vmatprep.subr.bf16.mxu0 %v993
        %1035 = vmatpush1.bf16.msra.mxu0 %v992
        %1036 = vmatprep.subr.bf16.mxu0 %v990
        %1037 = vmatpush1.bf16.msra.mxu0 %v989
        %1038 = vmatprep.subr.bf16.mxu0 %v987
        %1039 = vmatpush1.bf16.msra.mxu0 %v986
        %1040 = vmatprep.subr.bf16.mxu0 %v984
        %1041 = vmatpush1.bf16.msra.mxu0 %v983
        %1042 = vmatprep.subr.bf16.mxu0 %v981
        %1043 = vmatpush1.bf16.msra.mxu0 %v980
        %1044 = vmatprep.subr.bf16.mxu0 0
        %1045 = vmatpush2.bf16.msra.mxu0 0
        %1046 = vmatprep.subr.bf16.mxu0 0
        %1047 = vmatpush2.bf16.msra.mxu0 0
        %1048 = vmatprep.subr.bf16.mxu0 0
        %1049 = vmatpush2.bf16.msra.mxu0 0
        %1050 = vmatprep.subr.bf16.mxu0 0
        %1051 = vmatpush2.bf16.msra.mxu0 0
        %1052 = vmatprep.subr.bf16.mxu0 0
        %1053 = vmatpush2.bf16.msra.mxu0 0
        %1054 = vmatprep.subr.bf16.mxu0 0
        %1055 = vmatpush2.bf16.msra.mxu0 0
        %1056 = vmatprep.subr.bf16.mxu0 0
        %1057 = vmatpush2.bf16.msra.mxu0 0
        %1058 = vmatprep.subr.bf16.mxu0 0
        %1059 = vmatpush2.bf16.msra.mxu0 0
        %1060 = vmatprep.mubr.bf16.mxu0 0
        %1061 = vmatmul.mubr.bf16.gmra.mxu0 %v850
        %v1062 = vpop.f32.mrf.mxu0
        %v1063 = vadd.f32 %v888, %v1062
        %v1064 = vpop.f32.mrf.mxu0
        %v1065 = vadd.f32 %v892, %v1064
        %v1066 = vpop.f32.mrf.mxu0
        %v1067 = vadd.f32 %v888, %v1066
        %v1068 = vpop.f32.mrf.mxu0
        %v1069 = vadd.f32 %v892, %v1068
        %1070 = vdwg.mxu0
        %1071 = vmatprep.subr.bf16.mxu0 0
        %1072 = vmatpush1.bf16.msra.mxu0 %v1003
        %1073 = vmatprep.subr.bf16.mxu0 0
        %1074 = vmatpush1.bf16.msra.mxu0 %v1000
        %1075 = vmatprep.subr.bf16.mxu0 0
        %1076 = vmatpush1.bf16.msra.mxu0 %v997
        %1077 = vmatprep.subr.bf16.mxu0 0
        %1078 = vmatpush1.bf16.msra.mxu0 %v994
        %1079 = vmatprep.subr.bf16.mxu0 0
        %1080 = vmatpush1.bf16.msra.mxu0 %v991
        %1081 = vmatprep.subr.bf16.mxu0 0
        %1082 = vmatpush1.bf16.msra.mxu0 %v988
        %1083 = vmatprep.subr.bf16.mxu0 0
        %1084 = vmatpush1.bf16.msra.mxu0 %v985
        %1085 = vmatprep.subr.bf16.mxu0 0
        %1086 = vmatpush1.bf16.msra.mxu0 %v982
        %1087 = vmatprep.subr.bf16.mxu0 0
        %1088 = vmatpush2.bf16.msra.mxu0 0
        %1089 = vmatprep.subr.bf16.mxu0 0
        %1090 = vmatpush2.bf16.msra.mxu0 0
        %1091 = vmatprep.subr.bf16.mxu0 0
        %1092 = vmatpush2.bf16.msra.mxu0 0
        %1093 = vmatprep.subr.bf16.mxu0 0
        %1094 = vmatpush2.bf16.msra.mxu0 0
        %1095 = vmatprep.subr.bf16.mxu0 0
        %1096 = vmatpush2.bf16.msra.mxu0 0
        %1097 = vmatprep.subr.bf16.mxu0 0
        %1098 = vmatpush2.bf16.msra.mxu0 0
        %1099 = vmatprep.subr.bf16.mxu0 0
        %1100 = vmatpush2.bf16.msra.mxu0 0
        %1101 = vmatprep.subr.bf16.mxu0 0
        %1102 = vmatpush2.bf16.msra.mxu0 0
        %1103 = vmatprep.mubr.bf16.mxu0 0
        %1104 = vmatmul.mubr.bf16.gmra.mxu0 %v850
        %v1105 = vpop.f32.mrf.mxu0
        %v1106 = vadd.f32 %v896, %v1105
        %v1107 = vpop.f32.mrf.mxu0
        %v1108 = vpop.f32.mrf.mxu0
        %v1109 = vadd.f32 %v896, %v1108
        %v1110 = vpop.f32.mrf.mxu0
        %1111 = vdwg.mxu0
        %v1112 = vpack.c.bf16 %v1067, %v1063
        %v1113 = vpack.c.bf16 %v1069, %v1065
        %vm1114 = vcmask 261120
        %v1116 = vsel %vm1114, %v1112, 0
        %v1119 = vsel %vm1114, %v1113, 0
        %1121 = vmatprep.subr.bf16.mxu0 0
        %1122 = vmatpush1.bf16.xpose.msra.mxu0 0
        %1123 = vmatprep.subr.bf16.mxu0 0
        %1124 = vmatpush1.bf16.xpose.msra.mxu0 0
        %1125 = vmatprep.subr.bf16.mxu0 0
        %1126 = vmatpush1.bf16.xpose.msra.mxu0 0
        %1127 = vmatprep.subr.bf16.mxu0 0
        %1128 = vmatpush1.bf16.xpose.msra.mxu0 0
        %1129 = vmatprep.subr.bf16.mxu0 0
        %1130 = vmatpush1.bf16.xpose.msra.mxu0 0
        %1131 = vmatprep.subr.bf16.mxu0 0
        %1132 = vmatpush1.bf16.xpose.msra.mxu0 0
        %1133 = vmatprep.subr.bf16.mxu0 0
        %1134 = vmatpush1.bf16.xpose.msra.mxu0 0
        %1135 = vmatprep.subr.bf16.mxu0 0
        %1136 = vmatpush1.bf16.xpose.msra.mxu0 %v1119
        %1137 = vmatprep.subr.bf16.mxu0 0
        %1138 = vmatpush2.bf16.xpose.msra.mxu0 0
        %1139 = vmatprep.subr.bf16.mxu0 0
        %1140 = vmatpush2.bf16.xpose.msra.mxu0 0
        %1141 = vmatprep.subr.bf16.mxu0 0
        %1142 = vmatpush2.bf16.xpose.msra.mxu0 0
        %1143 = vmatprep.subr.bf16.mxu0 0
        %1144 = vmatpush2.bf16.xpose.msra.mxu0 0
        %1145 = vmatprep.subr.bf16.mxu0 0
        %1146 = vmatpush2.bf16.xpose.msra.mxu0 0
        %1147 = vmatprep.subr.bf16.mxu0 0
        %1148 = vmatpush2.bf16.xpose.msra.mxu0 0
        %1149 = vmatprep.subr.bf16.mxu0 0
        %1150 = vmatpush2.bf16.xpose.msra.mxu0 0
        %1151 = vmatprep.subr.bf16.mxu0 0
        %1152 = vmatpush2.bf16.xpose.msra.mxu0 0
        %1153 = vmatprep.mubr.bf16.mxu0 0
        %1154 = vmatmul.mubr.bf16.gmra.mxu0 %v1116
        %v1155 = vpop.f32.mrf.mxu0
        %v1156 = vadd.f32 0.0, %v1155
        %v1157 = vpop.f32.mrf.mxu0
        %v1158 = vpop.f32.mrf.mxu0
        %v1159 = vadd.f32 0.0, %v1158
        %v1160 = vpop.f32.mrf.mxu0
        %1161 = vdwg.mxu0
        %v1162 = vmul.f32 %v1156, 0.17677669
        %v1163 = vmul.f32 %v1159, 0.17677669
        %v1164 = vadd.f32 %v1162, %v848
        %v1165 = vadd.f32 %v1163, %v849
        %vm1166 = vcmask 130048
        %v1167 = vsel %vm1166, %v1164, -inf
        %1168 = vmax.xlane.f32.xlu0 %v1167
        %v1169 = vpop.xlane.xlu0 %1168
        %v1170 = vsel %vm1166, %v1165, -inf
        %1171 = vmax.xlane.f32.xlu0 %v1170
        %v1172 = vpop.xlane.xlu0 %1171
        %v1173 = vsub.f32 %v1164, %v1169
        %v1174 = vsub.f32 %v1165, %v1172
        %v1175 = vmul.f32 %v1173, 1.442695
        %v1176 = vpow.pop %v1175
        %v1177 = vmul.f32 %v1174, 1.442695
        %v1178 = vpow.pop %v1177
        %v1179 = vsel %vm1166, %v1176, 0.0
        %1180 = vadd.xlane.f32.xlu0 %v1179
        %v1181 = vpop.xlane.xlu0 %1180
        %v1182 = vsel %vm1166, %v1178, 0.0
        %1183 = vadd.xlane.f32.xlu0 %v1182
        %v1184 = vpop.xlane.xlu0 %1183
        %v1185 = vrcp.pop %v1181
        %v1186 = vrcp.pop %v1184
        %v1187 = vmul.f32 %v1176, %v1185
        %v1188 = vmul.f32 %v1178, %v1186
        %v1189 = vpack.c.bf16 %v1188, %v1187
        %v1190 = vpack.c.bf16 %v1109, %v1106
        %v1192 = vsel %vm1166, %v1189, 0
        %1194 = vmatprep.subr.bf16.mxu0 0
        %1195 = vmatpush1.bf16.msra.mxu0 0
        %1196 = vmatprep.subr.bf16.mxu0 0
        %1197 = vmatpush1.bf16.msra.mxu0 0
        %1198 = vmatprep.subr.bf16.mxu0 0
        %1199 = vmatpush1.bf16.msra.mxu0 0
        %1200 = vmatprep.subr.bf16.mxu0 0
        %1201 = vmatpush1.bf16.msra.mxu0 0
        %1202 = vmatprep.subr.bf16.mxu0 0
        %1203 = vmatpush1.bf16.msra.mxu0 0
        %1204 = vmatprep.subr.bf16.mxu0 0
        %1205 = vmatpush1.bf16.msra.mxu0 0
        %1206 = vmatprep.subr.bf16.mxu0 0
        %1207 = vmatpush1.bf16.msra.mxu0 0
        %1208 = vmatprep.subr.bf16.mxu0 0
        %1209 = vmatpush1.bf16.msra.mxu0 %v1190
        %1210 = vmatprep.subr.bf16.mxu0 0
        %1211 = vmatpush2.bf16.msra.mxu0 0
        %1212 = vmatprep.subr.bf16.mxu0 0
        %1213 = vmatpush2.bf16.msra.mxu0 0
        %1214 = vmatprep.subr.bf16.mxu0 0
        %1215 = vmatpush2.bf16.msra.mxu0 0
        %1216 = vmatprep.subr.bf16.mxu0 0
        %1217 = vmatpush2.bf16.msra.mxu0 0
        %1218 = vmatprep.subr.bf16.mxu0 0
        %1219 = vmatpush2.bf16.msra.mxu0 0
        %1220 = vmatprep.subr.bf16.mxu0 0
        %1221 = vmatpush2.bf16.msra.mxu0 0
        %1222 = vmatprep.subr.bf16.mxu0 0
        %1223 = vmatpush2.bf16.msra.mxu0 0
        %1224 = vmatprep.subr.bf16.mxu0 0
        %1225 = vmatpush2.bf16.msra.mxu0 0
        %1226 = vmatprep.mubr.bf16.mxu0 0
        %1227 = vmatmul.mubr.bf16.gmra.mxu0 %v1192
        %v1228 = vpop.f32.mrf.mxu0
        %v1229 = vadd.f32 0.0, %v1228
        %v1230 = vpop.f32.mrf.mxu0
        %v1231 = vpop.f32.mrf.mxu0
        %v1232 = vadd.f32 0.0, %v1231
        %v1233 = vpop.f32.mrf.mxu0
        %1234 = vdwg.mxu0
        %1235 = vst.msk [vmem:[#allocation3] sm:$0xff] %vm1114, %v1229
        %1236 = vst.msk [vmem:[#allocation3 + $0x8] sm:$0xff] %vm1114, %v1232
        %1238 = vrot.lane.b32.xlu0 %v1112, 96
        %v1239 = vpop.permute.xlu0 %1238
        %1241 = vrot.lane.b32.xlu0 %v1113, 96
        %v1242 = vpop.permute.xlu0 %1241
        %v1244 = vsel %vm1114, %v1239, 0
        %v1247 = vsel %vm1114, %v1242, 0
        %1249 = vmatprep.subr.bf16.mxu0 0
        %1250 = vmatpush1.bf16.xpose.msra.mxu0 0
        %1251 = vmatprep.subr.bf16.mxu0 0
        %1252 = vmatpush1.bf16.xpose.msra.mxu0 0
        %1253 = vmatprep.subr.bf16.mxu0 0
        %1254 = vmatpush1.bf16.xpose.msra.mxu0 0
        %1255 = vmatprep.subr.bf16.mxu0 0
        %1256 = vmatpush1.bf16.xpose.msra.mxu0 0
        %1257 = vmatprep.subr.bf16.mxu0 0
        %1258 = vmatpush1.bf16.xpose.msra.mxu0 0
        %1259 = vmatprep.subr.bf16.mxu0 0
        %1260 = vmatpush1.bf16.xpose.msra.mxu0 0
        %1261 = vmatprep.subr.bf16.mxu0 0
        %1262 = vmatpush1.bf16.xpose.msra.mxu0 0
        %1263 = vmatprep.subr.bf16.mxu0 0
        %1264 = vmatpush1.bf16.xpose.msra.mxu0 %v1247
        %1265 = vmatprep.subr.bf16.mxu0 0
        %1266 = vmatpush2.bf16.xpose.msra.mxu0 0
        %1267 = vmatprep.subr.bf16.mxu0 0
        %1268 = vmatpush2.bf16.xpose.msra.mxu0 0
        %1269 = vmatprep.subr.bf16.mxu0 0
        %1270 = vmatpush2.bf16.xpose.msra.mxu0 0
        %1271 = vmatprep.subr.bf16.mxu0 0
        %1272 = vmatpush2.bf16.xpose.msra.mxu0 0
        %1273 = vmatprep.subr.bf16.mxu0 0
        %1274 = vmatpush2.bf16.xpose.msra.mxu0 0
        %1275 = vmatprep.subr.bf16.mxu0 0
        %1276 = vmatpush2.bf16.xpose.msra.mxu0 0
        %1277 = vmatprep.subr.bf16.mxu0 0
        %1278 = vmatpush2.bf16.xpose.msra.mxu0 0
        %1279 = vmatprep.subr.bf16.mxu0 0
        %1280 = vmatpush2.bf16.xpose.msra.mxu0 0
        %1281 = vmatprep.mubr.bf16.mxu0 0
        %1282 = vmatmul.mubr.bf16.gmra.mxu0 %v1244
        %v1283 = vpop.f32.mrf.mxu0
        %v1284 = vadd.f32 0.0, %v1283
        %v1285 = vpop.f32.mrf.mxu0
        %v1286 = vpop.f32.mrf.mxu0
        %v1287 = vadd.f32 0.0, %v1286
        %v1288 = vpop.f32.mrf.mxu0
        %1289 = vdwg.mxu0
        %v1290 = vmul.f32 %v1284, 0.17677669
        %v1291 = vmul.f32 %v1287, 0.17677669
        %v1292 = vadd.f32 %v1290, %v848
        %v1293 = vadd.f32 %v1291, %v849
        %v1294 = vsel %vm1166, %v1292, -inf
        %1295 = vmax.xlane.f32.xlu0 %v1294
        %v1296 = vpop.xlane.xlu0 %1295
        %v1297 = vsel %vm1166, %v1293, -inf
        %1298 = vmax.xlane.f32.xlu0 %v1297
        %v1299 = vpop.xlane.xlu0 %1298
        %v1300 = vsub.f32 %v1292, %v1296
        %v1301 = vsub.f32 %v1293, %v1299
        %v1302 = vmul.f32 %v1300, 1.442695
        %v1303 = vpow.pop %v1302
        %v1304 = vmul.f32 %v1301, 1.442695
        %v1305 = vpow.pop %v1304
        %v1306 = vsel %vm1166, %v1303, 0.0
        %1307 = vadd.xlane.f32.xlu0 %v1306
        %v1308 = vpop.xlane.xlu0 %1307
        %v1309 = vsel %vm1166, %v1305, 0.0
        %1310 = vadd.xlane.f32.xlu0 %v1309
        %v1311 = vpop.xlane.xlu0 %1310
        %v1312 = vrcp.pop %v1308
        %v1313 = vrcp.pop %v1311
        %v1314 = vmul.f32 %v1303, %v1312
        %v1315 = vmul.f32 %v1305, %v1313
        %v1316 = vpack.c.bf16 %v1315, %v1314
        %1318 = vrot.lane.b32.xlu0 %v1190, 96
        %v1319 = vpop.permute.xlu0 %1318
        %v1322 = vsel %vm1166, %v1316, 0
        %1324 = vmatprep.subr.bf16.mxu0 0
        %1325 = vmatpush1.bf16.msra.mxu0 0
        %1326 = vmatprep.subr.bf16.mxu0 0
        %1327 = vmatpush1.bf16.msra.mxu0 0
        %1328 = vmatprep.subr.bf16.mxu0 0
        %1329 = vmatpush1.bf16.msra.mxu0 0
        %1330 = vmatprep.subr.bf16.mxu0 0
        %1331 = vmatpush1.bf16.msra.mxu0 0
        %1332 = vmatprep.subr.bf16.mxu0 0
        %1333 = vmatpush1.bf16.msra.mxu0 0
        %1334 = vmatprep.subr.bf16.mxu0 0
        %1335 = vmatpush1.bf16.msra.mxu0 0
        %1336 = vmatprep.subr.bf16.mxu0 0
        %1337 = vmatpush1.bf16.msra.mxu0 0
        %1338 = vmatprep.subr.bf16.mxu0 0
        %1339 = vmatpush1.bf16.msra.mxu0 %v1319
        %1340 = vmatprep.subr.bf16.mxu0 0
        %1341 = vmatpush2.bf16.msra.mxu0 0
        %1342 = vmatprep.subr.bf16.mxu0 0
        %1343 = vmatpush2.bf16.msra.mxu0 0
        %1344 = vmatprep.subr.bf16.mxu0 0
        %1345 = vmatpush2.bf16.msra.mxu0 0
        %1346 = vmatprep.subr.bf16.mxu0 0
        %1347 = vmatpush2.bf16.msra.mxu0 0
        %1348 = vmatprep.subr.bf16.mxu0 0
        %1349 = vmatpush2.bf16.msra.mxu0 0
        %1350 = vmatprep.subr.bf16.mxu0 0
        %1351 = vmatpush2.bf16.msra.mxu0 0
        %1352 = vmatprep.subr.bf16.mxu0 0
        %1353 = vmatpush2.bf16.msra.mxu0 0
        %1354 = vmatprep.subr.bf16.mxu0 0
        %1355 = vmatpush2.bf16.msra.mxu0 0
        %1356 = vmatprep.mubr.bf16.mxu0 0
        %1357 = vmatmul.mubr.bf16.gmra.mxu0 %v1322
        %v1358 = vpop.f32.mrf.mxu0
        %v1359 = vadd.f32 0.0, %v1358
        %v1360 = vpop.f32.mrf.mxu0
        %v1361 = vpop.f32.mrf.mxu0
        %v1362 = vadd.f32 0.0, %v1361
        %v1363 = vpop.f32.mrf.mxu0
        %1364 = vdwg.mxu0
        %1367 = vrot.lane.b32.xlu0 %v1359, 32
        %v1368 = vpop.permute.xlu0 %1367
        %1369 = vrot.lane.b32.xlu0 %v1362, 32
        %v1370 = vpop.permute.xlu0 %1369
        %vm1373 = vcmask 523520
        %1374 = vst.msk [vmem:[#allocation3] sm:$0xff] %vm1373, %v1368
        %1375 = vst.msk [vmem:[#allocation3 + $0x8] sm:$0xff] %vm1373, %v1370
        %1376 = vrot.lane.b32.xlu0 %v1112, 64
        %v1377 = vpop.permute.xlu0 %1376
        %1378 = vrot.lane.b32.xlu0 %v1113, 64
        %v1379 = vpop.permute.xlu0 %1378
        %v1381 = vsel %vm1114, %v1377, 0
        %v1384 = vsel %vm1114, %v1379, 0
        %1386 = vmatprep.subr.bf16.mxu0 0
        %1387 = vmatpush1.bf16.xpose.msra.mxu0 0
        %1388 = vmatprep.subr.bf16.mxu0 0
        %1389 = vmatpush1.bf16.xpose.msra.mxu0 0
        %1390 = vmatprep.subr.bf16.mxu0 0
        %1391 = vmatpush1.bf16.xpose.msra.mxu0 0
        %1392 = vmatprep.subr.bf16.mxu0 0
        %1393 = vmatpush1.bf16.xpose.msra.mxu0 0
        %1394 = vmatprep.subr.bf16.mxu0 0
        %1395 = vmatpush1.bf16.xpose.msra.mxu0 0
        %1396 = vmatprep.subr.bf16.mxu0 0
        %1397 = vmatpush1.bf16.xpose.msra.mxu0 0
        %1398 = vmatprep.subr.bf16.mxu0 0
        %1399 = vmatpush1.bf16.xpose.msra.mxu0 0
        %1400 = vmatprep.subr.bf16.mxu0 0
        %1401 = vmatpush1.bf16.xpose.msra.mxu0 %v1384
        %1402 = vmatprep.subr.bf16.mxu0 0
        %1403 = vmatpush2.bf16.xpose.msra.mxu0 0
        %1404 = vmatprep.subr.bf16.mxu0 0
        %1405 = vmatpush2.bf16.xpose.msra.mxu0 0
        %1406 = vmatprep.subr.bf16.mxu0 0
        %1407 = vmatpush2.bf16.xpose.msra.mxu0 0
        %1408 = vmatprep.subr.bf16.mxu0 0
        %1409 = vmatpush2.bf16.xpose.msra.mxu0 0
        %1410 = vmatprep.subr.bf16.mxu0 0
        %1411 = vmatpush2.bf16.xpose.msra.mxu0 0
        %1412 = vmatprep.subr.bf16.mxu0 0
        %1413 = vmatpush2.bf16.xpose.msra.mxu0 0
        %1414 = vmatprep.subr.bf16.mxu0 0
        %1415 = vmatpush2.bf16.xpose.msra.mxu0 0
        %1416 = vmatprep.subr.bf16.mxu0 0
        %1417 = vmatpush2.bf16.xpose.msra.mxu0 0
        %1418 = vmatprep.mubr.bf16.mxu0 0
        %1419 = vmatmul.mubr.bf16.gmra.mxu0 %v1381
        %v1420 = vpop.f32.mrf.mxu0
        %v1421 = vadd.f32 0.0, %v1420
        %v1422 = vpop.f32.mrf.mxu0
        %v1423 = vpop.f32.mrf.mxu0
        %v1424 = vadd.f32 0.0, %v1423
        %v1425 = vpop.f32.mrf.mxu0
        %1426 = vdwg.mxu0
        %v1427 = vmul.f32 %v1421, 0.17677669
        %v1428 = vmul.f32 %v1424, 0.17677669
        %v1429 = vadd.f32 %v1427, %v848
        %v1430 = vadd.f32 %v1428, %v849
        %v1431 = vsel %vm1166, %v1429, -inf
        %1432 = vmax.xlane.f32.xlu0 %v1431
        %v1433 = vpop.xlane.xlu0 %1432
        %v1434 = vsel %vm1166, %v1430, -inf
        %1435 = vmax.xlane.f32.xlu0 %v1434
        %v1436 = vpop.xlane.xlu0 %1435
        %v1437 = vsub.f32 %v1429, %v1433
        %v1438 = vsub.f32 %v1430, %v1436
        %v1439 = vmul.f32 %v1437, 1.442695
        %v1440 = vpow.pop %v1439
        %v1441 = vmul.f32 %v1438, 1.442695
        %v1442 = vpow.pop %v1441
        %v1443 = vsel %vm1166, %v1440, 0.0
        %1444 = vadd.xlane.f32.xlu0 %v1443
        %v1445 = vpop.xlane.xlu0 %1444
        %v1446 = vsel %vm1166, %v1442, 0.0
        %1447 = vadd.xlane.f32.xlu0 %v1446
        %v1448 = vpop.xlane.xlu0 %1447
        %v1449 = vrcp.pop %v1445
        %v1450 = vrcp.pop %v1448
        %v1451 = vmul.f32 %v1440, %v1449
        %v1452 = vmul.f32 %v1442, %v1450
        %v1453 = vpack.c.bf16 %v1452, %v1451
        %1454 = vrot.lane.b32.xlu0 %v1190, 64
        %v1455 = vpop.permute.xlu0 %1454
        %v1458 = vsel %vm1166, %v1453, 0
        %1460 = vmatprep.subr.bf16.mxu0 0
        %1461 = vmatpush1.bf16.msra.mxu0 0
        %1462 = vmatprep.subr.bf16.mxu0 0
        %1463 = vmatpush1.bf16.msra.mxu0 0
        %1464 = vmatprep.subr.bf16.mxu0 0
        %1465 = vmatpush1.bf16.msra.mxu0 0
        %1466 = vmatprep.subr.bf16.mxu0 0
        %1467 = vmatpush1.bf16.msra.mxu0 0
        %1468 = vmatprep.subr.bf16.mxu0 0
        %1469 = vmatpush1.bf16.msra.mxu0 0
        %1470 = vmatprep.subr.bf16.mxu0 0
        %1471 = vmatpush1.bf16.msra.mxu0 0
        %1472 = vmatprep.subr.bf16.mxu0 0
        %1473 = vmatpush1.bf16.msra.mxu0 0
        %1474 = vmatprep.subr.bf16.mxu0 0
        %1475 = vmatpush1.bf16.msra.mxu0 %v1455
        %1476 = vmatprep.subr.bf16.mxu0 0
        %1477 = vmatpush2.bf16.msra.mxu0 0
        %1478 = vmatprep.subr.bf16.mxu0 0
        %1479 = vmatpush2.bf16.msra.mxu0 0
        %1480 = vmatprep.subr.bf16.mxu0 0
        %1481 = vmatpush2.bf16.msra.mxu0 0
        %1482 = vmatprep.subr.bf16.mxu0 0
        %1483 = vmatpush2.bf16.msra.mxu0 0
        %1484 = vmatprep.subr.bf16.mxu0 0
        %1485 = vmatpush2.bf16.msra.mxu0 0
        %1486 = vmatprep.subr.bf16.mxu0 0
        %1487 = vmatpush2.bf16.msra.mxu0 0
        %1488 = vmatprep.subr.bf16.mxu0 0
        %1489 = vmatpush2.bf16.msra.mxu0 0
        %1490 = vmatprep.subr.bf16.mxu0 0
        %1491 = vmatpush2.bf16.msra.mxu0 0
        %1492 = vmatprep.mubr.bf16.mxu0 0
        %1493 = vmatmul.mubr.bf16.gmra.mxu0 %v1458
        %v1494 = vpop.f32.mrf.mxu0
        %v1495 = vadd.f32 0.0, %v1494
        %v1496 = vpop.f32.mrf.mxu0
        %v1497 = vpop.f32.mrf.mxu0
        %v1498 = vadd.f32 0.0, %v1497
        %v1499 = vpop.f32.mrf.mxu0
        %1500 = vdwg.mxu0
        %1503 = vrot.lane.b32.xlu0 %v1495, 64
        %v1504 = vpop.permute.xlu0 %1503
        %1505 = vrot.lane.b32.xlu0 %v1498, 64
        %v1506 = vpop.permute.xlu0 %1505
        %vm1509 = vcmask 785920
        %1510 = vst.msk [vmem:[#allocation3] sm:$0xff] %vm1509, %v1504
        %1511 = vst.msk [vmem:[#allocation3 + $0x8] sm:$0xff] %vm1509, %v1506
        %1512 = vrot.lane.b32.xlu0 %v1112, 32
        %v1513 = vpop.permute.xlu0 %1512
        %1514 = vrot.lane.b32.xlu0 %v1113, 32
        %v1515 = vpop.permute.xlu0 %1514
        %v1517 = vsel %vm1114, %v1513, 0
        %v1520 = vsel %vm1114, %v1515, 0
        %1522 = vmatprep.subr.bf16.mxu0 0
        %1523 = vmatpush1.bf16.xpose.msra.mxu0 0
        %1524 = vmatprep.subr.bf16.mxu0 0
        %1525 = vmatpush1.bf16.xpose.msra.mxu0 0
        %1526 = vmatprep.subr.bf16.mxu0 0
        %1527 = vmatpush1.bf16.xpose.msra.mxu0 0
        %1528 = vmatprep.subr.bf16.mxu0 0
        %1529 = vmatpush1.bf16.xpose.msra.mxu0 0
        %1530 = vmatprep.subr.bf16.mxu0 0
        %1531 = vmatpush1.bf16.xpose.msra.mxu0 0
        %1532 = vmatprep.subr.bf16.mxu0 0
        %1533 = vmatpush1.bf16.xpose.msra.mxu0 0
        %1534 = vmatprep.subr.bf16.mxu0 0
        %1535 = vmatpush1.bf16.xpose.msra.mxu0 0
        %1536 = vmatprep.subr.bf16.mxu0 0
        %1537 = vmatpush1.bf16.xpose.msra.mxu0 %v1520
        %1538 = vmatprep.subr.bf16.mxu0 0
        %1539 = vmatpush2.bf16.xpose.msra.mxu0 0
        %1540 = vmatprep.subr.bf16.mxu0 0
        %1541 = vmatpush2.bf16.xpose.msra.mxu0 0
        %1542 = vmatprep.subr.bf16.mxu0 0
        %1543 = vmatpush2.bf16.xpose.msra.mxu0 0
        %1544 = vmatprep.subr.bf16.mxu0 0
        %1545 = vmatpush2.bf16.xpose.msra.mxu0 0
        %1546 = vmatprep.subr.bf16.mxu0 0
        %1547 = vmatpush2.bf16.xpose.msra.mxu0 0
        %1548 = vmatprep.subr.bf16.mxu0 0
        %1549 = vmatpush2.bf16.xpose.msra.mxu0 0
        %1550 = vmatprep.subr.bf16.mxu0 0
        %1551 = vmatpush2.bf16.xpose.msra.mxu0 0
        %1552 = vmatprep.subr.bf16.mxu0 0
        %1553 = vmatpush2.bf16.xpose.msra.mxu0 0
        %1554 = vmatprep.mubr.bf16.mxu0 0
        %1555 = vmatmul.mubr.bf16.gmra.mxu0 %v1517
        %v1556 = vpop.f32.mrf.mxu0
        %v1557 = vadd.f32 0.0, %v1556
        %v1558 = vpop.f32.mrf.mxu0
        %v1559 = vpop.f32.mrf.mxu0
        %v1560 = vadd.f32 0.0, %v1559
        %v1561 = vpop.f32.mrf.mxu0
        %1562 = vdwg.mxu0
        %v1563 = vmul.f32 %v1557, 0.17677669
        %v1564 = vmul.f32 %v1560, 0.17677669
        %v1565 = vadd.f32 %v1563, %v848
        %v1566 = vadd.f32 %v1564, %v849
        %v1567 = vsel %vm1166, %v1565, -inf
        %1568 = vmax.xlane.f32.xlu0 %v1567
        %v1569 = vpop.xlane.xlu0 %1568
        %v1570 = vsel %vm1166, %v1566, -inf
        %1571 = vmax.xlane.f32.xlu0 %v1570
        %v1572 = vpop.xlane.xlu0 %1571
        %v1573 = vsub.f32 %v1565, %v1569
        %v1574 = vsub.f32 %v1566, %v1572
        %v1575 = vmul.f32 %v1573, 1.442695
        %v1576 = vpow.pop %v1575
        %v1577 = vmul.f32 %v1574, 1.442695
        %v1578 = vpow.pop %v1577
        %v1579 = vsel %vm1166, %v1576, 0.0
        %1580 = vadd.xlane.f32.xlu0 %v1579
        %v1581 = vpop.xlane.xlu0 %1580
        %v1582 = vsel %vm1166, %v1578, 0.0
        %1583 = vadd.xlane.f32.xlu0 %v1582
        %v1584 = vpop.xlane.xlu0 %1583
        %v1585 = vrcp.pop %v1581
        %v1586 = vrcp.pop %v1584
        %v1587 = vmul.f32 %v1576, %v1585
        %v1588 = vmul.f32 %v1578, %v1586
        %v1589 = vpack.c.bf16 %v1588, %v1587
        %1590 = vrot.lane.b32.xlu0 %v1190, 32
        %v1591 = vpop.permute.xlu0 %1590
        %v1594 = vsel %vm1166, %v1589, 0
        %1596 = vmatprep.subr.bf16.mxu0 0
        %1597 = vmatpush1.bf16.msra.mxu0 0
        %1598 = vmatprep.subr.bf16.mxu0 0
        %1599 = vmatpush1.bf16.msra.mxu0 0
        %1600 = vmatprep.subr.bf16.mxu0 0
        %1601 = vmatpush1.bf16.msra.mxu0 0
        %1602 = vmatprep.subr.bf16.mxu0 0
        %1603 = vmatpush1.bf16.msra.mxu0 0
        %1604 = vmatprep.subr.bf16.mxu0 0
        %1605 = vmatpush1.bf16.msra.mxu0 0
        %1606 = vmatprep.subr.bf16.mxu0 0
        %1607 = vmatpush1.bf16.msra.mxu0 0
        %1608 = vmatprep.subr.bf16.mxu0 0
        %1609 = vmatpush1.bf16.msra.mxu0 0
        %1610 = vmatprep.subr.bf16.mxu0 0
        %1611 = vmatpush1.bf16.msra.mxu0 %v1591
        %1612 = vmatprep.subr.bf16.mxu0 0
        %1613 = vmatpush2.bf16.msra.mxu0 0
        %1614 = vmatprep.subr.bf16.mxu0 0
        %1615 = vmatpush2.bf16.msra.mxu0 0
        %1616 = vmatprep.subr.bf16.mxu0 0
        %1617 = vmatpush2.bf16.msra.mxu0 0
        %1618 = vmatprep.subr.bf16.mxu0 0
        %1619 = vmatpush2.bf16.msra.mxu0 0
        %1620 = vmatprep.subr.bf16.mxu0 0
        %1621 = vmatpush2.bf16.msra.mxu0 0
        %1622 = vmatprep.subr.bf16.mxu0 0
        %1623 = vmatpush2.bf16.msra.mxu0 0
        %1624 = vmatprep.subr.bf16.mxu0 0
        %1625 = vmatpush2.bf16.msra.mxu0 0
        %1626 = vmatprep.subr.bf16.mxu0 0
        %1627 = vmatpush2.bf16.msra.mxu0 0
        %1628 = vmatprep.mubr.bf16.mxu0 0
        %1629 = vmatmul.mubr.bf16.gmra.mxu0 %v1594
        %v1630 = vpop.f32.mrf.mxu0
        %v1631 = vadd.f32 0.0, %v1630
        %v1632 = vpop.f32.mrf.mxu0
        %v1633 = vpop.f32.mrf.mxu0
        %v1634 = vadd.f32 0.0, %v1633
        %v1635 = vpop.f32.mrf.mxu0
        %1636 = vdwg.mxu0
        %1639 = vrot.lane.b32.xlu0 %v1631, 96
        %v1640 = vpop.permute.xlu0 %1639
        %1641 = vrot.lane.b32.xlu0 %v1634, 96
        %v1642 = vpop.permute.xlu0 %1641
        %vm1645 = vcmask 1048320
        %1646 = vst.msk [vmem:[#allocation3] sm:$0xff] %vm1645, %v1640
        %1647 = vst.msk [vmem:[#allocation3 + $0x8] sm:$0xff] %vm1645, %v1642
        %v1648 = vld [vmem:[#allocation3] sm:$0xff]
        %v1649 = vld [vmem:[#allocation3 + $0x8] sm:$0xff]
        %v1650 = vpack.c.bf16 %v1649, %v1648
        %v1651 = vld [vmem:[%s773] sm:$0xf]
        %v1652 = vld [vmem:[%s773 + $0x4] sm:$0xf]
        %v1653 = vld [vmem:[%s773 + $0x8] sm:$0xf]
        %v1654 = vld [vmem:[%s773 + $0xc] sm:$0xf]
        %v1655 = vld [vmem:[%s773 + $0x10] sm:$0xf]
        %v1656 = vld [vmem:[%s773 + $0x14] sm:$0xf]
        %v1657 = vld [vmem:[%s773 + $0x18] sm:$0xf]
        %v1658 = vld [vmem:[%s773 + $0x1c] sm:$0xf]
        %v1659 = vld [vmem:[%s773 + $0x20] sm:$0xf]
        %v1660 = vld [vmem:[%s773 + $0x24] sm:$0xf]
        %v1661 = vld [vmem:[%s773 + $0x28] sm:$0xf]
        %v1662 = vld [vmem:[%s773 + $0x2c] sm:$0xf]
        %v1663 = vld [vmem:[%s773 + $0x30] sm:$0xf]
        %v1664 = vld [vmem:[%s773 + $0x34] sm:$0xf]
        %v1665 = vld [vmem:[%s773 + $0x38] sm:$0xf]
        %v1666 = vld [vmem:[%s773 + $0x3c] sm:$0xf]
        %v1667 = vld [vmem:[%s776] sm:$0x1]
        %v1669 = vlaneseq
        %v1670 = vshrl.u32 %v1669, 7
        %v1671 = vsub.s32 0, %v1670
        %v1672 = vrot.slane %v1667, %v1671
        %v1690 = vunpack.c.l.b16 %v1651
        %v1691 = vunpack.c.l.b16 %v1652
        %v1692 = vunpack.c.l.b16 %v1653
        %v1693 = vunpack.c.l.b16 %v1654
        %v1694 = vunpack.c.l.b16 %v1655
        %v1695 = vunpack.c.l.b16 %v1656
        %v1696 = vunpack.c.l.b16 %v1657
        %v1697 = vunpack.c.l.b16 %v1658
        %v1698 = vunpack.c.l.b16 %v1659
        %v1699 = vunpack.c.l.b16 %v1660
        %v1700 = vunpack.c.l.b16 %v1661
        %v1701 = vunpack.c.l.b16 %v1662
        %v1702 = vunpack.c.l.b16 %v1663
        %v1703 = vunpack.c.l.b16 %v1664
        %v1704 = vunpack.c.l.b16 %v1665
        %v1705 = vunpack.c.l.b16 %v1666
        %v1706 = vpack.c.b16 %v1691, %v1690
        %v1707 = vpack.c.b16 %v1693, %v1692
        %v1708 = vpack.c.b16 %v1695, %v1694
        %v1709 = vpack.c.b16 %v1697, %v1696
        %v1710 = vpack.c.b16 %v1699, %v1698
        %v1711 = vpack.c.b16 %v1701, %v1700
        %v1712 = vpack.c.b16 %v1703, %v1702
        %v1713 = vpack.c.b16 %v1705, %v1704
        %1722 = vmatprep.subr.bf16.mxu0 0
        %1723 = vmatpush1.bf16.msra.mxu0 %v1713
        %1724 = vmatprep.subr.bf16.mxu0 0
        %1725 = vmatpush1.bf16.msra.mxu0 %v1712
        %1726 = vmatprep.subr.bf16.mxu0 0
        %1727 = vmatpush1.bf16.msra.mxu0 %v1711
        %1728 = vmatprep.subr.bf16.mxu0 0
        %1729 = vmatpush1.bf16.msra.mxu0 %v1710
        %1730 = vmatprep.subr.bf16.mxu0 0
        %1731 = vmatpush1.bf16.msra.mxu0 %v1709
        %1732 = vmatprep.subr.bf16.mxu0 0
        %1733 = vmatpush1.bf16.msra.mxu0 %v1708
        %1734 = vmatprep.subr.bf16.mxu0 0
        %1735 = vmatpush1.bf16.msra.mxu0 %v1707
        %1736 = vmatprep.subr.bf16.mxu0 0
        %1737 = vmatpush1.bf16.msra.mxu0 %v1706
        %1738 = vmatprep.subr.bf16.mxu0 0
        %1739 = vmatpush2.bf16.msra.mxu0 0
        %1740 = vmatprep.subr.bf16.mxu0 0
        %1741 = vmatpush2.bf16.msra.mxu0 0
        %1742 = vmatprep.subr.bf16.mxu0 0
        %1743 = vmatpush2.bf16.msra.mxu0 0
        %1744 = vmatprep.subr.bf16.mxu0 0
        %1745 = vmatpush2.bf16.msra.mxu0 0
        %1746 = vmatprep.subr.bf16.mxu0 0
        %1747 = vmatpush2.bf16.msra.mxu0 0
        %1748 = vmatprep.subr.bf16.mxu0 0
        %1749 = vmatpush2.bf16.msra.mxu0 0
        %1750 = vmatprep.subr.bf16.mxu0 0
        %1751 = vmatpush2.bf16.msra.mxu0 0
        %1752 = vmatprep.subr.bf16.mxu0 0
        %1753 = vmatpush2.bf16.msra.mxu0 0
        %1754 = vmatprep.mubr.bf16.mxu0 0
        %1755 = vmatmul.mubr.bf16.gmra.mxu0 %v1650
        %v1756 = vpop.f32.mrf.mxu0
        %v1757 = vadd.f32 %v1672, %v1756
        %v1758 = vpop.f32.mrf.mxu0
        %v1759 = vpop.f32.mrf.mxu0
        %v1760 = vadd.f32 %v1672, %v1759
        %v1761 = vpop.f32.mrf.mxu0
        %1762 = vdwg.mxu0
        %v1763 = vadd.f32 %v1757, %v846
        %v1764 = vadd.f32 %v1760, %v847
        %v1765 = vld [vmem:[%s779] sm:$0x1]
        %v1766 = vld [vmem:[%s782] sm:$0x1]
        %1767 = vadd.xlane.f32.xlu0 %v1763
        %v1768 = vpop.xlane.xlu0 %1767
        %1769 = vadd.xlane.f32.xlu0 %v1764
        %v1770 = vpop.xlane.xlu0 %1769
        %v1771 = vrcp.pop 128.0
        %v1772 = vmul.f32 %v1768, %v1771
        %v1773 = vmul.f32 %v1770, %v1771
        %v1774 = vsub.f32 %v1763, %v1772
        %v1775 = vsub.f32 %v1764, %v1773
        %v1776 = vmul.f32 %v1774, %v1774
        %v1777 = vmul.f32 %v1775, %v1775
        %1778 = vadd.xlane.f32.xlu0 %v1776
        %v1779 = vpop.xlane.xlu0 %1778
        %1780 = vadd.xlane.f32.xlu0 %v1777
        %v1781 = vpop.xlane.xlu0 %1780
        %v1782 = vmul.f32 %v1779, %v1771
        %v1783 = vmul.f32 %v1781, %v1771
        %v1784 = vadd.f32 %v1782, 1e-12
        %v1785 = vadd.f32 %v1783, 1e-12
        %v1786 = vrsqrt.pop %v1784
        %v1787 = vrsqrt.pop %v1785
        %v1788 = vmul.f32 %v1774, %v1786
        %v1789 = vmul.f32 %v1775, %v1787
        %v1791 = vlaneseq
        %v1792 = vshrl.u32 %v1791, 7
        %v1793 = vsub.s32 0, %v1792
        %v1794 = vrot.slane %v1765, %v1793
        %v1796 = vmul.f32 %v1788, %v1794
        %v1797 = vmul.f32 %v1789, %v1794
        %v1799 = vlaneseq
        %v1800 = vshrl.u32 %v1799, 7
        %v1801 = vsub.s32 0, %v1800
        %v1802 = vrot.slane %v1766, %v1801
        %v1804 = vadd.f32 %v1796, %v1802
        %v1805 = vadd.f32 %v1797, %v1802
        %v1806 = vpack.c.bf16 %v1805, %v1804
        %v1807 = vld [vmem:[%s667] sm:$0xff]
        %v1808 = vld [vmem:[%s667 + $0x8] sm:$0xff]
        %v1809 = vld [vmem:[%s667 + $0x10] sm:$0xff]
        %v1810 = vld [vmem:[%s667 + $0x18] sm:$0xff]
        %v1811 = vld [vmem:[%s667 + $0x20] sm:$0xff]
        %v1812 = vld [vmem:[%s667 + $0x28] sm:$0xff]
        %v1813 = vld [vmem:[%s667 + $0x30] sm:$0xff]
        %v1814 = vld [vmem:[%s667 + $0x38] sm:$0xff]
        %v1815 = vld [vmem:[%s667 + $0x40] sm:$0xff]
        %v1816 = vld [vmem:[%s667 + $0x48] sm:$0xff]
        %v1817 = vld [vmem:[%s667 + $0x50] sm:$0xff]
        %v1818 = vld [vmem:[%s667 + $0x58] sm:$0xff]
        %v1819 = vld [vmem:[%s667 + $0x60] sm:$0xff]
        %v1820 = vld [vmem:[%s667 + $0x68] sm:$0xff]
        %v1821 = vld [vmem:[%s667 + $0x70] sm:$0xff]
        %v1822 = vld [vmem:[%s667 + $0x78] sm:$0xff]
        %v1823 = vld [vmem:[%s667 + $0x80] sm:$0xff]
        %v1824 = vld [vmem:[%s667 + $0x88] sm:$0xff]
        %v1825 = vld [vmem:[%s667 + $0x90] sm:$0xff]
        %v1826 = vld [vmem:[%s667 + $0x98] sm:$0xff]
        %v1827 = vld [vmem:[%s667 + $0xa0] sm:$0xff]
        %v1828 = vld [vmem:[%s667 + $0xa8] sm:$0xff]
        %v1829 = vld [vmem:[%s667 + $0xb0] sm:$0xff]
        %v1830 = vld [vmem:[%s667 + $0xb8] sm:$0xff]
        %v1831 = vld [vmem:[%s667 + $0xc0] sm:$0xff]
        %v1832 = vld [vmem:[%s667 + $0xc8] sm:$0xff]
        %v1833 = vld [vmem:[%s667 + $0xd0] sm:$0xff]
        %v1834 = vld [vmem:[%s667 + $0xd8] sm:$0xff]
        %v1835 = vld [vmem:[%s667 + $0xe0] sm:$0xff]
        %v1836 = vld [vmem:[%s667 + $0xe8] sm:$0xff]
        %v1837 = vld [vmem:[%s667 + $0xf0] sm:$0xff]
        %v1838 = vld [vmem:[%s667 + $0xf8] sm:$0xff]
        %v1839 = vld [vmem:[%s786] sm:$0xf]
        %v1841 = vlaneseq
        %v1842 = vshrl.u32 %v1841, 7
        %v1843 = vsub.s32 0, %v1842
        %v1844 = vrot.slane %v1839, %v1843
        %v1845 = vlaneseq
        %v1846 = vshrl.u32 %v1845, 7
        %v1847 = vsub.s32 1, %v1846
        %v1848 = vrot.slane %v1839, %v1847
        %v1849 = vlaneseq
        %v1850 = vshrl.u32 %v1849, 7
        %v1851 = vsub.s32 2, %v1850
        %v1852 = vrot.slane %v1839, %v1851
        %v1853 = vlaneseq
        %v1854 = vshrl.u32 %v1853, 7
        %v1855 = vsub.s32 3, %v1854
        %v1856 = vrot.slane %v1839, %v1855
        %v1893 = vunpack.c.l.b16 %v1807
        %v1894 = vunpack.c.h.b16 %v1807
        %v1895 = vunpack.c.l.b16 %v1808
        %v1896 = vunpack.c.h.b16 %v1808
        %v1897 = vunpack.c.l.b16 %v1809
        %v1898 = vunpack.c.h.b16 %v1809
        %v1899 = vunpack.c.l.b16 %v1810
        %v1900 = vunpack.c.h.b16 %v1810
        %v1901 = vunpack.c.l.b16 %v1811
        %v1902 = vunpack.c.h.b16 %v1811
        %v1903 = vunpack.c.l.b16 %v1812
        %v1904 = vunpack.c.h.b16 %v1812
        %v1905 = vunpack.c.l.b16 %v1813
        %v1906 = vunpack.c.h.b16 %v1813
        %v1907 = vunpack.c.l.b16 %v1814
        %v1908 = vunpack.c.h.b16 %v1814
        %v1909 = vunpack.c.l.b16 %v1815
        %v1910 = vunpack.c.h.b16 %v1815
        %v1911 = vunpack.c.l.b16 %v1816
        %v1912 = vunpack.c.h.b16 %v1816
        %v1913 = vunpack.c.l.b16 %v1817
        %v1914 = vunpack.c.h.b16 %v1817
        %v1915 = vunpack.c.l.b16 %v1818
        %v1916 = vunpack.c.h.b16 %v1818
        %v1917 = vunpack.c.l.b16 %v1819
        %v1918 = vunpack.c.h.b16 %v1819
        %v1919 = vunpack.c.l.b16 %v1820
        %v1920 = vunpack.c.h.b16 %v1820
        %v1921 = vunpack.c.l.b16 %v1821
        %v1922 = vunpack.c.h.b16 %v1821
        %v1923 = vunpack.c.l.b16 %v1822
        %v1924 = vunpack.c.h.b16 %v1822
        %v1925 = vunpack.c.l.b16 %v1823
        %v1926 = vunpack.c.h.b16 %v1823
        %v1927 = vunpack.c.l.b16 %v1824
        %v1928 = vunpack.c.h.b16 %v1824
        %v1929 = vunpack.c.l.b16 %v1825
        %v1930 = vunpack.c.h.b16 %v1825
        %v1931 = vunpack.c.l.b16 %v1826
        %v1932 = vunpack.c.h.b16 %v1826
        %v1933 = vunpack.c.l.b16 %v1827
        %v1934 = vunpack.c.h.b16 %v1827
        %v1935 = vunpack.c.l.b16 %v1828
        %v1936 = vunpack.c.h.b16 %v1828
        %v1937 = vunpack.c.l.b16 %v1829
        %v1938 = vunpack.c.h.b16 %v1829
        %v1939 = vunpack.c.l.b16 %v1830
        %v1940 = vunpack.c.h.b16 %v1830
        %v1941 = vunpack.c.l.b16 %v1831
        %v1942 = vunpack.c.h.b16 %v1831
        %v1943 = vunpack.c.l.b16 %v1832
        %v1944 = vunpack.c.h.b16 %v1832
        %v1945 = vunpack.c.l.b16 %v1833
        %v1946 = vunpack.c.h.b16 %v1833
        %v1947 = vunpack.c.l.b16 %v1834
        %v1948 = vunpack.c.h.b16 %v1834
        %v1949 = vunpack.c.l.b16 %v1835
        %v1950 = vunpack.c.h.b16 %v1835
        %v1951 = vunpack.c.l.b16 %v1836
        %v1952 = vunpack.c.h.b16 %v1836
        %v1953 = vunpack.c.l.b16 %v1837
        %v1954 = vunpack.c.h.b16 %v1837
        %v1955 = vunpack.c.l.b16 %v1838
        %v1956 = vunpack.c.h.b16 %v1838
        %v1957 = vpack.c.b16 %v1897, %v1893
        %v1958 = vpack.c.b16 %v1898, %v1894
        %v1959 = vpack.c.b16 %v1899, %v1895
        %v1960 = vpack.c.b16 %v1900, %v1896
        %v1961 = vpack.c.b16 %v1905, %v1901
        %v1962 = vpack.c.b16 %v1906, %v1902
        %v1963 = vpack.c.b16 %v1907, %v1903
        %v1964 = vpack.c.b16 %v1908, %v1904
        %v1965 = vpack.c.b16 %v1913, %v1909
        %v1966 = vpack.c.b16 %v1914, %v1910
        %v1967 = vpack.c.b16 %v1915, %v1911
        %v1968 = vpack.c.b16 %v1916, %v1912
        %v1969 = vpack.c.b16 %v1921, %v1917
        %v1970 = vpack.c.b16 %v1922, %v1918
        %v1971 = vpack.c.b16 %v1923, %v1919
        %v1972 = vpack.c.b16 %v1924, %v1920
        %v1973 = vpack.c.b16 %v1929, %v1925
        %v1974 = vpack.c.b16 %v1930, %v1926
        %v1975 = vpack.c.b16 %v1931, %v1927
        %v1976 = vpack.c.b16 %v1932, %v1928
        %v1977 = vpack.c.b16 %v1937, %v1933
        %v1978 = vpack.c.b16 %v1938, %v1934
        %v1979 = vpack.c.b16 %v1939, %v1935
        %v1980 = vpack.c.b16 %v1940, %v1936
        %v1981 = vpack.c.b16 %v1945, %v1941
        %v1982 = vpack.c.b16 %v1946, %v1942
        %v1983 = vpack.c.b16 %v1947, %v1943
        %v1984 = vpack.c.b16 %v1948, %v1944
        %v1985 = vpack.c.b16 %v1953, %v1949
        %v1986 = vpack.c.b16 %v1954, %v1950
        %v1987 = vpack.c.b16 %v1955, %v1951
        %v1988 = vpack.c.b16 %v1956, %v1952
        %2021 = vmatprep.subr.bf16.mxu0 %v1986
        %2022 = vmatpush1.bf16.msra.mxu0 %v1985
        %2023 = vmatprep.subr.bf16.mxu0 %v1982
        %2024 = vmatpush1.bf16.msra.mxu0 %v1981
        %2025 = vmatprep.subr.bf16.mxu0 %v1978
        %2026 = vmatpush1.bf16.msra.mxu0 %v1977
        %2027 = vmatprep.subr.bf16.mxu0 %v1974
        %2028 = vmatpush1.bf16.msra.mxu0 %v1973
        %2029 = vmatprep.subr.bf16.mxu0 %v1970
        %2030 = vmatpush1.bf16.msra.mxu0 %v1969
        %2031 = vmatprep.subr.bf16.mxu0 %v1966
        %2032 = vmatpush1.bf16.msra.mxu0 %v1965
        %2033 = vmatprep.subr.bf16.mxu0 %v1962
        %2034 = vmatpush1.bf16.msra.mxu0 %v1961
        %2035 = vmatprep.subr.bf16.mxu0 %v1958
        %2036 = vmatpush1.bf16.msra.mxu0 %v1957
        %2037 = vmatprep.subr.bf16.mxu0 0
        %2038 = vmatpush2.bf16.msra.mxu0 0
        %2039 = vmatprep.subr.bf16.mxu0 0
        %2040 = vmatpush2.bf16.msra.mxu0 0
        %2041 = vmatprep.subr.bf16.mxu0 0
        %2042 = vmatpush2.bf16.msra.mxu0 0
        %2043 = vmatprep.subr.bf16.mxu0 0
        %2044 = vmatpush2.bf16.msra.mxu0 0
        %2045 = vmatprep.subr.bf16.mxu0 0
        %2046 = vmatpush2.bf16.msra.mxu0 0
        %2047 = vmatprep.subr.bf16.mxu0 0
        %2048 = vmatpush2.bf16.msra.mxu0 0
        %2049 = vmatprep.subr.bf16.mxu0 0
        %2050 = vmatpush2.bf16.msra.mxu0 0
        %2051 = vmatprep.subr.bf16.mxu0 0
        %2052 = vmatpush2.bf16.msra.mxu0 0
        %2053 = vmatprep.mubr.bf16.mxu0 0
        %2054 = vmatmul.mubr.bf16.gmra.mxu0 %v1806
        %v2055 = vpop.f32.mrf.mxu0
        %v2056 = vadd.f32 %v1844, %v2055
        %v2057 = vpop.f32.mrf.mxu0
        %v2058 = vadd.f32 %v1848, %v2057
        %v2059 = vpop.f32.mrf.mxu0
        %v2060 = vadd.f32 %v1844, %v2059
        %v2061 = vpop.f32.mrf.mxu0
        %v2062 = vadd.f32 %v1848, %v2061
        %2063 = vdwg.mxu0
        %2064 = vmatprep.subr.bf16.mxu0 %v1988
        %2065 = vmatpush1.bf16.msra.mxu0 %v1987
        %2066 = vmatprep.subr.bf16.mxu0 %v1984
        %2067 = vmatpush1.bf16.msra.mxu0 %v1983
        %2068 = vmatprep.subr.bf16.mxu0 %v1980
        %2069 = vmatpush1.bf16.msra.mxu0 %v1979
        %2070 = vmatprep.subr.bf16.mxu0 %v1976
        %2071 = vmatpush1.bf16.msra.mxu0 %v1975
        %2072 = vmatprep.subr.bf16.mxu0 %v1972
        %2073 = vmatpush1.bf16.msra.mxu0 %v1971
        %2074 = vmatprep.subr.bf16.mxu0 %v1968
        %2075 = vmatpush1.bf16.msra.mxu0 %v1967
        %2076 = vmatprep.subr.bf16.mxu0 %v1964
        %2077 = vmatpush1.bf16.msra.mxu0 %v1963
        %2078 = vmatprep.subr.bf16.mxu0 %v1960
        %2079 = vmatpush1.bf16.msra.mxu0 %v1959
        %2080 = vmatprep.subr.bf16.mxu0 0
        %2081 = vmatpush2.bf16.msra.mxu0 0
        %2082 = vmatprep.subr.bf16.mxu0 0
        %2083 = vmatpush2.bf16.msra.mxu0 0
        %2084 = vmatprep.subr.bf16.mxu0 0
        %2085 = vmatpush2.bf16.msra.mxu0 0
        %2086 = vmatprep.subr.bf16.mxu0 0
        %2087 = vmatpush2.bf16.msra.mxu0 0
        %2088 = vmatprep.subr.bf16.mxu0 0
        %2089 = vmatpush2.bf16.msra.mxu0 0
        %2090 = vmatprep.subr.bf16.mxu0 0
        %2091 = vmatpush2.bf16.msra.mxu0 0
        %2092 = vmatprep.subr.bf16.mxu0 0
        %2093 = vmatpush2.bf16.msra.mxu0 0
        %2094 = vmatprep.subr.bf16.mxu0 0
        %2095 = vmatpush2.bf16.msra.mxu0 0
        %2096 = vmatprep.mubr.bf16.mxu0 0
        %2097 = vmatmul.mubr.bf16.gmra.mxu0 %v1806
        %v2098 = vpop.f32.mrf.mxu0
        %v2099 = vadd.f32 %v1852, %v2098
        %v2100 = vpop.f32.mrf.mxu0
        %v2101 = vadd.f32 %v1856, %v2100
        %v2102 = vpop.f32.mrf.mxu0
        %v2103 = vadd.f32 %v1852, %v2102
        %v2104 = vpop.f32.mrf.mxu0
        %v2105 = vadd.f32 %v1856, %v2104
        %2106 = vdwg.mxu0
        %v2107 = vmul.f32 %v2056, 0.5
        %v2108 = vmul.f32 %v2058, 0.5
        %v2109 = vmul.f32 %v2099, 0.5
        %v2110 = vmul.f32 %v2101, 0.5
        %v2111 = vmul.f32 %v2060, 0.5
        %v2112 = vmul.f32 %v2062, 0.5
        %v2113 = vmul.f32 %v2103, 0.5
        %v2114 = vmul.f32 %v2105, 0.5
        %v2115 = vmul.f32 %v2056, 0.044715
        %v2116 = vmul.f32 %v2058, 0.044715
        %v2117 = vmul.f32 %v2099, 0.044715
        %v2118 = vmul.f32 %v2101, 0.044715
        %v2119 = vmul.f32 %v2060, 0.044715
        %v2120 = vmul.f32 %v2062, 0.044715
        %v2121 = vmul.f32 %v2103, 0.044715
        %v2122 = vmul.f32 %v2105, 0.044715
        %v2123 = vmul.f32 %v2115, %v2056
        %v2124 = vmul.f32 %v2116, %v2058
        %v2125 = vmul.f32 %v2117, %v2099
        %v2126 = vmul.f32 %v2118, %v2101
        %v2127 = vmul.f32 %v2119, %v2060
        %v2128 = vmul.f32 %v2120, %v2062
        %v2129 = vmul.f32 %v2121, %v2103
        %v2130 = vmul.f32 %v2122, %v2105
        %v2131 = vmul.f32 %v2123, %v2056
        %v2132 = vmul.f32 %v2124, %v2058
        %v2133 = vmul.f32 %v2125, %v2099
        %v2134 = vmul.f32 %v2126, %v2101
        %v2135 = vmul.f32 %v2127, %v2060
        %v2136 = vmul.f32 %v2128, %v2062
        %v2137 = vmul.f32 %v2129, %v2103
        %v2138 = vmul.f32 %v2130, %v2105
        %v2139 = vadd.f32 %v2056, %v2131
        %v2140 = vadd.f32 %v2058, %v2132
        %v2141 = vadd.f32 %v2099, %v2133
        %v2142 = vadd.f32 %v2101, %v2134
        %v2143 = vadd.f32 %v2060, %v2135
        %v2144 = vadd.f32 %v2062, %v2136
        %v2145 = vadd.f32 %v2103, %v2137
        %v2146 = vadd.f32 %v2105, %v2138
        %v2147 = vmul.f32 %v2139, 0.7978846
        %v2148 = vmul.f32 %v2140, 0.7978846
        %v2149 = vmul.f32 %v2141, 0.7978846
        %v2150 = vmul.f32 %v2142, 0.7978846
        %v2151 = vmul.f32 %v2143, 0.7978846
        %v2152 = vmul.f32 %v2144, 0.7978846
        %v2153 = vmul.f32 %v2145, 0.7978846
        %v2154 = vmul.f32 %v2146, 0.7978846
        %v2155 = vtanh.pop %v2147
        %v2156 = vtanh.pop %v2148
        %v2157 = vtanh.pop %v2149
        %v2158 = vtanh.pop %v2150
        %v2159 = vtanh.pop %v2151
        %v2160 = vtanh.pop %v2152
        %v2161 = vtanh.pop %v2153
        %v2162 = vtanh.pop %v2154
        %v2163 = vadd.f32 %v2155, 1.0
        %v2164 = vadd.f32 %v2156, 1.0
        %v2165 = vadd.f32 %v2157, 1.0
        %v2166 = vadd.f32 %v2158, 1.0
        %v2167 = vadd.f32 %v2159, 1.0
        %v2168 = vadd.f32 %v2160, 1.0
        %v2169 = vadd.f32 %v2161, 1.0
        %v2170 = vadd.f32 %v2162, 1.0
        %v2171 = vmul.f32 %v2107, %v2163
        %v2172 = vmul.f32 %v2108, %v2164
        %v2173 = vmul.f32 %v2109, %v2165
        %v2174 = vmul.f32 %v2110, %v2166
        %v2175 = vmul.f32 %v2111, %v2167
        %v2176 = vmul.f32 %v2112, %v2168
        %v2177 = vmul.f32 %v2113, %v2169
        %v2178 = vmul.f32 %v2114, %v2170
        %v2179 = vpack.c.bf16 %v2175, %v2171
        %v2180 = vpack.c.bf16 %v2176, %v2172
        %v2181 = vpack.c.bf16 %v2177, %v2173
        %v2182 = vpack.c.bf16 %v2178, %v2174
        %v2183 = vld [vmem:[%s676] sm:$0xf]
        %v2184 = vld [vmem:[%s676 + $0x4] sm:$0xf]
        %v2185 = vld [vmem:[%s676 + $0x8] sm:$0xf]
        %v2186 = vld [vmem:[%s676 + $0xc] sm:$0xf]
        %v2187 = vld [vmem:[%s676 + $0x10] sm:$0xf]
        %v2188 = vld [vmem:[%s676 + $0x14] sm:$0xf]
        %v2189 = vld [vmem:[%s676 + $0x18] sm:$0xf]
        %v2190 = vld [vmem:[%s676 + $0x1c] sm:$0xf]
        %v2191 = vld [vmem:[%s676 + $0x20] sm:$0xf]
        %v2192 = vld [vmem:[%s676 + $0x24] sm:$0xf]
        %v2193 = vld [vmem:[%s676 + $0x28] sm:$0xf]
        %v2194 = vld [vmem:[%s676 + $0x2c] sm:$0xf]
        %v2195 = vld [vmem:[%s676 + $0x30] sm:$0xf]
        %v2196 = vld [vmem:[%s676 + $0x34] sm:$0xf]
        %v2197 = vld [vmem:[%s676 + $0x38] sm:$0xf]
        %v2198 = vld [vmem:[%s676 + $0x3c] sm:$0xf]
        %v2199 = vld [vmem:[%s676 + $0x40] sm:$0xf]
        %v2200 = vld [vmem:[%s676 + $0x44] sm:$0xf]
        %v2201 = vld [vmem:[%s676 + $0x48] sm:$0xf]
        %v2202 = vld [vmem:[%s676 + $0x4c] sm:$0xf]
        %v2203 = vld [vmem:[%s676 + $0x50] sm:$0xf]
        %v2204 = vld [vmem:[%s676 + $0x54] sm:$0xf]
        %v2205 = vld [vmem:[%s676 + $0x58] sm:$0xf]
        %v2206 = vld [vmem:[%s676 + $0x5c] sm:$0xf]
        %v2207 = vld [vmem:[%s676 + $0x60] sm:$0xf]
        %v2208 = vld [vmem:[%s676 + $0x64] sm:$0xf]
        %v2209 = vld [vmem:[%s676 + $0x68] sm:$0xf]
        %v2210 = vld [vmem:[%s676 + $0x6c] sm:$0xf]
        %v2211 = vld [vmem:[%s676 + $0x70] sm:$0xf]
        %v2212 = vld [vmem:[%s676 + $0x74] sm:$0xf]
        %v2213 = vld [vmem:[%s676 + $0x78] sm:$0xf]
        %v2214 = vld [vmem:[%s676 + $0x7c] sm:$0xf]
        %v2215 = vld [vmem:[%s676 + $0x80] sm:$0xf]
        %v2216 = vld [vmem:[%s676 + $0x84] sm:$0xf]
        %v2217 = vld [vmem:[%s676 + $0x88] sm:$0xf]
        %v2218 = vld [vmem:[%s676 + $0x8c] sm:$0xf]
        %v2219 = vld [vmem:[%s676 + $0x90] sm:$0xf]
        %v2220 = vld [vmem:[%s676 + $0x94] sm:$0xf]
        %v2221 = vld [vmem:[%s676 + $0x98] sm:$0xf]
        %v2222 = vld [vmem:[%s676 + $0x9c] sm:$0xf]
        %v2223 = vld [vmem:[%s676 + $0xa0] sm:$0xf]
        %v2224 = vld [vmem:[%s676 + $0xa4] sm:$0xf]
        %v2225 = vld [vmem:[%s676 + $0xa8] sm:$0xf]
        %v2226 = vld [vmem:[%s676 + $0xac] sm:$0xf]
        %v2227 = vld [vmem:[%s676 + $0xb0] sm:$0xf]
        %v2228 = vld [vmem:[%s676 + $0xb4] sm:$0xf]
        %v2229 = vld [vmem:[%s676 + $0xb8] sm:$0xf]
        %v2230 = vld [vmem:[%s676 + $0xbc] sm:$0xf]
        %v2231 = vld [vmem:[%s676 + $0xc0] sm:$0xf]
        %v2232 = vld [vmem:[%s676 + $0xc4] sm:$0xf]
        %v2233 = vld [vmem:[%s676 + $0xc8] sm:$0xf]
        %v2234 = vld [vmem:[%s676 + $0xcc] sm:$0xf]
        %v2235 = vld [vmem:[%s676 + $0xd0] sm:$0xf]
        %v2236 = vld [vmem:[%s676 + $0xd4] sm:$0xf]
        %v2237 = vld [vmem:[%s676 + $0xd8] sm:$0xf]
        %v2238 = vld [vmem:[%s676 + $0xdc] sm:$0xf]
        %v2239 = vld [vmem:[%s676 + $0xe0] sm:$0xf]
        %v2240 = vld [vmem:[%s676 + $0xe4] sm:$0xf]
        %v2241 = vld [vmem:[%s676 + $0xe8] sm:$0xf]
        %v2242 = vld [vmem:[%s676 + $0xec] sm:$0xf]
        %v2243 = vld [vmem:[%s676 + $0xf0] sm:$0xf]
        %v2244 = vld [vmem:[%s676 + $0xf4] sm:$0xf]
        %v2245 = vld [vmem:[%s676 + $0xf8] sm:$0xf]
        %v2246 = vld [vmem:[%s676 + $0xfc] sm:$0xf]
        %v2247 = vld [vmem:[%s789] sm:$0x1]
        %v2249 = vlaneseq
        %v2250 = vshrl.u32 %v2249, 7
        %v2251 = vsub.s32 0, %v2250
        %v2252 = vrot.slane %v2247, %v2251
        %v2318 = vunpack.c.l.b16 %v2183
        %v2319 = vunpack.c.l.b16 %v2184
        %v2320 = vunpack.c.l.b16 %v2185
        %v2321 = vunpack.c.l.b16 %v2186
        %v2322 = vunpack.c.l.b16 %v2187
        %v2323 = vunpack.c.l.b16 %v2188
        %v2324 = vunpack.c.l.b16 %v2189
        %v2325 = vunpack.c.l.b16 %v2190
        %v2326 = vunpack.c.l.b16 %v2191
        %v2327 = vunpack.c.l.b16 %v2192
        %v2328 = vunpack.c.l.b16 %v2193
        %v2329 = vunpack.c.l.b16 %v2194
        %v2330 = vunpack.c.l.b16 %v2195
        %v2331 = vunpack.c.l.b16 %v2196
        %v2332 = vunpack.c.l.b16 %v2197
        %v2333 = vunpack.c.l.b16 %v2198
        %v2334 = vunpack.c.l.b16 %v2199
        %v2335 = vunpack.c.l.b16 %v2200
        %v2336 = vunpack.c.l.b16 %v2201
        %v2337 = vunpack.c.l.b16 %v2202
        %v2338 = vunpack.c.l.b16 %v2203
        %v2339 = vunpack.c.l.b16 %v2204
        %v2340 = vunpack.c.l.b16 %v2205
        %v2341 = vunpack.c.l.b16 %v2206
        %v2342 = vunpack.c.l.b16 %v2207
        %v2343 = vunpack.c.l.b16 %v2208
        %v2344 = vunpack.c.l.b16 %v2209
        %v2345 = vunpack.c.l.b16 %v2210
        %v2346 = vunpack.c.l.b16 %v2211
        %v2347 = vunpack.c.l.b16 %v2212
        %v2348 = vunpack.c.l.b16 %v2213
        %v2349 = vunpack.c.l.b16 %v2214
        %v2350 = vunpack.c.l.b16 %v2215
        %v2351 = vunpack.c.l.b16 %v2216
        %v2352 = vunpack.c.l.b16 %v2217
        %v2353 = vunpack.c.l.b16 %v2218
        %v2354 = vunpack.c.l.b16 %v2219
        %v2355 = vunpack.c.l.b16 %v2220
        %v2356 = vunpack.c.l.b16 %v2221
        %v2357 = vunpack.c.l.b16 %v2222
        %v2358 = vunpack.c.l.b16 %v2223
        %v2359 = vunpack.c.l.b16 %v2224
        %v2360 = vunpack.c.l.b16 %v2225
        %v2361 = vunpack.c.l.b16 %v2226
        %v2362 = vunpack.c.l.b16 %v2227
        %v2363 = vunpack.c.l.b16 %v2228
        %v2364 = vunpack.c.l.b16 %v2229
        %v2365 = vunpack.c.l.b16 %v2230
        %v2366 = vunpack.c.l.b16 %v2231
        %v2367 = vunpack.c.l.b16 %v2232
        %v2368 = vunpack.c.l.b16 %v2233
        %v2369 = vunpack.c.l.b16 %v2234
        %v2370 = vunpack.c.l.b16 %v2235
        %v2371 = vunpack.c.l.b16 %v2236
        %v2372 = vunpack.c.l.b16 %v2237
        %v2373 = vunpack.c.l.b16 %v2238
        %v2374 = vunpack.c.l.b16 %v2239
        %v2375 = vunpack.c.l.b16 %v2240
        %v2376 = vunpack.c.l.b16 %v2241
        %v2377 = vunpack.c.l.b16 %v2242
        %v2378 = vunpack.c.l.b16 %v2243
        %v2379 = vunpack.c.l.b16 %v2244
        %v2380 = vunpack.c.l.b16 %v2245
        %v2381 = vunpack.c.l.b16 %v2246
        %v2382 = vpack.c.b16 %v2319, %v2318
        %v2383 = vpack.c.b16 %v2321, %v2320
        %v2384 = vpack.c.b16 %v2323, %v2322
        %v2385 = vpack.c.b16 %v2325, %v2324
        %v2386 = vpack.c.b16 %v2327, %v2326
        %v2387 = vpack.c.b16 %v2329, %v2328
        %v2388 = vpack.c.b16 %v2331, %v2330
        %v2389 = vpack.c.b16 %v2333, %v2332
        %v2390 = vpack.c.b16 %v2335, %v2334
        %v2391 = vpack.c.b16 %v2337, %v2336
        %v2392 = vpack.c.b16 %v2339, %v2338
        %v2393 = vpack.c.b16 %v2341, %v2340
        %v2394 = vpack.c.b16 %v2343, %v2342
        %v2395 = vpack.c.b16 %v2345, %v2344
        %v2396 = vpack.c.b16 %v2347, %v2346
        %v2397 = vpack.c.b16 %v2349, %v2348
        %v2398 = vpack.c.b16 %v2351, %v2350
        %v2399 = vpack.c.b16 %v2353, %v2352
        %v2400 = vpack.c.b16 %v2355, %v2354
        %v2401 = vpack.c.b16 %v2357, %v2356
        %v2402 = vpack.c.b16 %v2359, %v2358
        %v2403 = vpack.c.b16 %v2361, %v2360
        %v2404 = vpack.c.b16 %v2363, %v2362
        %v2405 = vpack.c.b16 %v2365, %v2364
        %v2406 = vpack.c.b16 %v2367, %v2366
        %v2407 = vpack.c.b16 %v2369, %v2368
        %v2408 = vpack.c.b16 %v2371, %v2370
        %v2409 = vpack.c.b16 %v2373, %v2372
        %v2410 = vpack.c.b16 %v2375, %v2374
        %v2411 = vpack.c.b16 %v2377, %v2376
        %v2412 = vpack.c.b16 %v2379, %v2378
        %v2413 = vpack.c.b16 %v2381, %v2380
        %2446 = vmatprep.subr.bf16.mxu0 0
        %2447 = vmatpush1.bf16.msra.mxu0 %v2389
        %2448 = vmatprep.subr.bf16.mxu0 0
        %2449 = vmatpush1.bf16.msra.mxu0 %v2388
        %2450 = vmatprep.subr.bf16.mxu0 0
        %2451 = vmatpush1.bf16.msra.mxu0 %v2387
        %2452 = vmatprep.subr.bf16.mxu0 0
        %2453 = vmatpush1.bf16.msra.mxu0 %v2386
        %2454 = vmatprep.subr.bf16.mxu0 0
        %2455 = vmatpush1.bf16.msra.mxu0 %v2385
        %2456 = vmatprep.subr.bf16.mxu0 0
        %2457 = vmatpush1.bf16.msra.mxu0 %v2384
        %2458 = vmatprep.subr.bf16.mxu0 0
        %2459 = vmatpush1.bf16.msra.mxu0 %v2383
        %2460 = vmatprep.subr.bf16.mxu0 0
        %2461 = vmatpush1.bf16.msra.mxu0 %v2382
        %2462 = vmatprep.subr.bf16.mxu0 0
        %2463 = vmatpush2.bf16.msra.mxu0 %v2397
        %2464 = vmatprep.subr.bf16.mxu0 0
        %2465 = vmatpush2.bf16.msra.mxu0 %v2396
        %2466 = vmatprep.subr.bf16.mxu0 0
        %2467 = vmatpush2.bf16.msra.mxu0 %v2395
        %2468 = vmatprep.subr.bf16.mxu0 0
        %2469 = vmatpush2.bf16.msra.mxu0 %v2394
        %2470 = vmatprep.subr.bf16.mxu0 0
        %2471 = vmatpush2.bf16.msra.mxu0 %v2393
        %2472 = vmatprep.subr.bf16.mxu0 0
        %2473 = vmatpush2.bf16.msra.mxu0 %v2392
        %2474 = vmatprep.subr.bf16.mxu0 0
        %2475 = vmatpush2.bf16.msra.mxu0 %v2391
        %2476 = vmatprep.subr.bf16.mxu0 0
        %2477 = vmatpush2.bf16.msra.mxu0 %v2390
        %2478 = vmatprep.mubr.bf16.mxu0 %v2180
        %2479 = vmatmul.mubr.bf16.gmra.mxu0 %v2179
        %v2480 = vpop.f32.mrf.mxu0
        %v2481 = vadd.f32 %v2252, %v2480
        %v2482 = vpop.f32.mrf.mxu0
        %v2483 = vpop.f32.mrf.mxu0
        %v2484 = vadd.f32 %v2252, %v2483
        %v2485 = vpop.f32.mrf.mxu0
        %2486 = vdwg.mxu0
        %2487 = vmatprep.subr.bf16.mxu0 0
        %2488 = vmatpush1.bf16.msra.mxu0 %v2405
        %2489 = vmatprep.subr.bf16.mxu0 0
        %2490 = vmatpush1.bf16.msra.mxu0 %v2404
        %2491 = vmatprep.subr.bf16.mxu0 0
        %2492 = vmatpush1.bf16.msra.mxu0 %v2403
        %2493 = vmatprep.subr.bf16.mxu0 0
        %2494 = vmatpush1.bf16.msra.mxu0 %v2402
        %2495 = vmatprep.subr.bf16.mxu0 0
        %2496 = vmatpush1.bf16.msra.mxu0 %v2401
        %2497 = vmatprep.subr.bf16.mxu0 0
        %2498 = vmatpush1.bf16.msra.mxu0 %v2400
        %2499 = vmatprep.subr.bf16.mxu0 0
        %2500 = vmatpush1.bf16.msra.mxu0 %v2399
        %2501 = vmatprep.subr.bf16.mxu0 0
        %2502 = vmatpush1.bf16.msra.mxu0 %v2398
        %2503 = vmatprep.subr.bf16.mxu0 0
        %2504 = vmatpush2.bf16.msra.mxu0 %v2413
        %2505 = vmatprep.subr.bf16.mxu0 0
        %2506 = vmatpush2.bf16.msra.mxu0 %v2412
        %2507 = vmatprep.subr.bf16.mxu0 0
        %2508 = vmatpush2.bf16.msra.mxu0 %v2411
        %2509 = vmatprep.subr.bf16.mxu0 0
        %2510 = vmatpush2.bf16.msra.mxu0 %v2410
        %2511 = vmatprep.subr.bf16.mxu0 0
        %2512 = vmatpush2.bf16.msra.mxu0 %v2409
        %2513 = vmatprep.subr.bf16.mxu0 0
        %2514 = vmatpush2.bf16.msra.mxu0 %v2408
        %2515 = vmatprep.subr.bf16.mxu0 0
        %2516 = vmatpush2.bf16.msra.mxu0 %v2407
        %2517 = vmatprep.subr.bf16.mxu0 0
        %2518 = vmatpush2.bf16.msra.mxu0 %v2406
        %2519 = vmatprep.mubr.bf16.mxu0 %v2182
        %2520 = vmatmul.mubr.bf16.gmra.mxu0 %v2181
        %v2521 = vpop.f32.mrf.mxu0
        %v2522 = vadd.f32 %v2481, %v2521
        %v2523 = vpop.f32.mrf.mxu0
        %v2524 = vpop.f32.mrf.mxu0
        %v2525 = vadd.f32 %v2484, %v2524
        %v2526 = vpop.f32.mrf.mxu0
        %2527 = vdwg.mxu0
        %v2528 = vadd.f32 %v2522, %v1804
        %v2529 = vadd.f32 %v2525, %v1805
        %v2530 = vld [vmem:[%s792] sm:$0x1]
        %v2531 = vld [vmem:[%s795] sm:$0x1]
        %2532 = vadd.xlane.f32.xlu0 %v2528
        %v2533 = vpop.xlane.xlu0 %2532
        %2534 = vadd.xlane.f32.xlu0 %v2529
        %v2535 = vpop.xlane.xlu0 %2534
        %v2536 = vmul.f32 %v2533, %v1771
        %v2537 = vmul.f32 %v2535, %v1771
        %v2538 = vsub.f32 %v2528, %v2536
        %v2539 = vsub.f32 %v2529, %v2537
        %v2540 = vmul.f32 %v2538, %v2538
        %v2541 = vmul.f32 %v2539, %v2539
        %2542 = vadd.xlane.f32.xlu0 %v2540
        %v2543 = vpop.xlane.xlu0 %2542
        %2544 = vadd.xlane.f32.xlu0 %v2541
        %v2545 = vpop.xlane.xlu0 %2544
        %v2546 = vmul.f32 %v2543, %v1771
        %v2547 = vmul.f32 %v2545, %v1771
        %v2548 = vadd.f32 %v2546, 1e-12
        %v2549 = vadd.f32 %v2547, 1e-12
        %v2550 = vrsqrt.pop %v2548
        %v2551 = vrsqrt.pop %v2549
        %v2552 = vmul.f32 %v2538, %v2550
        %v2553 = vmul.f32 %v2539, %v2551
        %v2555 = vlaneseq
        %v2556 = vshrl.u32 %v2555, 7
        %v2557 = vsub.s32 0, %v2556
        %v2558 = vrot.slane %v2530, %v2557
        %v2560 = vmul.f32 %v2552, %v2558
        %v2561 = vmul.f32 %v2553, %v2558
        %v2563 = vlaneseq
        %v2564 = vshrl.u32 %v2563, 7
        %v2565 = vsub.s32 0, %v2564
        %v2566 = vrot.slane %v2531, %v2565
        %v2568 = vadd.f32 %v2560, %v2566
        %v2569 = vadd.f32 %v2561, %v2566
        %2570 = vst [vmem:[#allocation2] sm:$0xff] %v2568
        %2571 = vst [vmem:[#allocation2 + $0x8] sm:$0xff] %v2569
        %p2572 = scmp.eq.s32.totalorder %s35, 1
        // Predicated region
        $region109: #{bert_for_token_classification.1} parent=91 // pred_check
          %p2573 = pneg %p2572
        $region110: #{bert_for_token_classification.1} parent=91 // pred_check_branch
          %2575 = sbr.rel (%p2573) target = $region112
        $region111: #{bert_for_token_classification.1} parent=91 // pred_region
          %v2576 = vpack.c.bf16 %v2569, %v2568
          %v2577 = vld [vmem:[%s16] sm:$0xf]
          %v2578 = vld [vmem:[%s16 + $0x4] sm:$0xf]
          %v2579 = vld [vmem:[%s16 + $0x8] sm:$0xf]
          %v2580 = vld [vmem:[%s16 + $0xc] sm:$0xf]
          %v2581 = vld [vmem:[%s16 + $0x10] sm:$0xf]
          %v2582 = vld [vmem:[%s16 + $0x14] sm:$0xf]
          %v2583 = vld [vmem:[%s16 + $0x18] sm:$0xf]
          %v2584 = vld [vmem:[%s16 + $0x1c] sm:$0xf]
          %v2585 = vld [vmem:[%s16 + $0x20] sm:$0xf]
          %v2586 = vld [vmem:[%s16 + $0x24] sm:$0xf]
          %v2587 = vld [vmem:[%s16 + $0x28] sm:$0xf]
          %v2588 = vld [vmem:[%s16 + $0x2c] sm:$0xf]
          %v2589 = vld [vmem:[%s16 + $0x30] sm:$0xf]
          %v2590 = vld [vmem:[%s16 + $0x34] sm:$0xf]
          %v2591 = vld [vmem:[%s16 + $0x38] sm:$0xf]
          %v2592 = vld [vmem:[%s16 + $0x3c] sm:$0xf]
          %v2593 = vld [vmem:[%s17] sm:$0x1]
          %v2595 = vlaneseq
          %v2596 = vshrl.u32 %v2595, 7
          %v2597 = vsub.s32 0, %v2596
          %v2598 = vrot.slane %v2593, %v2597
          %v2616 = vunpack.c.l.b16 %v2577
          %v2617 = vunpack.c.l.b16 %v2578
          %v2618 = vunpack.c.l.b16 %v2579
          %v2619 = vunpack.c.l.b16 %v2580
          %v2620 = vunpack.c.l.b16 %v2581
          %v2621 = vunpack.c.l.b16 %v2582
          %v2622 = vunpack.c.l.b16 %v2583
          %v2623 = vunpack.c.l.b16 %v2584
          %v2624 = vunpack.c.l.b16 %v2585
          %v2625 = vunpack.c.l.b16 %v2586
          %v2626 = vunpack.c.l.b16 %v2587
          %v2627 = vunpack.c.l.b16 %v2588
          %v2628 = vunpack.c.l.b16 %v2589
          %v2629 = vunpack.c.l.b16 %v2590
          %v2630 = vunpack.c.l.b16 %v2591
          %v2631 = vunpack.c.l.b16 %v2592
          %v2632 = vpack.c.b16 %v2617, %v2616
          %v2633 = vpack.c.b16 %v2619, %v2618
          %v2634 = vpack.c.b16 %v2621, %v2620
          %v2635 = vpack.c.b16 %v2623, %v2622
          %v2636 = vpack.c.b16 %v2625, %v2624
          %v2637 = vpack.c.b16 %v2627, %v2626
          %v2638 = vpack.c.b16 %v2629, %v2628
          %v2639 = vpack.c.b16 %v2631, %v2630
          %2648 = vmatprep.subr.bf16.mxu0 0
          %2649 = vmatpush1.bf16.msra.mxu0 %v2639
          %2650 = vmatprep.subr.bf16.mxu0 0
          %2651 = vmatpush1.bf16.msra.mxu0 %v2638
          %2652 = vmatprep.subr.bf16.mxu0 0
          %2653 = vmatpush1.bf16.msra.mxu0 %v2637
          %2654 = vmatprep.subr.bf16.mxu0 0
          %2655 = vmatpush1.bf16.msra.mxu0 %v2636
          %2656 = vmatprep.subr.bf16.mxu0 0
          %2657 = vmatpush1.bf16.msra.mxu0 %v2635
          %2658 = vmatprep.subr.bf16.mxu0 0
          %2659 = vmatpush1.bf16.msra.mxu0 %v2634
          %2660 = vmatprep.subr.bf16.mxu0 0
          %2661 = vmatpush1.bf16.msra.mxu0 %v2633
          %2662 = vmatprep.subr.bf16.mxu0 0
          %2663 = vmatpush1.bf16.msra.mxu0 %v2632
          %2664 = vmatprep.subr.bf16.mxu0 0
          %2665 = vmatpush2.bf16.msra.mxu0 0
          %2666 = vmatprep.subr.bf16.mxu0 0
          %2667 = vmatpush2.bf16.msra.mxu0 0
          %2668 = vmatprep.subr.bf16.mxu0 0
          %2669 = vmatpush2.bf16.msra.mxu0 0
          %2670 = vmatprep.subr.bf16.mxu0 0
          %2671 = vmatpush2.bf16.msra.mxu0 0
          %2672 = vmatprep.subr.bf16.mxu0 0
          %2673 = vmatpush2.bf16.msra.mxu0 0
          %2674 = vmatprep.subr.bf16.mxu0 0
          %2675 = vmatpush2.bf16.msra.mxu0 0
          %2676 = vmatprep.subr.bf16.mxu0 0
          %2677 = vmatpush2.bf16.msra.mxu0 0
          %2678 = vmatprep.subr.bf16.mxu0 0
          %2679 = vmatpush2.bf16.msra.mxu0 0
          %2680 = vmatprep.mubr.bf16.mxu0 0
          %2681 = vmatmul.mubr.bf16.gmra.mxu0 %v2576
          %v2682 = vpop.f32.mrf.mxu0
          %v2683 = vadd.f32 %v2598, %v2682
          %v2684 = vpop.f32.mrf.mxu0
          %v2685 = vpop.f32.mrf.mxu0
          %v2686 = vadd.f32 %v2598, %v2685
          %v2687 = vpop.f32.mrf.mxu0
          %2688 = vdwg.mxu0
          %2689 = vst [vmem:[%s18] sm:$0xff] %v2683
          %2690 = vst [vmem:[%s18 + $0x8] sm:$0xff] %v2686
        $region112: #{bert_for_token_classification.1} parent=91 // pred_fallthru
          _
        // Predicated region
        $region113: #{bert_for_token_classification.1} parent=91 // pred_check
          %p2691 = pneg %p486
        $region114: #{bert_for_token_classification.1} parent=91 // pred_check_branch
          %2693 = sbr.rel (%p2691) target = $region116
        $region115: #{bert_for_token_classification.1} parent=91 // pred_region
          _
        $region116: #{bert_for_token_classification.1} parent=91 // pred_fallthru
          _
        // Predicated region
        $region117: #{bert_for_token_classification.1} parent=91 // pred_check
          %p2694 = pneg %p486
        $region118: #{bert_for_token_classification.1} parent=91 // pred_check_branch
          %2696 = sbr.rel (%p2694) target = $region120
        $region119: #{bert_for_token_classification.1} parent=91 // pred_region
          _
        $region120: #{bert_for_token_classification.1} parent=91 // pred_fallthru
          _
      $region92: #{bert_for_token_classification.1} parent=5 // pred_fallthru
        _
      %p2697 = scmp.le.s32.totalorder 2, %s30
      // Predicated region
      $region121: #{bert_for_token_classification.1} parent=5 // pred_check
        %p2698 = pneg %p2697
      $region122: #{bert_for_token_classification.1} parent=5 // pred_check_branch
        %2700 = sbr.rel (%p2698) target = $region124
      $region123: #{bert_for_token_classification.1} parent=5 // pred_region
        %s2701 = ssub.s32 %s30, 2
      $region124: #{bert_for_token_classification.1} parent=5 // pred_fallthru
        _
    $region6: #{bert_for_token_classification.1} parent=1 // loop_footer
      %s34 = sadd.s32 1, %s30
    $region7: #{bert_for_token_classification.1} parent=1 // loop_footer_branch
      %29 = sbr.rel target = $region3
    $region8: #{bert_for_token_classification.1} parent=1 // loop_exit
      _
    %2702 = vsyncpa [#allocation5], 1
    %s2703 = scalar_lea.sflag [#allocation5], 1
    %2704 = vsyncpa %s2703, 1
    %2705 = vsyncpa [#allocation7], 1
    %s2706 = scalar_lea.sflag [#allocation7], 1
    %2707 = vsyncpa %s2706, 1

</llo_original>
